<compile_context>
chip_gen: v7x
topology: tpu7x:2x2x1
jax: 0.10.0
libtpu: 0.0.40
codegen_flags: <defaults>
</compile_context>

<pallas_src>
import functools

import jax
import jax.numpy as jnp
from jax import lax
from jax.experimental import pallas as pl
from jax.experimental.pallas import tpu as pltpu

NEG_INF = -1e30          # finite stand-in for -inf that survives f32 max/compare
LANE = 128               # TPU lane width
SRC_SUBCHUNK = 8         # source rows per inner chunk (one f32 vreg of x)


def _round_up(v, m):
    return (v + m - 1) // m * m


def _sage_layer_kernel(adj_ref, xs_ref, xt_ref, w_ref, b_ref, out_ref,
                       mask_ref, agg_ref, *, apply_relu):
    """One (tgt_tile, src_tile) grid step of SAGEConv(aggr='max').

    adj_ref : (TS, TT) int8  adjacency block, adj[j, i] != 0 iff edge j -> i
    xs_ref  : (TS, F)  f32   source-node features (aggregation input)
    xt_ref  : (TT, F)  f32   target-node features (root / lin_r input)
    w_ref   : (2F, H)  f32   fused [[W_l]; [W_r]] projection (lane-padded)
    b_ref   : (1, H)   f32   lin_l bias (lane-padded)
    out_ref : (TT, H)  f32   output block, written on the last src step
    mask_ref: (TS, TT) f32   scratch: widened adjacency block
    agg_ref : (TT, F)  f32   scratch: running max, persists across src steps
    """
    s = pl.program_id(1)

    @pl.when(s == 0)
    def _init():
        agg_ref[...] = jnp.full(agg_ref.shape, NEG_INF, agg_ref.dtype)

    # Widen the int8 adjacency block to f32 once; chunks slice the f32 copy.
    mask_ref[...] = adj_ref[...].astype(jnp.float32)

    ts = adj_ref.shape[0]

    def chunk_body(c, agg):
        j0 = pl.multiple_of(c * SRC_SUBCHUNK, SRC_SUBCHUNK)
        m = mask_ref[pl.ds(j0, SRC_SUBCHUNK), :]          # (SC, TT)
        m_t = jnp.transpose(m)                            # (TT, SC)
        xs = xs_ref[pl.ds(j0, SRC_SUBCHUNK), :]           # (SC, F) = 1 vreg
        for r in range(SRC_SUBCHUNK):                     # static unroll
            cand = jnp.where(m_t[:, r:r + 1] > 0.5,       # (TT, 1) mask
                             xs[r:r + 1, :],              # (1, F) features
                             NEG_INF)                     # -> (TT, F)
            agg = jnp.maximum(agg, cand)
        return agg

    agg_ref[...] = lax.fori_loop(0, ts // SRC_SUBCHUNK, chunk_body,
                                 agg_ref[...])

    @pl.when(s == pl.num_programs(1) - 1)
    def _finalize():
        agg = agg_ref[...]
        agg = jnp.where(agg < NEG_INF * 0.5, 0.0, agg)    # no-neighbour -> 0
        z = jnp.concatenate([agg, xt_ref[...]], axis=1)   # (TT, 2F)
        out = jnp.dot(z, w_ref[...],
                      preferred_element_type=jnp.float32,
                      precision=lax.Precision.HIGHEST)
        out = out + b_ref[...]
        if apply_relu:
            out = jnp.maximum(out, 0.0)
        out_ref[...] = out.astype(out_ref.dtype)


def sage_conv(x_pad, adj_pad, w_l, b_l, w_r, *, apply_relu,
              tile_tgt=128, tile_src=128):
    """x_pad: (N_pad, F_pad) f32, adj_pad: (N_pad, N_pad) int8 (src x tgt)."""
    n_pad, f_pad = x_pad.shape
    f_in, h = w_l.shape
    hp = _round_up(h, LANE)

    # Fused projection [agg | x] @ [[W_l]; [W_r]], zero-padded to 128 lanes.
    w = jnp.zeros((2 * f_pad, hp), jnp.float32)
    w = w.at[:f_in, :h].set(w_l.astype(jnp.float32))
    w = w.at[f_pad:f_pad + f_in, :h].set(w_r.astype(jnp.float32))
    b = jnp.zeros((1, hp), jnp.float32).at[:, :h].set(
        jnp.reshape(b_l, (1, h)).astype(jnp.float32))

    grid = (n_pad // tile_tgt, n_pad // tile_src)   # (targets, sources)
    kernel = functools.partial(_sage_layer_kernel, apply_relu=apply_relu)

    return pl.pallas_call(
        kernel,
        out_shape=jax.ShapeDtypeStruct((n_pad, hp), jnp.float32),
        grid=grid,
        in_specs=[
            pl.BlockSpec((tile_src, tile_tgt), lambda t, s: (s, t)),  # adj (int8)
            pl.BlockSpec((tile_src, f_pad), lambda t, s: (s, 0)),     # x (src rows)
            pl.BlockSpec((tile_tgt, f_pad), lambda t, s: (t, 0)),     # x (tgt rows)
            pl.BlockSpec((2 * f_pad, hp), lambda t, s: (0, 0)),       # fused W
            pl.BlockSpec((1, hp), lambda t, s: (0, 0)),               # bias
        ],
        out_specs=pl.BlockSpec((tile_tgt, hp), lambda t, s: (t, 0)),
        scratch_shapes=[
            pltpu.VMEM((tile_src, tile_tgt), jnp.float32),  # widened mask
            pltpu.VMEM((tile_tgt, f_pad), jnp.float32),     # max accumulator
        ],
        compiler_params=pltpu.CompilerParams(
            dimension_semantics=("parallel", "arbitrary")),
    )(adj_pad, x_pad, x_pad, w, b)


def graphsage_forward(x, adj_t, params, *, tile=128):
    """x: (N, F) f32; adj_t: (N, N), adj_t[j, i] != 0 iff edge j -> i."""
    n, f = x.shape
    classes = params["w2_l"].shape[1]
    n_pad = _round_up(n, tile)
    f_pad = _round_up(f, LANE)

    x_pad = jnp.zeros((n_pad, f_pad), jnp.float32).at[:n, :f].set(
        x.astype(jnp.float32))
    adj_pad = jnp.zeros((n_pad, n_pad), jnp.int8).at[:n, :n].set(
        (adj_t != 0).astype(jnp.int8))

    h = sage_conv(x_pad, adj_pad, params["w1_l"], params["b1_l"],
                  params["w1_r"], apply_relu=True,
                  tile_tgt=tile, tile_src=tile)
    # Layer-1 output is already (N_pad, 128) with zero column padding, so it
    # feeds layer 2 directly with no re-padding.
    out = sage_conv(h, adj_pad, params["w2_l"], params["b2_l"],
                    params["w2_r"], apply_relu=False,
                    tile_tgt=tile, tile_src=tile)
    return out[:n, :classes]


# --- pure-JAX reference (same dense-max semantics) for sanity checking ------
def _sage_ref(x, adj_t, w_l, b_l, w_r, apply_relu):
    mask = (adj_t.T != 0)[:, :, None]                 # (N_tgt, N_src, 1)
    cand = jnp.where(mask, x[None, :, :], NEG_INF)
    agg = cand.max(axis=1)
    agg = jnp.where(agg < NEG_INF * 0.5, 0.0, agg)
    out = (jnp.dot(agg, w_l, precision=lax.Precision.HIGHEST)
           + jnp.reshape(b_l, (1, -1))
           + jnp.dot(x, w_r, precision=lax.Precision.HIGHEST))
    return jnp.maximum(out, 0.0) if apply_relu else out


def _graphsage_ref(x, adj_t, p):
    h = _sage_ref(x, adj_t, p["w1_l"], p["b1_l"], p["w1_r"], True)
    return _sage_ref(h, adj_t, p["w2_l"], p["b2_l"], p["w2_r"], False)


if __name__ == "__main__":
    # Small stand-in shapes for Cora: 256 nodes, 64 input features (stand-in
    # for 1433), hidden=16 (as in the module), 7 classes.  N=256 with 128-node
    # tiles exercises the full 2x2 (tgt, src) grid / accumulator path.
    N, F_IN, HIDDEN, CLASSES, E = 256, 64, 16, 7, 1024

    key = jax.random.PRNGKey(0)
    kx, ks, kd, k1, k2, k3, k4, kb1, kb2 = jax.random.split(key, 9)

    x = jax.random.normal(kx, (N, F_IN), dtype=jnp.float32)

    # deterministic random edge_index (src, dst); dense transposed adjacency
    src = jax.random.randint(ks, (E,), 0, N)
    dst = jax.random.randint(kd, (E,), 0, N)
    adj_t = jnp.zeros((N, N), dtype=jnp.float32).at[src, dst].set(1.0)

    params = {
        "w1_l": jax.random.normal(k1, (F_IN, HIDDEN), jnp.float32) * 0.1,
        "b1_l": jax.random.normal(kb1, (1, HIDDEN), jnp.float32) * 0.1,
        "w1_r": jax.random.normal(k2, (F_IN, HIDDEN), jnp.float32) * 0.1,
        "w2_l": jax.random.normal(k3, (HIDDEN, CLASSES), jnp.float32) * 0.1,
        "b2_l": jax.random.normal(kb2, (1, CLASSES), jnp.float32) * 0.1,
        "w2_r": jax.random.normal(k4, (HIDDEN, CLASSES), jnp.float32) * 0.1,
    }

    out = jax.block_until_ready(graphsage_forward(x, adj_t, params))
    ref = jax.block_until_ready(_graphsage_ref(x, adj_t, params))

    assert out.shape == (N, CLASSES)
    max_err = jnp.max(jnp.abs(out - ref))
    assert jnp.allclose(out, ref, rtol=1e-4, atol=1e-4), f"mismatch: {max_err}"
    print("KERNEL_OK")
</pallas_src>

<mosaic_0001>
module attributes {stable_mosaic.version = 11 : i64} {
  func.func @_sage_layer_kernel(%arg0: i32, %arg1: i32, %arg2: memref<128x128xi8, #tpu.memory_space<vmem>>, %arg3: memref<128x128xf32, #tpu.memory_space<vmem>>, %arg4: memref<128x128xf32, #tpu.memory_space<vmem>>, %arg5: memref<256x128xf32, #tpu.memory_space<vmem>>, %arg6: memref<1x128xf32, #tpu.memory_space<vmem>>, %arg7: memref<128x128xf32, #tpu.memory_space<vmem>>, %arg8: memref<128x128xf32, #tpu.memory_space<vmem>>, %arg9: memref<128x128xf32, #tpu.memory_space<vmem>>) attributes {dimension_semantics = [#tpu.dimension_semantics<parallel>, #tpu.dimension_semantics<arbitrary>], iteration_bounds = array<i64: 2, 2>, scalar_prefetch = 0 : i64, scratch_operands = 2 : i64, tpu.core_type = #tpu.core_type<tc>, window_params = [{transform_indices = @transform_0, window_bounds = array<i64: 128, 128>}, {transform_indices = @transform_1, window_bounds = array<i64: 128, 128>}, {transform_indices = @transform_2, window_bounds = array<i64: 128, 128>}, {pipeline_mode = #tpu.pipeline_mode<synchronous>, transform_indices = @transform_3, window_bounds = array<i64: 256, 128>}, {pipeline_mode = #tpu.pipeline_mode<synchronous>, transform_indices = @transform_4, window_bounds = array<i64: 1, 128>}, {transform_indices = @transform_5, window_bounds = array<i64: 128, 128>}]} {
    %c0_i32 = arith.constant 0 : i32
    %0 = arith.cmpi eq, %arg1, %c0_i32 : i32
    %1 = arith.extui %0 : i1 to i32
    %c0_i32_0 = arith.constant 0 : i32
    %2 = arith.cmpi ne, %1, %c0_i32_0 : i32
    scf.if %2 {
      %cst = arith.constant -1.000000e+30 : f32
      %13 = vector.broadcast %cst : f32 to vector<128x128xf32>
      %c0_12 = arith.constant 0 : index
      %c0_13 = arith.constant 0 : index
      %14 = vector.load %arg9[%c0_12, %c0_13] : memref<128x128xf32, #tpu.memory_space<vmem>>, vector<128x128xf32>
      tpu.vector_store %arg9[%c0_12, %c0_13], %13 {strides = array<i32>} : memref<128x128xf32, #tpu.memory_space<vmem>>, vector<128x128xf32>,
    } else {
    }
    %c0 = arith.constant 0 : index
    %c0_1 = arith.constant 0 : index
    %3 = vector.load %arg2[%c0, %c0_1] : memref<128x128xi8, #tpu.memory_space<vmem>>, vector<128x128xi8>
    %4 = arith.sitofp %3 : vector<128x128xi8> to vector<128x128xf32>
    %c0_2 = arith.constant 0 : index
    %c0_3 = arith.constant 0 : index
    %5 = vector.load %arg8[%c0_2, %c0_3] : memref<128x128xf32, #tpu.memory_space<vmem>>, vector<128x128xf32>
    tpu.vector_store %arg8[%c0_2, %c0_3], %4 {strides = array<i32>} : memref<128x128xf32, #tpu.memory_space<vmem>>, vector<128x128xf32>,
    %c0_4 = arith.constant 0 : index
    %c0_5 = arith.constant 0 : index
    %6 = vector.load %arg9[%c0_4, %c0_5] : memref<128x128xf32, #tpu.memory_space<vmem>>, vector<128x128xf32>
    %c0_i32_6 = arith.constant 0 : i32
    %c16_i32 = arith.constant 16 : i32
    %7 = arith.addi %c0_i32_6, %c16_i32 : i32
    %c1_i32 = arith.constant 1 : i32
    %8 = scf.for %arg10 = %c0_i32_6 to %7 step %c1_i32 iter_args(%arg11 = %6) -> (vector<128x128xf32>)  : i32 {
      %c8_i32 = arith.constant 8 : i32
      %13 = arith.muli %arg10, %c8_i32 : i32
      %14 = tpu.assume_multiple %13, 8 : i32
      %15 = arith.index_cast %14 : i32 to index
      %c0_12 = arith.constant 0 : index
      %16 = vector.load %arg8[%15, %c0_12] : memref<128x128xf32, #tpu.memory_space<vmem>>, vector<8x128xf32>
      %17 = tpu.transpose %16, [1, 0] : vector<8x128xf32> -> vector<128x8xf32>
      %18 = arith.index_cast %14 : i32 to index
      %c0_13 = arith.constant 0 : index
      %19 = vector.load %arg3[%18, %c0_13] : memref<128x128xf32, #tpu.memory_space<vmem>>, vector<8x128xf32>
      %20 = vector.extract_strided_slice %17 {offsets = [0, 0], sizes = [128, 1], strides = [1, 1]} : vector<128x8xf32> to vector<128x1xf32>
      %cst = arith.constant 5.000000e-01 : f32
      %21 = vector.broadcast %cst : f32 to vector<128x1xf32>
      %22 = arith.cmpf ogt, %20, %21 : vector<128x1xf32>
      %23 = vector.extract_strided_slice %19 {offsets = [0, 0], sizes = [1, 128], strides = [1, 1]} : vector<8x128xf32> to vector<1x128xf32>
      %cst_14 = arith.constant -1.000000e+30 : f32
      %24 = vector.shape_cast %22 : vector<128x1xi1> to vector<128x1xi1>
      %25 = vector.broadcast %24 : vector<128x1xi1> to vector<128x128xi1>
      %26 = vector.shape_cast %23 : vector<1x128xf32> to vector<1x128xf32>
      %27 = vector.broadcast %26 : vector<1x128xf32> to vector<128x128xf32>
      %28 = vector.broadcast %cst_14 : f32 to vector<128x128xf32>
      %29 = arith.select %25, %27, %28 : vector<128x128xi1>, vector<128x128xf32>
      %30 = arith.maximumf %arg11, %29 : vector<128x128xf32>
      %31 = vector.extract_strided_slice %17 {offsets = [0, 1], sizes = [128, 1], strides = [1, 1]} : vector<128x8xf32> to vector<128x1xf32>
      %cst_15 = arith.constant 5.000000e-01 : f32
      %32 = vector.broadcast %cst_15 : f32 to vector<128x1xf32>
      %33 = arith.cmpf ogt, %31, %32 : vector<128x1xf32>
      %34 = vector.extract_strided_slice %19 {offsets = [1, 0], sizes = [1, 128], strides = [1, 1]} : vector<8x128xf32> to vector<1x128xf32>
      %cst_16 = arith.constant -1.000000e+30 : f32
      %35 = vector.shape_cast %33 : vector<128x1xi1> to vector<128x1xi1>
      %36 = vector.broadcast %35 : vector<128x1xi1> to vector<128x128xi1>
      %37 = vector.shape_cast %34 : vector<1x128xf32> to vector<1x128xf32>
      %38 = vector.broadcast %37 : vector<1x128xf32> to vector<128x128xf32>
      %39 = vector.broadcast %cst_16 : f32 to vector<128x128xf32>
      %40 = arith.select %36, %38, %39 : vector<128x128xi1>, vector<128x128xf32>
      %41 = arith.maximumf %30, %40 : vector<128x128xf32>
      %42 = vector.extract_strided_slice %17 {offsets = [0, 2], sizes = [128, 1], strides = [1, 1]} : vector<128x8xf32> to vector<128x1xf32>
      %cst_17 = arith.constant 5.000000e-01 : f32
      %43 = vector.broadcast %cst_17 : f32 to vector<128x1xf32>
      %44 = arith.cmpf ogt, %42, %43 : vector<128x1xf32>
      %45 = vector.extract_strided_slice %19 {offsets = [2, 0], sizes = [1, 128], strides = [1, 1]} : vector<8x128xf32> to vector<1x128xf32>
      %cst_18 = arith.constant -1.000000e+30 : f32
      %46 = vector.shape_cast %44 : vector<128x1xi1> to vector<128x1xi1>
      %47 = vector.broadcast %46 : vector<128x1xi1> to vector<128x128xi1>
      %48 = vector.shape_cast %45 : vector<1x128xf32> to vector<1x128xf32>
      %49 = vector.broadcast %48 : vector<1x128xf32> to vector<128x128xf32>
      %50 = vector.broadcast %cst_18 : f32 to vector<128x128xf32>
      %51 = arith.select %47, %49, %50 : vector<128x128xi1>, vector<128x128xf32>
      %52 = arith.maximumf %41, %51 : vector<128x128xf32>
      %53 = vector.extract_strided_slice %17 {offsets = [0, 3], sizes = [128, 1], strides = [1, 1]} : vector<128x8xf32> to vector<128x1xf32>
      %cst_19 = arith.constant 5.000000e-01 : f32
      %54 = vector.broadcast %cst_19 : f32 to vector<128x1xf32>
      %55 = arith.cmpf ogt, %53, %54 : vector<128x1xf32>
      %56 = vector.extract_strided_slice %19 {offsets = [3, 0], sizes = [1, 128], strides = [1, 1]} : vector<8x128xf32> to vector<1x128xf32>
      %cst_20 = arith.constant -1.000000e+30 : f32
      %57 = vector.shape_cast %55 : vector<128x1xi1> to vector<128x1xi1>
      %58 = vector.broadcast %57 : vector<128x1xi1> to vector<128x128xi1>
      %59 = vector.shape_cast %56 : vector<1x128xf32> to vector<1x128xf32>
      %60 = vector.broadcast %59 : vector<1x128xf32> to vector<128x128xf32>
      %61 = vector.broadcast %cst_20 : f32 to vector<128x128xf32>
      %62 = arith.select %58, %60, %61 : vector<128x128xi1>, vector<128x128xf32>
      %63 = arith.maximumf %52, %62 : vector<128x128xf32>
      %64 = vector.extract_strided_slice %17 {offsets = [0, 4], sizes = [128, 1], strides = [1, 1]} : vector<128x8xf32> to vector<128x1xf32>
      %cst_21 = arith.constant 5.000000e-01 : f32
      %65 = vector.broadcast %cst_21 : f32 to vector<128x1xf32>
      %66 = arith.cmpf ogt, %64, %65 : vector<128x1xf32>
      %67 = vector.extract_strided_slice %19 {offsets = [4, 0], sizes = [1, 128], strides = [1, 1]} : vector<8x128xf32> to vector<1x128xf32>
      %cst_22 = arith.constant -1.000000e+30 : f32
      %68 = vector.shape_cast %66 : vector<128x1xi1> to vector<128x1xi1>
      %69 = vector.broadcast %68 : vector<128x1xi1> to vector<128x128xi1>
      %70 = vector.shape_cast %67 : vector<1x128xf32> to vector<1x128xf32>
      %71 = vector.broadcast %70 : vector<1x128xf32> to vector<128x128xf32>
      %72 = vector.broadcast %cst_22 : f32 to vector<128x128xf32>
      %73 = arith.select %69, %71, %72 : vector<128x128xi1>, vector<128x128xf32>
      %74 = arith.maximumf %63, %73 : vector<128x128xf32>
      %75 = vector.extract_strided_slice %17 {offsets = [0, 5], sizes = [128, 1], strides = [1, 1]} : vector<128x8xf32> to vector<128x1xf32>
      %cst_23 = arith.constant 5.000000e-01 : f32
      %76 = vector.broadcast %cst_23 : f32 to vector<128x1xf32>
      %77 = arith.cmpf ogt, %75, %76 : vector<128x1xf32>
      %78 = vector.extract_strided_slice %19 {offsets = [5, 0], sizes = [1, 128], strides = [1, 1]} : vector<8x128xf32> to vector<1x128xf32>
      %cst_24 = arith.constant -1.000000e+30 : f32
      %79 = vector.shape_cast %77 : vector<128x1xi1> to vector<128x1xi1>
      %80 = vector.broadcast %79 : vector<128x1xi1> to vector<128x128xi1>
      %81 = vector.shape_cast %78 : vector<1x128xf32> to vector<1x128xf32>
      %82 = vector.broadcast %81 : vector<1x128xf32> to vector<128x128xf32>
      %83 = vector.broadcast %cst_24 : f32 to vector<128x128xf32>
      %84 = arith.select %80, %82, %83 : vector<128x128xi1>, vector<128x128xf32>
      %85 = arith.maximumf %74, %84 : vector<128x128xf32>
      %86 = vector.extract_strided_slice %17 {offsets = [0, 6], sizes = [128, 1], strides = [1, 1]} : vector<128x8xf32> to vector<128x1xf32>
      %cst_25 = arith.constant 5.000000e-01 : f32
      %87 = vector.broadcast %cst_25 : f32 to vector<128x1xf32>
      %88 = arith.cmpf ogt, %86, %87 : vector<128x1xf32>
      %89 = vector.extract_strided_slice %19 {offsets = [6, 0], sizes = [1, 128], strides = [1, 1]} : vector<8x128xf32> to vector<1x128xf32>
      %cst_26 = arith.constant -1.000000e+30 : f32
      %90 = vector.shape_cast %88 : vector<128x1xi1> to vector<128x1xi1>
      %91 = vector.broadcast %90 : vector<128x1xi1> to vector<128x128xi1>
      %92 = vector.shape_cast %89 : vector<1x128xf32> to vector<1x128xf32>
      %93 = vector.broadcast %92 : vector<1x128xf32> to vector<128x128xf32>
      %94 = vector.broadcast %cst_26 : f32 to vector<128x128xf32>
      %95 = arith.select %91, %93, %94 : vector<128x128xi1>, vector<128x128xf32>
      %96 = arith.maximumf %85, %95 : vector<128x128xf32>
      %97 = vector.extract_strided_slice %17 {offsets = [0, 7], sizes = [128, 1], strides = [1, 1]} : vector<128x8xf32> to vector<128x1xf32>
      %cst_27 = arith.constant 5.000000e-01 : f32
      %98 = vector.broadcast %cst_27 : f32 to vector<128x1xf32>
      %99 = arith.cmpf ogt, %97, %98 : vector<128x1xf32>
      %100 = vector.extract_strided_slice %19 {offsets = [7, 0], sizes = [1, 128], strides = [1, 1]} : vector<8x128xf32> to vector<1x128xf32>
      %cst_28 = arith.constant -1.000000e+30 : f32
      %101 = vector.shape_cast %99 : vector<128x1xi1> to vector<128x1xi1>
      %102 = vector.broadcast %101 : vector<128x1xi1> to vector<128x128xi1>
      %103 = vector.shape_cast %100 : vector<1x128xf32> to vector<1x128xf32>
      %104 = vector.broadcast %103 : vector<1x128xf32> to vector<128x128xf32>
      %105 = vector.broadcast %cst_28 : f32 to vector<128x128xf32>
      %106 = arith.select %102, %104, %105 : vector<128x128xi1>, vector<128x128xf32>
      %107 = arith.maximumf %96, %106 : vector<128x128xf32>
      scf.yield %107 : vector<128x128xf32>
    }
    %c16_i32_7 = arith.constant 16 : i32
    %c0_8 = arith.constant 0 : index
    %c0_9 = arith.constant 0 : index
    %9 = vector.load %arg9[%c0_8, %c0_9] : memref<128x128xf32, #tpu.memory_space<vmem>>, vector<128x128xf32>
    tpu.vector_store %arg9[%c0_8, %c0_9], %8 {strides = array<i32>} : memref<128x128xf32, #tpu.memory_space<vmem>>, vector<128x128xf32>,
    %c1_i32_10 = arith.constant 1 : i32
    %10 = arith.cmpi eq, %arg1, %c1_i32_10 : i32
    %11 = arith.extui %10 : i1 to i32
    %c0_i32_11 = arith.constant 0 : i32
    %12 = arith.cmpi ne, %11, %c0_i32_11 : i32
    scf.if %12 {
      %c0_12 = arith.constant 0 : index
      %c0_13 = arith.constant 0 : index
      %13 = vector.load %arg9[%c0_12, %c0_13] : memref<128x128xf32, #tpu.memory_space<vmem>>, vector<128x128xf32>
      %cst = arith.constant -5.000000e+29 : f32
      %14 = vector.broadcast %cst : f32 to vector<128x128xf32>
      %15 = arith.cmpf olt, %13, %14 : vector<128x128xf32>
      %cst_14 = arith.constant 0.000000e+00 : f32
      %16 = vector.broadcast %cst_14 : f32 to vector<128x128xf32>
      %17 = arith.select %15, %16, %13 : vector<128x128xi1>, vector<128x128xf32>
      %c0_15 = arith.constant 0 : index
      %c0_16 = arith.constant 0 : index
      %18 = vector.load %arg4[%c0_15, %c0_16] : memref<128x128xf32, #tpu.memory_space<vmem>>, vector<128x128xf32>
      %19 = tpu.concatenate %17, %18 in 1 : vector<128x128xf32>, vector<128x128xf32> -> vector<128x256xf32>
      %c0_17 = arith.constant 0 : index
      %c0_18 = arith.constant 0 : index
      %20 = vector.load %arg5[%c0_17, %c0_18] : memref<256x128xf32, #tpu.memory_space<vmem>>, vector<256x128xf32>
      %cst_19 = arith.constant dense<0.000000e+00> : vector<128x128xf32>
      %21 = tpu.matmul %19, %20, %cst_19 {dimension_numbers = #tpu.dot_dimension_numbers<[1], [0], [0], [1], [0, 0, 1, 1], [], []>, precision = #tpu.contract_precision<fp32>} : vector<128x256xf32>, vector<256x128xf32>, vector<128x128xf32> -> vector<128x128xf32>
      %c0_20 = arith.constant 0 : index
      %c0_21 = arith.constant 0 : index
      %22 = vector.load %arg6[%c0_20, %c0_21] : memref<1x128xf32, #tpu.memory_space<vmem>>, vector<1x128xf32>
      %23 = vector.broadcast %22 : vector<1x128xf32> to vector<128x128xf32>
      %24 = arith.addf %21, %23 : vector<128x128xf32>
      %cst_22 = arith.constant 0.000000e+00 : f32
      %25 = vector.broadcast %cst_22 : f32 to vector<128x128xf32>
      %26 = arith.maximumf %24, %25 : vector<128x128xf32>
      %c0_23 = arith.constant 0 : index
      %c0_24 = arith.constant 0 : index
      %27 = vector.load %arg7[%c0_23, %c0_24] : memref<128x128xf32, #tpu.memory_space<vmem>>, vector<128x128xf32>
      tpu.vector_store %arg7[%c0_23, %c0_24], %26 {strides = array<i32>} : memref<128x128xf32, #tpu.memory_space<vmem>>, vector<128x128xf32>,
    } else {
    }
    return
  }
  func.func @transform_0(%arg0: i32, %arg1: i32) -> (i32, i32) {
    %c0_i32 = arith.constant 0 : i32
    return %arg1, %arg0 : i32, i32
  }
  func.func @transform_1(%arg0: i32, %arg1: i32) -> (i32, i32) {
    %c0_i32 = arith.constant 0 : i32
    %c0_i32_0 = arith.constant 0 : i32
    return %arg1, %c0_i32 : i32, i32
  }
  func.func @transform_2(%arg0: i32, %arg1: i32) -> (i32, i32) {
    %c0_i32 = arith.constant 0 : i32
    %c0_i32_0 = arith.constant 0 : i32
    return %arg0, %c0_i32 : i32, i32
  }
  func.func @transform_3(%arg0: i32, %arg1: i32) -> (i32, i32) {
    %c0_i32 = arith.constant 0 : i32
    %c0_i32_0 = arith.constant 0 : i32
    %c0_i32_1 = arith.constant 0 : i32
    return %c0_i32, %c0_i32_0 : i32, i32
  }
  func.func @transform_4(%arg0: i32, %arg1: i32) -> (i32, i32) {
    %c0_i32 = arith.constant 0 : i32
    %c0_i32_0 = arith.constant 0 : i32
    %c0_i32_1 = arith.constant 0 : i32
    return %c0_i32, %c0_i32_0 : i32, i32
  }
  func.func @transform_5(%arg0: i32, %arg1: i32) -> (i32, i32) {
    %c0_i32 = arith.constant 0 : i32
    %c0_i32_0 = arith.constant 0 : i32
    return %arg0, %c0_i32 : i32, i32
  }
}

</mosaic_0001>

<llo_original>
// kernel: tpu_custom_call.1
$region0: #{tpu_custom_call.1}
  #allocation0 [shape = 'u32[]', space=smem, size = 0x4, offset = 0x4, fixed_abs, tag = 'smem constant byte address 0x4 - core index']
  #allocation1 [shape = 'u32[144,128]{1,0:T(1,128)}', space=vmem, size = 0x12000, scoped, tag = 'internal scratch']
  #allocation2 [shape = 'f32[128,128]{1,0:T(8,128)}', space=vmem, size = 0x10000, scoped, tag = 'scratch operand']
  #allocation3 [shape = 'f32[128,128]{1,0:T(8,128)}', space=vmem, size = 0x10000, scoped, tag = 'scratch operand']
  %s0 = inlined_call_operand.hbm [shape: s8[256,256], index: 0, kind: input, shape index: {}]
  %s1 = inlined_call_operand.hbm [shape: f32[256,128], index: 1, kind: input, shape index: {}]
  %s2 = inlined_call_operand.hbm [shape: f32[256,128], index: 2, kind: input, shape index: {}]
  %s3 = inlined_call_operand.hbm [shape: f32[256,128], index: 3, kind: input, shape index: {}]
  %s4 = inlined_call_operand.vmem [shape: f32[1,128], index: 4, kind: input, shape index: {}]
  %s5 = inlined_call_operand.hbm [shape: f32[256,128], index: 5, kind: output, shape index: {}]
  %s6 = sld [smem:[#allocation0]]
  $region84: #{tpu_custom_call.1} parent=0
    _
  %s8 = ssub.s32 1, %s6
  %s9 = scalar_select 0, %s8, %s6
  $region1: #{tpu_custom_call.1} parent=0
    #allocation4 [shape = 'u8[32768]{0}', space=vmem, size = 0x8000, scoped, tag = 'input window, operand 0']
    #allocation5 [shape = 's32[2]{0}', space=sflag, size = 0x8, scoped, tag = 'scoped memory for tpu_custom_call.1']
    #allocation6 [shape = 's32[2]{0}', space=sflag, size = 0x8, scoped, tag = 'scoped memory for tpu_custom_call.1']
    #allocation7 [shape = 'u8[131072]{0}', space=vmem, size = 0x20000, scoped, tag = 'input window, operand 1']
    #allocation8 [shape = 's32[2]{0}', space=sflag, size = 0x8, scoped, tag = 'scoped memory for tpu_custom_call.1']
    #allocation9 [shape = 'u8[131072]{0}', space=vmem, size = 0x20000, scoped, tag = 'input window, operand 2']
    #allocation10 [shape = 'u8[131072]{0}', space=vmem, size = 0x20000, scoped, tag = 'input window, operand 3, single buffered']
    #allocation11 [shape = 's32[1]{0}', space=sflag, size = 0x4, scoped, tag = 'scoped memory for tpu_custom_call.1']
    #allocation12 [shape = 'u8[131072]{0}', space=vmem, size = 0x20000, scoped, tag = 'output window, operand 0']
    %10 = vsyncpa [#allocation5], 0
    %s11 = scalar_lea.sflag [#allocation5], 1
    %12 = vsyncpa %s11, 0
    %13 = vsyncpa [#allocation8], 0
    %s14 = scalar_lea.sflag [#allocation8], 1
    %15 = vsyncpa %s14, 0
    %16 = vsyncpa [#allocation11], 0
    %17 = vsyncpa [#allocation6], 0
    %s18 = scalar_lea.sflag [#allocation6], 1
    %19 = vsyncpa %s18, 0
    loop: start=0, step=1, limit=6
    $region2: #{tpu_custom_call.1} parent=1 // loop_pre_header
      _
    $region3: #{tpu_custom_call.1} parent=1 // loop_header
      %s21 = sphi 0, %s25
      %p22 = scmp.ge.s32.totalorder %s21, 6
      %s28 = sphi 0, %s40
      %s29 = sphi 0, %s36
      %s30 = sphi 0, %s28
      %s31 = sphi 0, %s29
      %s32 = sphi 0, %s30
      %s33 = sphi 0, %s31
      %s45 = sphi 0, %s47
      %s48 = sphi 0, %s45
      %s49 = sphi 0, %s48
      %s65 = sphi 0, %s49
      %s71 = sphi 0, %s73
      %s74 = sphi 0, %s71
      %s75 = sphi 0, %s74
      %s91 = sphi 0, %s75
      %s97 = sphi 0, %s99
      %s100 = sphi 0, %s97
      %s101 = sphi 0, %s100
      %s117 = sphi 0, %s101
      %s121 = sphi 0, %s121
      %s123 = sphi 0, %s121
      %s124 = sphi 0, %s123
      %s138 = sphi 0, %s124
      %s142 = sphi 0, %s142
      %s144 = sphi 0, %s142
      %s145 = sphi 0, %s144
      %s159 = sphi 0, %s145
      %s165 = sphi 0, %s167
      %s168 = sphi 0, %s165
      %s169 = sphi 0, %s168
      %s185 = sphi 0, %s169
    $region4: #{tpu_custom_call.1} parent=1 // loop_header_branch
      %24 = sbr.rel (%p22) target = $region8
    $region5: #{tpu_custom_call.1} parent=1 // loop_body
      %s26 = ssub.s32 %s21, 1
      %s27 = ssub.s32 %s21, 2
      %s34 = sadd.s32 1, %s29
      %p35 = scmp.ge.s32.totalorder %s34, 2
      %s36 = scalar_select %p35, 0, %s34
      %s37 = sadd.s32 1, %s28
      %s38 = scalar_select %p35, %s37, %s28
      %p39 = scmp.ge.s32.totalorder %s38, 2
      %s40 = scalar_select %p39, 0, %s38
      %s41 = ssub.s32 %s29, %s36
      %s42 = ssub.s32 %s28, %s40
      %s43 = sor.u32 %s41, %s42
      %p44 = scmp.eq.s32.totalorder %s43, 0
      %s46 = sadd.s32 %s45, 1
      %s47 = scalar_select %p44, %s45, %s46
      %p50 = pneg %p44
      %p51 = scmp.eq.s32.totalorder %s21, 3
      %p52 = por %p50, %p51
      %p53 = scmp.ne.s32.totalorder %s45, %s48
      %p54 = scmp.eq.s32.totalorder %s21, 0
      %p55 = por %p53, %p54
      %p56 = scmp.ne.s32.totalorder %s45, %s48
      %p57 = scmp.eq.s32.totalorder %s26, 3
      %p58 = por %p56, %p57
      %p59 = scmp.ne.s32.totalorder %s48, %s49
      %p60 = scmp.eq.s32.totalorder %s26, 0
      %p61 = por %p59, %p60
      %p62 = scmp.ne.s32.totalorder %s48, %s49
      %p63 = scmp.eq.s32.totalorder %s27, 3
      %p64 = por %p62, %p63
      %p66 = scmp.ne.s32.totalorder %s49, %s65
      %p67 = scmp.eq.s32.totalorder %s27, 0
      %p68 = por %p66, %p67
      %s69 = ssub.s32 %s29, %s36
      %p70 = scmp.eq.s32.totalorder %s69, 0
      %s72 = sadd.s32 %s71, 1
      %s73 = scalar_select %p70, %s71, %s72
      %p76 = pneg %p70
      %p77 = scmp.eq.s32.totalorder %s21, 3
      %p78 = por %p76, %p77
      %p79 = scmp.ne.s32.totalorder %s71, %s74
      %p80 = scmp.eq.s32.totalorder %s21, 0
      %p81 = por %p79, %p80
      %p82 = scmp.ne.s32.totalorder %s71, %s74
      %p83 = scmp.eq.s32.totalorder %s26, 3
      %p84 = por %p82, %p83
      %p85 = scmp.ne.s32.totalorder %s74, %s75
      %p86 = scmp.eq.s32.totalorder %s26, 0
      %p87 = por %p85, %p86
      %p88 = scmp.ne.s32.totalorder %s74, %s75
      %p89 = scmp.eq.s32.totalorder %s27, 3
      %p90 = por %p88, %p89
      %p92 = scmp.ne.s32.totalorder %s75, %s91
      %p93 = scmp.eq.s32.totalorder %s27, 0
      %p94 = por %p92, %p93
      %s95 = ssub.s32 %s28, %s40
      %p96 = scmp.eq.s32.totalorder %s95, 0
      %s98 = sadd.s32 %s97, 1
      %s99 = scalar_select %p96, %s97, %s98
      %p102 = pneg %p96
      %p103 = scmp.eq.s32.totalorder %s21, 3
      %p104 = por %p102, %p103
      %p105 = scmp.ne.s32.totalorder %s97, %s100
      %p106 = scmp.eq.s32.totalorder %s21, 0
      %p107 = por %p105, %p106
      %p108 = scmp.ne.s32.totalorder %s97, %s100
      %p109 = scmp.eq.s32.totalorder %s26, 3
      %p110 = por %p108, %p109
      %p111 = scmp.ne.s32.totalorder %s100, %s101
      %p112 = scmp.eq.s32.totalorder %s26, 0
      %p113 = por %p111, %p112
      %p114 = scmp.ne.s32.totalorder %s100, %s101
      %p115 = scmp.eq.s32.totalorder %s27, 3
      %p116 = por %p114, %p115
      %p118 = scmp.ne.s32.totalorder %s101, %s117
      %p119 = scmp.eq.s32.totalorder %s27, 0
      %p120 = por %p118, %p119
      %s122 = sadd.s32 %s121, 1
      %p125 = scmp.eq.s32.totalorder %s21, 3
      %p126 = scmp.ne.s32.totalorder %s121, %s123
      %p127 = scmp.eq.s32.totalorder %s21, 0
      %p128 = por %p126, %p127
      %p129 = scmp.ne.s32.totalorder %s121, %s123
      %p130 = scmp.eq.s32.totalorder %s26, 3
      %p131 = por %p129, %p130
      %p132 = scmp.ne.s32.totalorder %s123, %s124
      %p133 = scmp.eq.s32.totalorder %s26, 0
      %p134 = por %p132, %p133
      %p135 = scmp.ne.s32.totalorder %s123, %s124
      %p136 = scmp.eq.s32.totalorder %s27, 3
      %p137 = por %p135, %p136
      %p139 = scmp.ne.s32.totalorder %s124, %s138
      %p140 = scmp.eq.s32.totalorder %s27, 0
      %p141 = por %p139, %p140
      %s143 = sadd.s32 %s142, 1
      %p146 = scmp.eq.s32.totalorder %s21, 3
      %p147 = scmp.ne.s32.totalorder %s142, %s144
      %p148 = scmp.eq.s32.totalorder %s21, 0
      %p149 = por %p147, %p148
      %p150 = scmp.ne.s32.totalorder %s142, %s144
      %p151 = scmp.eq.s32.totalorder %s26, 3
      %p152 = por %p150, %p151
      %p153 = scmp.ne.s32.totalorder %s144, %s145
      %p154 = scmp.eq.s32.totalorder %s26, 0
      %p155 = por %p153, %p154
      %p156 = scmp.ne.s32.totalorder %s144, %s145
      %p157 = scmp.eq.s32.totalorder %s27, 3
      %p158 = por %p156, %p157
      %p160 = scmp.ne.s32.totalorder %s145, %s159
      %p161 = scmp.eq.s32.totalorder %s27, 0
      %p162 = por %p160, %p161
      %s163 = ssub.s32 %s28, %s40
      %p164 = scmp.eq.s32.totalorder %s163, 0
      %s166 = sadd.s32 %s165, 1
      %s167 = scalar_select %p164, %s165, %s166
      %p170 = pneg %p164
      %p171 = scmp.eq.s32.totalorder %s21, 3
      %p172 = por %p170, %p171
      %p173 = scmp.ne.s32.totalorder %s165, %s168
      %p174 = scmp.eq.s32.totalorder %s21, 0
      %p175 = por %p173, %p174
      %p176 = scmp.ne.s32.totalorder %s165, %s168
      %p177 = scmp.eq.s32.totalorder %s26, 3
      %p178 = por %p176, %p177
      %p179 = scmp.ne.s32.totalorder %s168, %s169
      %p180 = scmp.eq.s32.totalorder %s26, 0
      %p181 = por %p179, %p180
      %p182 = scmp.ne.s32.totalorder %s168, %s169
      %p183 = scmp.eq.s32.totalorder %s27, 3
      %p184 = por %p182, %p183
      %p186 = scmp.ne.s32.totalorder %s169, %s185
      %p187 = scmp.eq.s32.totalorder %s27, 0
      %p188 = por %p186, %p187
      %p189 = scmp.le.s32.totalorder 1, %s21
      %p190 = scmp.lt.s32.totalorder %s21, 5
      %p191 = pnand %p189, %p190
      %p192 = pneg %p191
      // Predicated region
      $region9: #{tpu_custom_call.1} parent=5 // pred_check
        _
      $region10: #{tpu_custom_call.1} parent=5 // pred_check_branch
        %194 = sbr.rel (%p191) target = $region12
      $region11: #{tpu_custom_call.1} parent=5 // pred_region
        %s195 = ssub.s32 %s21, 1
        // Predicated region
        $region13: #{tpu_custom_call.1} parent=11 // pred_check
          %p196 = pneg %p134
        $region14: #{tpu_custom_call.1} parent=11 // pred_check_branch
          %198 = sbr.rel (%p196) target = $region16
        $region15: #{tpu_custom_call.1} parent=11 // pred_region
          %s200 = ssub.s32 4096, 4096
          %201 = vsyncadd [#allocation11], %s200
          %s202 = sshll.u32 [#allocation10], 4
          %s203 = int_to_ptr.vmem [resolvable:$true] %s202
          %208 = dma.hbm_to_vmem [thread:$0]  %s3, 4096, %s203, [#allocation11], 128, 128, 8
        $region16: #{tpu_custom_call.1} parent=11 // pred_fallthru
          _
        // Predicated region
        $region17: #{tpu_custom_call.1} parent=11 // pred_check
          %p209 = pneg %p155
        $region18: #{tpu_custom_call.1} parent=11 // pred_check_branch
          %211 = sbr.rel (%p209) target = $region20
        $region19: #{tpu_custom_call.1} parent=11 // pred_region
          _
        $region20: #{tpu_custom_call.1} parent=11 // pred_fallthru
          _
      $region12: #{tpu_custom_call.1} parent=5 // pred_fallthru
        _
      %p212 = scmp.lt.s32.totalorder %s21, 4
      // Predicated region
      $region21: #{tpu_custom_call.1} parent=5 // pred_check
        %p213 = pneg %p212
      $region22: #{tpu_custom_call.1} parent=5 // pred_check_branch
        %215 = sbr.rel (%p213) target = $region24
      $region23: #{tpu_custom_call.1} parent=5 // pred_region
        // Predicated region
        $region25: #{tpu_custom_call.1} parent=23 // pred_check
          %p216 = pneg %p55
        $region26: #{tpu_custom_call.1} parent=23 // pred_check_branch
          %218 = sbr.rel (%p216) target = $region28
        $region27: #{tpu_custom_call.1} parent=23 // pred_region
          %s219 = sand.u32 %s45, 1
          %s220 = scalar_lea.sflag [#allocation5], %s219
          %s221 = sand.u32 %s45, 1
          %s222 = smul.addr %s221, 32
          %s223 = scalar_lea.vmem [#allocation4], %s222
          %s224 = smul.u32 4, %s29
          %s226 = ssub.s32 512, 512
          %227 = vsyncadd %s220, %s226
          %s228 = smul.addr %s224, 2
          %s229 = sadd.s32 %s28, %s228
          %s230 = smul.addr %s229, 128
          %s231 = scalar_lea.hbm %s0, %s230
          %s232 = sshll.u32 %s223, 4
          %s233 = int_to_ptr.vmem [resolvable:$true] %s232
          %238 = dma.hbm_to_vmem [thread:$0]  %s231, 512, %s233, %s220, 256, 128, 8
        $region28: #{tpu_custom_call.1} parent=23 // pred_fallthru
          _
        // Predicated region
        $region29: #{tpu_custom_call.1} parent=23 // pred_check
          %p239 = pneg %p81
        $region30: #{tpu_custom_call.1} parent=23 // pred_check_branch
          %241 = sbr.rel (%p239) target = $region32
        $region31: #{tpu_custom_call.1} parent=23 // pred_region
          %s242 = sand.u32 %s21, 1
          %s243 = scalar_lea.sflag [#allocation8], %s242
          %s244 = sand.u32 %s71, 1
          %s245 = smul.addr %s244, 128
          %s246 = scalar_lea.vmem [#allocation7], %s245
          %s247 = smul.u32 16, %s29
          %s249 = ssub.s32 2048, 2048
          %250 = vsyncadd %s243, %s249
          %s251 = smul.addr %s247, 128
          %s252 = scalar_lea.hbm %s1, %s251
          %s253 = sshll.u32 %s246, 4
          %s254 = int_to_ptr.vmem [resolvable:$true] %s253
          %259 = dma.hbm_to_vmem [thread:$0]  %s252, 2048, %s254, %s243, 128, 128, 8
        $region32: #{tpu_custom_call.1} parent=23 // pred_fallthru
          _
        // Predicated region
        $region33: #{tpu_custom_call.1} parent=23 // pred_check
          %p260 = pneg %p107
        $region34: #{tpu_custom_call.1} parent=23 // pred_check_branch
          %262 = sbr.rel (%p260) target = $region36
        $region35: #{tpu_custom_call.1} parent=23 // pred_region
          %s263 = sand.u32 %s21, 1
          %s264 = scalar_lea.sflag [#allocation8], %s263
          %s265 = sand.u32 %s97, 1
          %s266 = smul.addr %s265, 128
          %s267 = scalar_lea.vmem [#allocation9], %s266
          %s268 = smul.u32 16, %s28
          %s270 = ssub.s32 2048, 2048
          %271 = vsyncadd %s264, %s270
          %s272 = smul.addr %s268, 128
          %s273 = scalar_lea.hbm %s2, %s272
          %s274 = sshll.u32 %s267, 4
          %s275 = int_to_ptr.vmem [resolvable:$true] %s274
          %280 = dma.hbm_to_vmem [thread:$0]  %s273, 2048, %s275, %s264, 128, 128, 8
        $region36: #{tpu_custom_call.1} parent=23 // pred_fallthru
          _
      $region24: #{tpu_custom_call.1} parent=5 // pred_fallthru
        _
      %p281 = scmp.le.s32.totalorder 1, %s21
      %p282 = scmp.lt.s32.totalorder %s21, 5
      %p283 = pnand %p281, %p282
      %p284 = pneg %p283
      // Predicated region
      $region37: #{tpu_custom_call.1} parent=5 // pred_check
        _
      $region38: #{tpu_custom_call.1} parent=5 // pred_check_branch
        %286 = sbr.rel (%p283) target = $region40
      $region39: #{tpu_custom_call.1} parent=5 // pred_region
        %s287 = ssub.s32 %s21, 1
        %s288 = sand.u32 %s48, 1
        %s289 = scalar_lea.sflag [#allocation5], %s288
        %s290 = sand.u32 %s48, 1
        %s291 = smul.addr %s290, 32
        %s292 = scalar_lea.vmem [#allocation4], %s291
        // Predicated region
        $region41: #{tpu_custom_call.1} parent=39 // pred_check
          %p293 = pneg %p61
        $region42: #{tpu_custom_call.1} parent=39 // pred_check_branch
          %295 = sbr.rel (%p293) target = $region44
        $region43: #{tpu_custom_call.1} parent=39 // pred_region
          %296 = dma.done %s289, 512
        $region44: #{tpu_custom_call.1} parent=39 // pred_fallthru
          _
        %s297 = sand.u32 %s26, 1
        %s298 = scalar_lea.sflag [#allocation8], %s297
        %s299 = sand.u32 %s74, 1
        %s300 = smul.addr %s299, 128
        %s301 = scalar_lea.vmem [#allocation7], %s300
        // Predicated region
        $region45: #{tpu_custom_call.1} parent=39 // pred_check
          %p302 = pneg %p87
        $region46: #{tpu_custom_call.1} parent=39 // pred_check_branch
          %304 = sbr.rel (%p302) target = $region48
        $region47: #{tpu_custom_call.1} parent=39 // pred_region
          %305 = dma.done %s298, 2048
        $region48: #{tpu_custom_call.1} parent=39 // pred_fallthru
          _
        %s306 = sand.u32 %s26, 1
        %s307 = scalar_lea.sflag [#allocation8], %s306
        %s308 = sand.u32 %s100, 1
        %s309 = smul.addr %s308, 128
        %s310 = scalar_lea.vmem [#allocation9], %s309
        // Predicated region
        $region49: #{tpu_custom_call.1} parent=39 // pred_check
          %p311 = pneg %p113
        $region50: #{tpu_custom_call.1} parent=39 // pred_check_branch
          %313 = sbr.rel (%p311) target = $region52
        $region51: #{tpu_custom_call.1} parent=39 // pred_region
          %314 = dma.done %s307, 2048
        $region52: #{tpu_custom_call.1} parent=39 // pred_fallthru
          _
        // Predicated region
        $region53: #{tpu_custom_call.1} parent=39 // pred_check
          %p315 = pneg %p134
        $region54: #{tpu_custom_call.1} parent=39 // pred_check_branch
          %317 = sbr.rel (%p315) target = $region56
        $region55: #{tpu_custom_call.1} parent=39 // pred_region
          %318 = dma.done [#allocation11], 4096
        $region56: #{tpu_custom_call.1} parent=39 // pred_fallthru
          _
        %s319 = sand.u32 %s48, 1
        %s320 = scalar_lea.sflag [#allocation5], %s319
        %s321 = sand.u32 %s48, 1
        %s322 = smul.addr %s321, 32
        %s323 = scalar_lea.vmem [#allocation4], %s322
        %p324 = pneg %p61
        %p325 = pneg %p58
        %s326 = sand.u32 %s26, 1
        %s327 = scalar_lea.sflag [#allocation8], %s326
        %s328 = sand.u32 %s74, 1
        %s329 = smul.addr %s328, 128
        %s330 = scalar_lea.vmem [#allocation7], %s329
        %p331 = pneg %p87
        %p332 = pneg %p84
        %s333 = sand.u32 %s26, 1
        %s334 = scalar_lea.sflag [#allocation8], %s333
        %s335 = sand.u32 %s100, 1
        %s336 = smul.addr %s335, 128
        %s337 = scalar_lea.vmem [#allocation9], %s336
        %p338 = pneg %p113
        %p339 = pneg %p110
        %p340 = pneg %p134
        %p341 = pneg %p131
        %p342 = pneg %p155
        %p343 = pneg %p152
        %p344 = pneg %p181
        %p345 = pneg %p178
        %s346 = sand.u32 %s168, 1
        %s347 = scalar_lea.sflag [#allocation6], %s346
        %s348 = sand.u32 %s168, 1
        %s349 = smul.addr %s348, 128
        %s350 = scalar_lea.vmem [#allocation12], %s349
        %s351 = smul.u32 4, %s31
        %s352 = smul.u32 16, %s31
        %s353 = smul.u32 16, %s30
        %s354 = smul.u32 16, %s30
        %p355 = scmp.eq.s32.totalorder %s31, 0
        // Predicated region
        $region57: #{tpu_custom_call.1} parent=39 // pred_check
          %p356 = pneg %p355
        $region58: #{tpu_custom_call.1} parent=39 // pred_check_branch
          %358 = sbr.rel (%p356) target = $region60
        $region59: #{tpu_custom_call.1} parent=39 // pred_region
          %359 = vst [vmem:[#allocation3] sm:$0xff] -1e+30
          %360 = vst [vmem:[#allocation3 + $0x8] sm:$0xff] -1e+30
          %361 = vst [vmem:[#allocation3 + $0x10] sm:$0xff] -1e+30
          %362 = vst [vmem:[#allocation3 + $0x18] sm:$0xff] -1e+30
          %363 = vst [vmem:[#allocation3 + $0x20] sm:$0xff] -1e+30
          %364 = vst [vmem:[#allocation3 + $0x28] sm:$0xff] -1e+30
          %365 = vst [vmem:[#allocation3 + $0x30] sm:$0xff] -1e+30
          %366 = vst [vmem:[#allocation3 + $0x38] sm:$0xff] -1e+30
          %367 = vst [vmem:[#allocation3 + $0x40] sm:$0xff] -1e+30
          %368 = vst [vmem:[#allocation3 + $0x48] sm:$0xff] -1e+30
          %369 = vst [vmem:[#allocation3 + $0x50] sm:$0xff] -1e+30
          %370 = vst [vmem:[#allocation3 + $0x58] sm:$0xff] -1e+30
          %371 = vst [vmem:[#allocation3 + $0x60] sm:$0xff] -1e+30
          %372 = vst [vmem:[#allocation3 + $0x68] sm:$0xff] -1e+30
          %373 = vst [vmem:[#allocation3 + $0x70] sm:$0xff] -1e+30
          %374 = vst [vmem:[#allocation3 + $0x78] sm:$0xff] -1e+30
        $region60: #{tpu_custom_call.1} parent=39 // pred_fallthru
          _
        %v375 = vld [vmem:[%s292] sm:$0xff]
        %v376 = vld [vmem:[%s292 + $0x8] sm:$0xff]
        %v377 = vld [vmem:[%s292 + $0x10] sm:$0xff]
        %v378 = vld [vmem:[%s292 + $0x18] sm:$0xff]
        %v379 = vunpack.c.0.s8 %v375
        %v380 = vunpack.c.1.s8 %v375
        %v381 = vunpack.c.2.s8 %v375
        %v382 = vunpack.c.3.s8 %v375
        %v383 = vunpack.c.0.s8 %v376
        %v384 = vunpack.c.1.s8 %v376
        %v385 = vunpack.c.2.s8 %v376
        %v386 = vunpack.c.3.s8 %v376
        %v387 = vunpack.c.0.s8 %v377
        %v388 = vunpack.c.1.s8 %v377
        %v389 = vunpack.c.2.s8 %v377
        %v390 = vunpack.c.3.s8 %v377
        %v391 = vunpack.c.0.s8 %v378
        %v392 = vunpack.c.1.s8 %v378
        %v393 = vunpack.c.2.s8 %v378
        %v394 = vunpack.c.3.s8 %v378
        %v395 = vcvt.s32.f32 %v379
        %v396 = vcvt.s32.f32 %v380
        %v397 = vcvt.s32.f32 %v381
        %v398 = vcvt.s32.f32 %v382
        %v399 = vcvt.s32.f32 %v383
        %v400 = vcvt.s32.f32 %v384
        %v401 = vcvt.s32.f32 %v385
        %v402 = vcvt.s32.f32 %v386
        %v403 = vcvt.s32.f32 %v387
        %v404 = vcvt.s32.f32 %v388
        %v405 = vcvt.s32.f32 %v389
        %v406 = vcvt.s32.f32 %v390
        %v407 = vcvt.s32.f32 %v391
        %v408 = vcvt.s32.f32 %v392
        %v409 = vcvt.s32.f32 %v393
        %v410 = vcvt.s32.f32 %v394
        %411 = vst [vmem:[#allocation2] sm:$0xff] %v395
        %412 = vst [vmem:[#allocation2 + $0x8] sm:$0xff] %v396
        %413 = vst [vmem:[#allocation2 + $0x10] sm:$0xff] %v397
        %414 = vst [vmem:[#allocation2 + $0x18] sm:$0xff] %v398
        %415 = vst [vmem:[#allocation2 + $0x20] sm:$0xff] %v399
        %416 = vst [vmem:[#allocation2 + $0x28] sm:$0xff] %v400
        %417 = vst [vmem:[#allocation2 + $0x30] sm:$0xff] %v401
        %418 = vst [vmem:[#allocation2 + $0x38] sm:$0xff] %v402
        %419 = vst [vmem:[#allocation2 + $0x40] sm:$0xff] %v403
        %420 = vst [vmem:[#allocation2 + $0x48] sm:$0xff] %v404
        %421 = vst [vmem:[#allocation2 + $0x50] sm:$0xff] %v405
        %422 = vst [vmem:[#allocation2 + $0x58] sm:$0xff] %v406
        %423 = vst [vmem:[#allocation2 + $0x60] sm:$0xff] %v407
        %424 = vst [vmem:[#allocation2 + $0x68] sm:$0xff] %v408
        %425 = vst [vmem:[#allocation2 + $0x70] sm:$0xff] %v409
        %426 = vst [vmem:[#allocation2 + $0x78] sm:$0xff] %v410
        %v427 = vld [vmem:[#allocation3] sm:$0xff]
        %v428 = vld [vmem:[#allocation3 + $0x8] sm:$0xff]
        %v429 = vld [vmem:[#allocation3 + $0x10] sm:$0xff]
        %v430 = vld [vmem:[#allocation3 + $0x18] sm:$0xff]
        %v431 = vld [vmem:[#allocation3 + $0x20] sm:$0xff]
        %v432 = vld [vmem:[#allocation3 + $0x28] sm:$0xff]
        %v433 = vld [vmem:[#allocation3 + $0x30] sm:$0xff]
        %v434 = vld [vmem:[#allocation3 + $0x38] sm:$0xff]
        %v435 = vld [vmem:[#allocation3 + $0x40] sm:$0xff]
        %v436 = vld [vmem:[#allocation3 + $0x48] sm:$0xff]
        %v437 = vld [vmem:[#allocation3 + $0x50] sm:$0xff]
        %v438 = vld [vmem:[#allocation3 + $0x58] sm:$0xff]
        %v439 = vld [vmem:[#allocation3 + $0x60] sm:$0xff]
        %v440 = vld [vmem:[#allocation3 + $0x68] sm:$0xff]
        %v441 = vld [vmem:[#allocation3 + $0x70] sm:$0xff]
        %v442 = vld [vmem:[#allocation3 + $0x78] sm:$0xff]
        loop: start=0, step=1, limit=16
        $region61: #{tpu_custom_call.1} parent=39 // loop_pre_header
          _
        $region62: #{tpu_custom_call.1} parent=39 // loop_header
          %s444 = sphi 0, %s448
          %p445 = scmp.ge.s32.totalorder %s444, 16
          %v449 = vphi %v427, %v1318
          %v450 = vphi %v428, %v1319
          %v451 = vphi %v429, %v1320
          %v452 = vphi %v430, %v1321
          %v453 = vphi %v431, %v1322
          %v454 = vphi %v432, %v1323
          %v455 = vphi %v433, %v1324
          %v456 = vphi %v434, %v1325
          %v457 = vphi %v435, %v1326
          %v458 = vphi %v436, %v1327
          %v459 = vphi %v437, %v1328
          %v460 = vphi %v438, %v1329
          %v461 = vphi %v439, %v1330
          %v462 = vphi %v440, %v1331
          %v463 = vphi %v441, %v1332
          %v464 = vphi %v442, %v1333
        $region63: #{tpu_custom_call.1} parent=39 // loop_header_branch
          %447 = sbr.rel (%p445) target = $region67
        $region64: #{tpu_custom_call.1} parent=39 // loop_body
          %s465 = smul.u32 %s444, 8
          %s466 = scalar_lea.vmem [#allocation2], %s465
          %v467 = vld [vmem:[%s466] sm:$0xff]
          %468 = vxpose.xlu0.b32.start [1/16] %v467, 128
          %469 = vxpose.xlu0.b32.cont [2/16] 0.0, 128
          %470 = vxpose.xlu0.b32.cont [3/16] 0.0, 128
          %471 = vxpose.xlu0.b32.cont [4/16] 0.0, 128
          %472 = vxpose.xlu0.b32.cont [5/16] 0.0, 128
          %473 = vxpose.xlu0.b32.cont [6/16] 0.0, 128
          %474 = vxpose.xlu0.b32.cont [7/16] 0.0, 128
          %475 = vxpose.xlu0.b32.cont [8/16] 0.0, 128
          %476 = vxpose.xlu0.b32.cont [9/16] 0.0, 128
          %477 = vxpose.xlu0.b32.cont [10/16] 0.0, 128
          %478 = vxpose.xlu0.b32.cont [11/16] 0.0, 128
          %479 = vxpose.xlu0.b32.cont [12/16] 0.0, 128
          %480 = vxpose.xlu0.b32.cont [13/16] 0.0, 128
          %481 = vxpose.xlu0.b32.cont [14/16] 0.0, 128
          %482 = vxpose.xlu0.b32.cont [15/16] 0.0, 128
          %483 = vxpose.xlu0.b32.end [16/16] 0.0, 128
          %v484 = vpop.trf.xlu0
          %v485 = vpop.trf.xlu0
          %v486 = vpop.trf.xlu0
          %v487 = vpop.trf.xlu0
          %v488 = vpop.trf.xlu0
          %v489 = vpop.trf.xlu0
          %v490 = vpop.trf.xlu0
          %v491 = vpop.trf.xlu0
          %v492 = vpop.trf.xlu0
          %v493 = vpop.trf.xlu0
          %v494 = vpop.trf.xlu0
          %v495 = vpop.trf.xlu0
          %v496 = vpop.trf.xlu0
          %v497 = vpop.trf.xlu0
          %v498 = vpop.trf.xlu0
          %v499 = vpop.trf.xlu0
          %s500 = scalar_lea.vmem %s301, %s465 [#allocation7]
          %v501 = vld [vmem:[%s500] sm:$0xff]
          %vm502 = vcmp.gt.f32.partialorder %v484, 0.5
          %vm503 = vcmp.gt.f32.partialorder %v485, 0.5
          %vm504 = vcmp.gt.f32.partialorder %v486, 0.5
          %vm505 = vcmp.gt.f32.partialorder %v487, 0.5
          %vm506 = vcmp.gt.f32.partialorder %v488, 0.5
          %vm507 = vcmp.gt.f32.partialorder %v489, 0.5
          %vm508 = vcmp.gt.f32.partialorder %v490, 0.5
          %vm509 = vcmp.gt.f32.partialorder %v491, 0.5
          %vm510 = vcmp.gt.f32.partialorder %v492, 0.5
          %vm511 = vcmp.gt.f32.partialorder %v493, 0.5
          %vm512 = vcmp.gt.f32.partialorder %v494, 0.5
          %vm513 = vcmp.gt.f32.partialorder %v495, 0.5
          %vm514 = vcmp.gt.f32.partialorder %v496, 0.5
          %vm515 = vcmp.gt.f32.partialorder %v497, 0.5
          %vm516 = vcmp.gt.f32.partialorder %v498, 0.5
          %vm517 = vcmp.gt.f32.partialorder %v499, 0.5
          %v518 = vsel %vm502, 1, 0
          %v519 = vsel %vm503, 1, 0
          %v520 = vsel %vm504, 1, 0
          %v521 = vsel %vm505, 1, 0
          %v522 = vsel %vm506, 1, 0
          %v523 = vsel %vm507, 1, 0
          %v524 = vsel %vm508, 1, 0
          %v525 = vsel %vm509, 1, 0
          %v526 = vsel %vm510, 1, 0
          %v527 = vsel %vm511, 1, 0
          %v528 = vsel %vm512, 1, 0
          %v529 = vsel %vm513, 1, 0
          %v530 = vsel %vm514, 1, 0
          %v531 = vsel %vm515, 1, 0
          %v532 = vsel %vm516, 1, 0
          %v533 = vsel %vm517, 1, 0
          %534 = vset.pattern.permute.xlu0 0
          %535 = vperm.xlu0 %534, %v518
          %v536 = vpop.permute.xlu0 %535
          %537 = vset.pattern.permute.xlu0 0
          %538 = vperm.xlu0 %537, %v519
          %v539 = vpop.permute.xlu0 %538
          %540 = vset.pattern.permute.xlu0 0
          %541 = vperm.xlu0 %540, %v520
          %v542 = vpop.permute.xlu0 %541
          %543 = vset.pattern.permute.xlu0 0
          %544 = vperm.xlu0 %543, %v521
          %v545 = vpop.permute.xlu0 %544
          %546 = vset.pattern.permute.xlu0 0
          %547 = vperm.xlu0 %546, %v522
          %v548 = vpop.permute.xlu0 %547
          %549 = vset.pattern.permute.xlu0 0
          %550 = vperm.xlu0 %549, %v523
          %v551 = vpop.permute.xlu0 %550
          %552 = vset.pattern.permute.xlu0 0
          %553 = vperm.xlu0 %552, %v524
          %v554 = vpop.permute.xlu0 %553
          %555 = vset.pattern.permute.xlu0 0
          %556 = vperm.xlu0 %555, %v525
          %v557 = vpop.permute.xlu0 %556
          %558 = vset.pattern.permute.xlu0 0
          %559 = vperm.xlu0 %558, %v526
          %v560 = vpop.permute.xlu0 %559
          %561 = vset.pattern.permute.xlu0 0
          %562 = vperm.xlu0 %561, %v527
          %v563 = vpop.permute.xlu0 %562
          %564 = vset.pattern.permute.xlu0 0
          %565 = vperm.xlu0 %564, %v528
          %v566 = vpop.permute.xlu0 %565
          %567 = vset.pattern.permute.xlu0 0
          %568 = vperm.xlu0 %567, %v529
          %v569 = vpop.permute.xlu0 %568
          %570 = vset.pattern.permute.xlu0 0
          %571 = vperm.xlu0 %570, %v530
          %v572 = vpop.permute.xlu0 %571
          %573 = vset.pattern.permute.xlu0 0
          %574 = vperm.xlu0 %573, %v531
          %v575 = vpop.permute.xlu0 %574
          %576 = vset.pattern.permute.xlu0 0
          %577 = vperm.xlu0 %576, %v532
          %v578 = vpop.permute.xlu0 %577
          %579 = vset.pattern.permute.xlu0 0
          %580 = vperm.xlu0 %579, %v533
          %v581 = vpop.permute.xlu0 %580
          %vm582 = vcmp.eq.s32.totalorder %v536, 1
          %vm583 = vcmp.eq.s32.totalorder %v539, 1
          %vm584 = vcmp.eq.s32.totalorder %v542, 1
          %vm585 = vcmp.eq.s32.totalorder %v545, 1
          %vm586 = vcmp.eq.s32.totalorder %v548, 1
          %vm587 = vcmp.eq.s32.totalorder %v551, 1
          %vm588 = vcmp.eq.s32.totalorder %v554, 1
          %vm589 = vcmp.eq.s32.totalorder %v557, 1
          %vm590 = vcmp.eq.s32.totalorder %v560, 1
          %vm591 = vcmp.eq.s32.totalorder %v563, 1
          %vm592 = vcmp.eq.s32.totalorder %v566, 1
          %vm593 = vcmp.eq.s32.totalorder %v569, 1
          %vm594 = vcmp.eq.s32.totalorder %v572, 1
          %vm595 = vcmp.eq.s32.totalorder %v575, 1
          %vm596 = vcmp.eq.s32.totalorder %v578, 1
          %vm597 = vcmp.eq.s32.totalorder %v581, 1
          %v598 = vlaneseq
          %v599 = vshrl.u32 %v598, 7
          %v600 = vsub.s32 0, %v599
          %v601 = vrot.slane %v501, %v600
          %v602 = vsel %vm582, %v601, -1e+30
          %v603 = vsel %vm583, %v601, -1e+30
          %v604 = vsel %vm584, %v601, -1e+30
          %v605 = vsel %vm585, %v601, -1e+30
          %v606 = vsel %vm586, %v601, -1e+30
          %v607 = vsel %vm587, %v601, -1e+30
          %v608 = vsel %vm588, %v601, -1e+30
          %v609 = vsel %vm589, %v601, -1e+30
          %v610 = vsel %vm590, %v601, -1e+30
          %v611 = vsel %vm591, %v601, -1e+30
          %v612 = vsel %vm592, %v601, -1e+30
          %v613 = vsel %vm593, %v601, -1e+30
          %v614 = vsel %vm594, %v601, -1e+30
          %v615 = vsel %vm595, %v601, -1e+30
          %v616 = vsel %vm596, %v601, -1e+30
          %v617 = vsel %vm597, %v601, -1e+30
          %v618 = vmax.f32 %v449, %v602
          %v619 = vmax.f32 %v450, %v603
          %v620 = vmax.f32 %v451, %v604
          %v621 = vmax.f32 %v452, %v605
          %v622 = vmax.f32 %v453, %v606
          %v623 = vmax.f32 %v454, %v607
          %v624 = vmax.f32 %v455, %v608
          %v625 = vmax.f32 %v456, %v609
          %v626 = vmax.f32 %v457, %v610
          %v627 = vmax.f32 %v458, %v611
          %v628 = vmax.f32 %v459, %v612
          %v629 = vmax.f32 %v460, %v613
          %v630 = vmax.f32 %v461, %v614
          %v631 = vmax.f32 %v462, %v615
          %v632 = vmax.f32 %v463, %v616
          %v633 = vmax.f32 %v464, %v617
          %634 = vset.pattern.permute.xlu0 1
          %635 = vperm.xlu0 %634, %v518
          %v636 = vpop.permute.xlu0 %635
          %637 = vset.pattern.permute.xlu0 1
          %638 = vperm.xlu0 %637, %v519
          %v639 = vpop.permute.xlu0 %638
          %640 = vset.pattern.permute.xlu0 1
          %641 = vperm.xlu0 %640, %v520
          %v642 = vpop.permute.xlu0 %641
          %643 = vset.pattern.permute.xlu0 1
          %644 = vperm.xlu0 %643, %v521
          %v645 = vpop.permute.xlu0 %644
          %646 = vset.pattern.permute.xlu0 1
          %647 = vperm.xlu0 %646, %v522
          %v648 = vpop.permute.xlu0 %647
          %649 = vset.pattern.permute.xlu0 1
          %650 = vperm.xlu0 %649, %v523
          %v651 = vpop.permute.xlu0 %650
          %652 = vset.pattern.permute.xlu0 1
          %653 = vperm.xlu0 %652, %v524
          %v654 = vpop.permute.xlu0 %653
          %655 = vset.pattern.permute.xlu0 1
          %656 = vperm.xlu0 %655, %v525
          %v657 = vpop.permute.xlu0 %656
          %658 = vset.pattern.permute.xlu0 1
          %659 = vperm.xlu0 %658, %v526
          %v660 = vpop.permute.xlu0 %659
          %661 = vset.pattern.permute.xlu0 1
          %662 = vperm.xlu0 %661, %v527
          %v663 = vpop.permute.xlu0 %662
          %664 = vset.pattern.permute.xlu0 1
          %665 = vperm.xlu0 %664, %v528
          %v666 = vpop.permute.xlu0 %665
          %667 = vset.pattern.permute.xlu0 1
          %668 = vperm.xlu0 %667, %v529
          %v669 = vpop.permute.xlu0 %668
          %670 = vset.pattern.permute.xlu0 1
          %671 = vperm.xlu0 %670, %v530
          %v672 = vpop.permute.xlu0 %671
          %673 = vset.pattern.permute.xlu0 1
          %674 = vperm.xlu0 %673, %v531
          %v675 = vpop.permute.xlu0 %674
          %676 = vset.pattern.permute.xlu0 1
          %677 = vperm.xlu0 %676, %v532
          %v678 = vpop.permute.xlu0 %677
          %679 = vset.pattern.permute.xlu0 1
          %680 = vperm.xlu0 %679, %v533
          %v681 = vpop.permute.xlu0 %680
          %vm682 = vcmp.eq.s32.totalorder %v636, 1
          %vm683 = vcmp.eq.s32.totalorder %v639, 1
          %vm684 = vcmp.eq.s32.totalorder %v642, 1
          %vm685 = vcmp.eq.s32.totalorder %v645, 1
          %vm686 = vcmp.eq.s32.totalorder %v648, 1
          %vm687 = vcmp.eq.s32.totalorder %v651, 1
          %vm688 = vcmp.eq.s32.totalorder %v654, 1
          %vm689 = vcmp.eq.s32.totalorder %v657, 1
          %vm690 = vcmp.eq.s32.totalorder %v660, 1
          %vm691 = vcmp.eq.s32.totalorder %v663, 1
          %vm692 = vcmp.eq.s32.totalorder %v666, 1
          %vm693 = vcmp.eq.s32.totalorder %v669, 1
          %vm694 = vcmp.eq.s32.totalorder %v672, 1
          %vm695 = vcmp.eq.s32.totalorder %v675, 1
          %vm696 = vcmp.eq.s32.totalorder %v678, 1
          %vm697 = vcmp.eq.s32.totalorder %v681, 1
          %v698 = vlaneseq
          %v699 = vshrl.u32 %v698, 7
          %v700 = vsub.s32 1, %v699
          %v701 = vrot.slane %v501, %v700
          %v702 = vsel %vm682, %v701, -1e+30
          %v703 = vsel %vm683, %v701, -1e+30
          %v704 = vsel %vm684, %v701, -1e+30
          %v705 = vsel %vm685, %v701, -1e+30
          %v706 = vsel %vm686, %v701, -1e+30
          %v707 = vsel %vm687, %v701, -1e+30
          %v708 = vsel %vm688, %v701, -1e+30
          %v709 = vsel %vm689, %v701, -1e+30
          %v710 = vsel %vm690, %v701, -1e+30
          %v711 = vsel %vm691, %v701, -1e+30
          %v712 = vsel %vm692, %v701, -1e+30
          %v713 = vsel %vm693, %v701, -1e+30
          %v714 = vsel %vm694, %v701, -1e+30
          %v715 = vsel %vm695, %v701, -1e+30
          %v716 = vsel %vm696, %v701, -1e+30
          %v717 = vsel %vm697, %v701, -1e+30
          %v718 = vmax.f32 %v618, %v702
          %v719 = vmax.f32 %v619, %v703
          %v720 = vmax.f32 %v620, %v704
          %v721 = vmax.f32 %v621, %v705
          %v722 = vmax.f32 %v622, %v706
          %v723 = vmax.f32 %v623, %v707
          %v724 = vmax.f32 %v624, %v708
          %v725 = vmax.f32 %v625, %v709
          %v726 = vmax.f32 %v626, %v710
          %v727 = vmax.f32 %v627, %v711
          %v728 = vmax.f32 %v628, %v712
          %v729 = vmax.f32 %v629, %v713
          %v730 = vmax.f32 %v630, %v714
          %v731 = vmax.f32 %v631, %v715
          %v732 = vmax.f32 %v632, %v716
          %v733 = vmax.f32 %v633, %v717
          %734 = vset.pattern.permute.xlu0 2
          %735 = vperm.xlu0 %734, %v518
          %v736 = vpop.permute.xlu0 %735
          %737 = vset.pattern.permute.xlu0 2
          %738 = vperm.xlu0 %737, %v519
          %v739 = vpop.permute.xlu0 %738
          %740 = vset.pattern.permute.xlu0 2
          %741 = vperm.xlu0 %740, %v520
          %v742 = vpop.permute.xlu0 %741
          %743 = vset.pattern.permute.xlu0 2
          %744 = vperm.xlu0 %743, %v521
          %v745 = vpop.permute.xlu0 %744
          %746 = vset.pattern.permute.xlu0 2
          %747 = vperm.xlu0 %746, %v522
          %v748 = vpop.permute.xlu0 %747
          %749 = vset.pattern.permute.xlu0 2
          %750 = vperm.xlu0 %749, %v523
          %v751 = vpop.permute.xlu0 %750
          %752 = vset.pattern.permute.xlu0 2
          %753 = vperm.xlu0 %752, %v524
          %v754 = vpop.permute.xlu0 %753
          %755 = vset.pattern.permute.xlu0 2
          %756 = vperm.xlu0 %755, %v525
          %v757 = vpop.permute.xlu0 %756
          %758 = vset.pattern.permute.xlu0 2
          %759 = vperm.xlu0 %758, %v526
          %v760 = vpop.permute.xlu0 %759
          %761 = vset.pattern.permute.xlu0 2
          %762 = vperm.xlu0 %761, %v527
          %v763 = vpop.permute.xlu0 %762
          %764 = vset.pattern.permute.xlu0 2
          %765 = vperm.xlu0 %764, %v528
          %v766 = vpop.permute.xlu0 %765
          %767 = vset.pattern.permute.xlu0 2
          %768 = vperm.xlu0 %767, %v529
          %v769 = vpop.permute.xlu0 %768
          %770 = vset.pattern.permute.xlu0 2
          %771 = vperm.xlu0 %770, %v530
          %v772 = vpop.permute.xlu0 %771
          %773 = vset.pattern.permute.xlu0 2
          %774 = vperm.xlu0 %773, %v531
          %v775 = vpop.permute.xlu0 %774
          %776 = vset.pattern.permute.xlu0 2
          %777 = vperm.xlu0 %776, %v532
          %v778 = vpop.permute.xlu0 %777
          %779 = vset.pattern.permute.xlu0 2
          %780 = vperm.xlu0 %779, %v533
          %v781 = vpop.permute.xlu0 %780
          %vm782 = vcmp.eq.s32.totalorder %v736, 1
          %vm783 = vcmp.eq.s32.totalorder %v739, 1
          %vm784 = vcmp.eq.s32.totalorder %v742, 1
          %vm785 = vcmp.eq.s32.totalorder %v745, 1
          %vm786 = vcmp.eq.s32.totalorder %v748, 1
          %vm787 = vcmp.eq.s32.totalorder %v751, 1
          %vm788 = vcmp.eq.s32.totalorder %v754, 1
          %vm789 = vcmp.eq.s32.totalorder %v757, 1
          %vm790 = vcmp.eq.s32.totalorder %v760, 1
          %vm791 = vcmp.eq.s32.totalorder %v763, 1
          %vm792 = vcmp.eq.s32.totalorder %v766, 1
          %vm793 = vcmp.eq.s32.totalorder %v769, 1
          %vm794 = vcmp.eq.s32.totalorder %v772, 1
          %vm795 = vcmp.eq.s32.totalorder %v775, 1
          %vm796 = vcmp.eq.s32.totalorder %v778, 1
          %vm797 = vcmp.eq.s32.totalorder %v781, 1
          %v798 = vlaneseq
          %v799 = vshrl.u32 %v798, 7
          %v800 = vsub.s32 2, %v799
          %v801 = vrot.slane %v501, %v800
          %v802 = vsel %vm782, %v801, -1e+30
          %v803 = vsel %vm783, %v801, -1e+30
          %v804 = vsel %vm784, %v801, -1e+30
          %v805 = vsel %vm785, %v801, -1e+30
          %v806 = vsel %vm786, %v801, -1e+30
          %v807 = vsel %vm787, %v801, -1e+30
          %v808 = vsel %vm788, %v801, -1e+30
          %v809 = vsel %vm789, %v801, -1e+30
          %v810 = vsel %vm790, %v801, -1e+30
          %v811 = vsel %vm791, %v801, -1e+30
          %v812 = vsel %vm792, %v801, -1e+30
          %v813 = vsel %vm793, %v801, -1e+30
          %v814 = vsel %vm794, %v801, -1e+30
          %v815 = vsel %vm795, %v801, -1e+30
          %v816 = vsel %vm796, %v801, -1e+30
          %v817 = vsel %vm797, %v801, -1e+30
          %v818 = vmax.f32 %v718, %v802
          %v819 = vmax.f32 %v719, %v803
          %v820 = vmax.f32 %v720, %v804
          %v821 = vmax.f32 %v721, %v805
          %v822 = vmax.f32 %v722, %v806
          %v823 = vmax.f32 %v723, %v807
          %v824 = vmax.f32 %v724, %v808
          %v825 = vmax.f32 %v725, %v809
          %v826 = vmax.f32 %v726, %v810
          %v827 = vmax.f32 %v727, %v811
          %v828 = vmax.f32 %v728, %v812
          %v829 = vmax.f32 %v729, %v813
          %v830 = vmax.f32 %v730, %v814
          %v831 = vmax.f32 %v731, %v815
          %v832 = vmax.f32 %v732, %v816
          %v833 = vmax.f32 %v733, %v817
          %834 = vset.pattern.permute.xlu0 3
          %835 = vperm.xlu0 %834, %v518
          %v836 = vpop.permute.xlu0 %835
          %837 = vset.pattern.permute.xlu0 3
          %838 = vperm.xlu0 %837, %v519
          %v839 = vpop.permute.xlu0 %838
          %840 = vset.pattern.permute.xlu0 3
          %841 = vperm.xlu0 %840, %v520
          %v842 = vpop.permute.xlu0 %841
          %843 = vset.pattern.permute.xlu0 3
          %844 = vperm.xlu0 %843, %v521
          %v845 = vpop.permute.xlu0 %844
          %846 = vset.pattern.permute.xlu0 3
          %847 = vperm.xlu0 %846, %v522
          %v848 = vpop.permute.xlu0 %847
          %849 = vset.pattern.permute.xlu0 3
          %850 = vperm.xlu0 %849, %v523
          %v851 = vpop.permute.xlu0 %850
          %852 = vset.pattern.permute.xlu0 3
          %853 = vperm.xlu0 %852, %v524
          %v854 = vpop.permute.xlu0 %853
          %855 = vset.pattern.permute.xlu0 3
          %856 = vperm.xlu0 %855, %v525
          %v857 = vpop.permute.xlu0 %856
          %858 = vset.pattern.permute.xlu0 3
          %859 = vperm.xlu0 %858, %v526
          %v860 = vpop.permute.xlu0 %859
          %861 = vset.pattern.permute.xlu0 3
          %862 = vperm.xlu0 %861, %v527
          %v863 = vpop.permute.xlu0 %862
          %864 = vset.pattern.permute.xlu0 3
          %865 = vperm.xlu0 %864, %v528
          %v866 = vpop.permute.xlu0 %865
          %867 = vset.pattern.permute.xlu0 3
          %868 = vperm.xlu0 %867, %v529
          %v869 = vpop.permute.xlu0 %868
          %870 = vset.pattern.permute.xlu0 3
          %871 = vperm.xlu0 %870, %v530
          %v872 = vpop.permute.xlu0 %871
          %873 = vset.pattern.permute.xlu0 3
          %874 = vperm.xlu0 %873, %v531
          %v875 = vpop.permute.xlu0 %874
          %876 = vset.pattern.permute.xlu0 3
          %877 = vperm.xlu0 %876, %v532
          %v878 = vpop.permute.xlu0 %877
          %879 = vset.pattern.permute.xlu0 3
          %880 = vperm.xlu0 %879, %v533
          %v881 = vpop.permute.xlu0 %880
          %vm882 = vcmp.eq.s32.totalorder %v836, 1
          %vm883 = vcmp.eq.s32.totalorder %v839, 1
          %vm884 = vcmp.eq.s32.totalorder %v842, 1
          %vm885 = vcmp.eq.s32.totalorder %v845, 1
          %vm886 = vcmp.eq.s32.totalorder %v848, 1
          %vm887 = vcmp.eq.s32.totalorder %v851, 1
          %vm888 = vcmp.eq.s32.totalorder %v854, 1
          %vm889 = vcmp.eq.s32.totalorder %v857, 1
          %vm890 = vcmp.eq.s32.totalorder %v860, 1
          %vm891 = vcmp.eq.s32.totalorder %v863, 1
          %vm892 = vcmp.eq.s32.totalorder %v866, 1
          %vm893 = vcmp.eq.s32.totalorder %v869, 1
          %vm894 = vcmp.eq.s32.totalorder %v872, 1
          %vm895 = vcmp.eq.s32.totalorder %v875, 1
          %vm896 = vcmp.eq.s32.totalorder %v878, 1
          %vm897 = vcmp.eq.s32.totalorder %v881, 1
          %v898 = vlaneseq
          %v899 = vshrl.u32 %v898, 7
          %v900 = vsub.s32 3, %v899
          %v901 = vrot.slane %v501, %v900
          %v902 = vsel %vm882, %v901, -1e+30
          %v903 = vsel %vm883, %v901, -1e+30
          %v904 = vsel %vm884, %v901, -1e+30
          %v905 = vsel %vm885, %v901, -1e+30
          %v906 = vsel %vm886, %v901, -1e+30
          %v907 = vsel %vm887, %v901, -1e+30
          %v908 = vsel %vm888, %v901, -1e+30
          %v909 = vsel %vm889, %v901, -1e+30
          %v910 = vsel %vm890, %v901, -1e+30
          %v911 = vsel %vm891, %v901, -1e+30
          %v912 = vsel %vm892, %v901, -1e+30
          %v913 = vsel %vm893, %v901, -1e+30
          %v914 = vsel %vm894, %v901, -1e+30
          %v915 = vsel %vm895, %v901, -1e+30
          %v916 = vsel %vm896, %v901, -1e+30
          %v917 = vsel %vm897, %v901, -1e+30
          %v918 = vmax.f32 %v818, %v902
          %v919 = vmax.f32 %v819, %v903
          %v920 = vmax.f32 %v820, %v904
          %v921 = vmax.f32 %v821, %v905
          %v922 = vmax.f32 %v822, %v906
          %v923 = vmax.f32 %v823, %v907
          %v924 = vmax.f32 %v824, %v908
          %v925 = vmax.f32 %v825, %v909
          %v926 = vmax.f32 %v826, %v910
          %v927 = vmax.f32 %v827, %v911
          %v928 = vmax.f32 %v828, %v912
          %v929 = vmax.f32 %v829, %v913
          %v930 = vmax.f32 %v830, %v914
          %v931 = vmax.f32 %v831, %v915
          %v932 = vmax.f32 %v832, %v916
          %v933 = vmax.f32 %v833, %v917
          %934 = vset.pattern.permute.xlu0 4
          %935 = vperm.xlu0 %934, %v518
          %v936 = vpop.permute.xlu0 %935
          %937 = vset.pattern.permute.xlu0 4
          %938 = vperm.xlu0 %937, %v519
          %v939 = vpop.permute.xlu0 %938
          %940 = vset.pattern.permute.xlu0 4
          %941 = vperm.xlu0 %940, %v520
          %v942 = vpop.permute.xlu0 %941
          %943 = vset.pattern.permute.xlu0 4
          %944 = vperm.xlu0 %943, %v521
          %v945 = vpop.permute.xlu0 %944
          %946 = vset.pattern.permute.xlu0 4
          %947 = vperm.xlu0 %946, %v522
          %v948 = vpop.permute.xlu0 %947
          %949 = vset.pattern.permute.xlu0 4
          %950 = vperm.xlu0 %949, %v523
          %v951 = vpop.permute.xlu0 %950
          %952 = vset.pattern.permute.xlu0 4
          %953 = vperm.xlu0 %952, %v524
          %v954 = vpop.permute.xlu0 %953
          %955 = vset.pattern.permute.xlu0 4
          %956 = vperm.xlu0 %955, %v525
          %v957 = vpop.permute.xlu0 %956
          %958 = vset.pattern.permute.xlu0 4
          %959 = vperm.xlu0 %958, %v526
          %v960 = vpop.permute.xlu0 %959
          %961 = vset.pattern.permute.xlu0 4
          %962 = vperm.xlu0 %961, %v527
          %v963 = vpop.permute.xlu0 %962
          %964 = vset.pattern.permute.xlu0 4
          %965 = vperm.xlu0 %964, %v528
          %v966 = vpop.permute.xlu0 %965
          %967 = vset.pattern.permute.xlu0 4
          %968 = vperm.xlu0 %967, %v529
          %v969 = vpop.permute.xlu0 %968
          %970 = vset.pattern.permute.xlu0 4
          %971 = vperm.xlu0 %970, %v530
          %v972 = vpop.permute.xlu0 %971
          %973 = vset.pattern.permute.xlu0 4
          %974 = vperm.xlu0 %973, %v531
          %v975 = vpop.permute.xlu0 %974
          %976 = vset.pattern.permute.xlu0 4
          %977 = vperm.xlu0 %976, %v532
          %v978 = vpop.permute.xlu0 %977
          %979 = vset.pattern.permute.xlu0 4
          %980 = vperm.xlu0 %979, %v533
          %v981 = vpop.permute.xlu0 %980
          %vm982 = vcmp.eq.s32.totalorder %v936, 1
          %vm983 = vcmp.eq.s32.totalorder %v939, 1
          %vm984 = vcmp.eq.s32.totalorder %v942, 1
          %vm985 = vcmp.eq.s32.totalorder %v945, 1
          %vm986 = vcmp.eq.s32.totalorder %v948, 1
          %vm987 = vcmp.eq.s32.totalorder %v951, 1
          %vm988 = vcmp.eq.s32.totalorder %v954, 1
          %vm989 = vcmp.eq.s32.totalorder %v957, 1
          %vm990 = vcmp.eq.s32.totalorder %v960, 1
          %vm991 = vcmp.eq.s32.totalorder %v963, 1
          %vm992 = vcmp.eq.s32.totalorder %v966, 1
          %vm993 = vcmp.eq.s32.totalorder %v969, 1
          %vm994 = vcmp.eq.s32.totalorder %v972, 1
          %vm995 = vcmp.eq.s32.totalorder %v975, 1
          %vm996 = vcmp.eq.s32.totalorder %v978, 1
          %vm997 = vcmp.eq.s32.totalorder %v981, 1
          %v998 = vlaneseq
          %v999 = vshrl.u32 %v998, 7
          %v1000 = vsub.s32 4, %v999
          %v1001 = vrot.slane %v501, %v1000
          %v1002 = vsel %vm982, %v1001, -1e+30
          %v1003 = vsel %vm983, %v1001, -1e+30
          %v1004 = vsel %vm984, %v1001, -1e+30
          %v1005 = vsel %vm985, %v1001, -1e+30
          %v1006 = vsel %vm986, %v1001, -1e+30
          %v1007 = vsel %vm987, %v1001, -1e+30
          %v1008 = vsel %vm988, %v1001, -1e+30
          %v1009 = vsel %vm989, %v1001, -1e+30
          %v1010 = vsel %vm990, %v1001, -1e+30
          %v1011 = vsel %vm991, %v1001, -1e+30
          %v1012 = vsel %vm992, %v1001, -1e+30
          %v1013 = vsel %vm993, %v1001, -1e+30
          %v1014 = vsel %vm994, %v1001, -1e+30
          %v1015 = vsel %vm995, %v1001, -1e+30
          %v1016 = vsel %vm996, %v1001, -1e+30
          %v1017 = vsel %vm997, %v1001, -1e+30
          %v1018 = vmax.f32 %v918, %v1002
          %v1019 = vmax.f32 %v919, %v1003
          %v1020 = vmax.f32 %v920, %v1004
          %v1021 = vmax.f32 %v921, %v1005
          %v1022 = vmax.f32 %v922, %v1006
          %v1023 = vmax.f32 %v923, %v1007
          %v1024 = vmax.f32 %v924, %v1008
          %v1025 = vmax.f32 %v925, %v1009
          %v1026 = vmax.f32 %v926, %v1010
          %v1027 = vmax.f32 %v927, %v1011
          %v1028 = vmax.f32 %v928, %v1012
          %v1029 = vmax.f32 %v929, %v1013
          %v1030 = vmax.f32 %v930, %v1014
          %v1031 = vmax.f32 %v931, %v1015
          %v1032 = vmax.f32 %v932, %v1016
          %v1033 = vmax.f32 %v933, %v1017
          %1034 = vset.pattern.permute.xlu0 5
          %1035 = vperm.xlu0 %1034, %v518
          %v1036 = vpop.permute.xlu0 %1035
          %1037 = vset.pattern.permute.xlu0 5
          %1038 = vperm.xlu0 %1037, %v519
          %v1039 = vpop.permute.xlu0 %1038
          %1040 = vset.pattern.permute.xlu0 5
          %1041 = vperm.xlu0 %1040, %v520
          %v1042 = vpop.permute.xlu0 %1041
          %1043 = vset.pattern.permute.xlu0 5
          %1044 = vperm.xlu0 %1043, %v521
          %v1045 = vpop.permute.xlu0 %1044
          %1046 = vset.pattern.permute.xlu0 5
          %1047 = vperm.xlu0 %1046, %v522
          %v1048 = vpop.permute.xlu0 %1047
          %1049 = vset.pattern.permute.xlu0 5
          %1050 = vperm.xlu0 %1049, %v523
          %v1051 = vpop.permute.xlu0 %1050
          %1052 = vset.pattern.permute.xlu0 5
          %1053 = vperm.xlu0 %1052, %v524
          %v1054 = vpop.permute.xlu0 %1053
          %1055 = vset.pattern.permute.xlu0 5
          %1056 = vperm.xlu0 %1055, %v525
          %v1057 = vpop.permute.xlu0 %1056
          %1058 = vset.pattern.permute.xlu0 5
          %1059 = vperm.xlu0 %1058, %v526
          %v1060 = vpop.permute.xlu0 %1059
          %1061 = vset.pattern.permute.xlu0 5
          %1062 = vperm.xlu0 %1061, %v527
          %v1063 = vpop.permute.xlu0 %1062
          %1064 = vset.pattern.permute.xlu0 5
          %1065 = vperm.xlu0 %1064, %v528
          %v1066 = vpop.permute.xlu0 %1065
          %1067 = vset.pattern.permute.xlu0 5
          %1068 = vperm.xlu0 %1067, %v529
          %v1069 = vpop.permute.xlu0 %1068
          %1070 = vset.pattern.permute.xlu0 5
          %1071 = vperm.xlu0 %1070, %v530
          %v1072 = vpop.permute.xlu0 %1071
          %1073 = vset.pattern.permute.xlu0 5
          %1074 = vperm.xlu0 %1073, %v531
          %v1075 = vpop.permute.xlu0 %1074
          %1076 = vset.pattern.permute.xlu0 5
          %1077 = vperm.xlu0 %1076, %v532
          %v1078 = vpop.permute.xlu0 %1077
          %1079 = vset.pattern.permute.xlu0 5
          %1080 = vperm.xlu0 %1079, %v533
          %v1081 = vpop.permute.xlu0 %1080
          %vm1082 = vcmp.eq.s32.totalorder %v1036, 1
          %vm1083 = vcmp.eq.s32.totalorder %v1039, 1
          %vm1084 = vcmp.eq.s32.totalorder %v1042, 1
          %vm1085 = vcmp.eq.s32.totalorder %v1045, 1
          %vm1086 = vcmp.eq.s32.totalorder %v1048, 1
          %vm1087 = vcmp.eq.s32.totalorder %v1051, 1
          %vm1088 = vcmp.eq.s32.totalorder %v1054, 1
          %vm1089 = vcmp.eq.s32.totalorder %v1057, 1
          %vm1090 = vcmp.eq.s32.totalorder %v1060, 1
          %vm1091 = vcmp.eq.s32.totalorder %v1063, 1
          %vm1092 = vcmp.eq.s32.totalorder %v1066, 1
          %vm1093 = vcmp.eq.s32.totalorder %v1069, 1
          %vm1094 = vcmp.eq.s32.totalorder %v1072, 1
          %vm1095 = vcmp.eq.s32.totalorder %v1075, 1
          %vm1096 = vcmp.eq.s32.totalorder %v1078, 1
          %vm1097 = vcmp.eq.s32.totalorder %v1081, 1
          %v1098 = vlaneseq
          %v1099 = vshrl.u32 %v1098, 7
          %v1100 = vsub.s32 5, %v1099
          %v1101 = vrot.slane %v501, %v1100
          %v1102 = vsel %vm1082, %v1101, -1e+30
          %v1103 = vsel %vm1083, %v1101, -1e+30
          %v1104 = vsel %vm1084, %v1101, -1e+30
          %v1105 = vsel %vm1085, %v1101, -1e+30
          %v1106 = vsel %vm1086, %v1101, -1e+30
          %v1107 = vsel %vm1087, %v1101, -1e+30
          %v1108 = vsel %vm1088, %v1101, -1e+30
          %v1109 = vsel %vm1089, %v1101, -1e+30
          %v1110 = vsel %vm1090, %v1101, -1e+30
          %v1111 = vsel %vm1091, %v1101, -1e+30
          %v1112 = vsel %vm1092, %v1101, -1e+30
          %v1113 = vsel %vm1093, %v1101, -1e+30
          %v1114 = vsel %vm1094, %v1101, -1e+30
          %v1115 = vsel %vm1095, %v1101, -1e+30
          %v1116 = vsel %vm1096, %v1101, -1e+30
          %v1117 = vsel %vm1097, %v1101, -1e+30
          %v1118 = vmax.f32 %v1018, %v1102
          %v1119 = vmax.f32 %v1019, %v1103
          %v1120 = vmax.f32 %v1020, %v1104
          %v1121 = vmax.f32 %v1021, %v1105
          %v1122 = vmax.f32 %v1022, %v1106
          %v1123 = vmax.f32 %v1023, %v1107
          %v1124 = vmax.f32 %v1024, %v1108
          %v1125 = vmax.f32 %v1025, %v1109
          %v1126 = vmax.f32 %v1026, %v1110
          %v1127 = vmax.f32 %v1027, %v1111
          %v1128 = vmax.f32 %v1028, %v1112
          %v1129 = vmax.f32 %v1029, %v1113
          %v1130 = vmax.f32 %v1030, %v1114
          %v1131 = vmax.f32 %v1031, %v1115
          %v1132 = vmax.f32 %v1032, %v1116
          %v1133 = vmax.f32 %v1033, %v1117
          %1134 = vset.pattern.permute.xlu0 6
          %1135 = vperm.xlu0 %1134, %v518
          %v1136 = vpop.permute.xlu0 %1135
          %1137 = vset.pattern.permute.xlu0 6
          %1138 = vperm.xlu0 %1137, %v519
          %v1139 = vpop.permute.xlu0 %1138
          %1140 = vset.pattern.permute.xlu0 6
          %1141 = vperm.xlu0 %1140, %v520
          %v1142 = vpop.permute.xlu0 %1141
          %1143 = vset.pattern.permute.xlu0 6
          %1144 = vperm.xlu0 %1143, %v521
          %v1145 = vpop.permute.xlu0 %1144
          %1146 = vset.pattern.permute.xlu0 6
          %1147 = vperm.xlu0 %1146, %v522
          %v1148 = vpop.permute.xlu0 %1147
          %1149 = vset.pattern.permute.xlu0 6
          %1150 = vperm.xlu0 %1149, %v523
          %v1151 = vpop.permute.xlu0 %1150
          %1152 = vset.pattern.permute.xlu0 6
          %1153 = vperm.xlu0 %1152, %v524
          %v1154 = vpop.permute.xlu0 %1153
          %1155 = vset.pattern.permute.xlu0 6
          %1156 = vperm.xlu0 %1155, %v525
          %v1157 = vpop.permute.xlu0 %1156
          %1158 = vset.pattern.permute.xlu0 6
          %1159 = vperm.xlu0 %1158, %v526
          %v1160 = vpop.permute.xlu0 %1159
          %1161 = vset.pattern.permute.xlu0 6
          %1162 = vperm.xlu0 %1161, %v527
          %v1163 = vpop.permute.xlu0 %1162
          %1164 = vset.pattern.permute.xlu0 6
          %1165 = vperm.xlu0 %1164, %v528
          %v1166 = vpop.permute.xlu0 %1165
          %1167 = vset.pattern.permute.xlu0 6
          %1168 = vperm.xlu0 %1167, %v529
          %v1169 = vpop.permute.xlu0 %1168
          %1170 = vset.pattern.permute.xlu0 6
          %1171 = vperm.xlu0 %1170, %v530
          %v1172 = vpop.permute.xlu0 %1171
          %1173 = vset.pattern.permute.xlu0 6
          %1174 = vperm.xlu0 %1173, %v531
          %v1175 = vpop.permute.xlu0 %1174
          %1176 = vset.pattern.permute.xlu0 6
          %1177 = vperm.xlu0 %1176, %v532
          %v1178 = vpop.permute.xlu0 %1177
          %1179 = vset.pattern.permute.xlu0 6
          %1180 = vperm.xlu0 %1179, %v533
          %v1181 = vpop.permute.xlu0 %1180
          %vm1182 = vcmp.eq.s32.totalorder %v1136, 1
          %vm1183 = vcmp.eq.s32.totalorder %v1139, 1
          %vm1184 = vcmp.eq.s32.totalorder %v1142, 1
          %vm1185 = vcmp.eq.s32.totalorder %v1145, 1
          %vm1186 = vcmp.eq.s32.totalorder %v1148, 1
          %vm1187 = vcmp.eq.s32.totalorder %v1151, 1
          %vm1188 = vcmp.eq.s32.totalorder %v1154, 1
          %vm1189 = vcmp.eq.s32.totalorder %v1157, 1
          %vm1190 = vcmp.eq.s32.totalorder %v1160, 1
          %vm1191 = vcmp.eq.s32.totalorder %v1163, 1
          %vm1192 = vcmp.eq.s32.totalorder %v1166, 1
          %vm1193 = vcmp.eq.s32.totalorder %v1169, 1
          %vm1194 = vcmp.eq.s32.totalorder %v1172, 1
          %vm1195 = vcmp.eq.s32.totalorder %v1175, 1
          %vm1196 = vcmp.eq.s32.totalorder %v1178, 1
          %vm1197 = vcmp.eq.s32.totalorder %v1181, 1
          %v1198 = vlaneseq
          %v1199 = vshrl.u32 %v1198, 7
          %v1200 = vsub.s32 6, %v1199
          %v1201 = vrot.slane %v501, %v1200
          %v1202 = vsel %vm1182, %v1201, -1e+30
          %v1203 = vsel %vm1183, %v1201, -1e+30
          %v1204 = vsel %vm1184, %v1201, -1e+30
          %v1205 = vsel %vm1185, %v1201, -1e+30
          %v1206 = vsel %vm1186, %v1201, -1e+30
          %v1207 = vsel %vm1187, %v1201, -1e+30
          %v1208 = vsel %vm1188, %v1201, -1e+30
          %v1209 = vsel %vm1189, %v1201, -1e+30
          %v1210 = vsel %vm1190, %v1201, -1e+30
          %v1211 = vsel %vm1191, %v1201, -1e+30
          %v1212 = vsel %vm1192, %v1201, -1e+30
          %v1213 = vsel %vm1193, %v1201, -1e+30
          %v1214 = vsel %vm1194, %v1201, -1e+30
          %v1215 = vsel %vm1195, %v1201, -1e+30
          %v1216 = vsel %vm1196, %v1201, -1e+30
          %v1217 = vsel %vm1197, %v1201, -1e+30
          %v1218 = vmax.f32 %v1118, %v1202
          %v1219 = vmax.f32 %v1119, %v1203
          %v1220 = vmax.f32 %v1120, %v1204
          %v1221 = vmax.f32 %v1121, %v1205
          %v1222 = vmax.f32 %v1122, %v1206
          %v1223 = vmax.f32 %v1123, %v1207
          %v1224 = vmax.f32 %v1124, %v1208
          %v1225 = vmax.f32 %v1125, %v1209
          %v1226 = vmax.f32 %v1126, %v1210
          %v1227 = vmax.f32 %v1127, %v1211
          %v1228 = vmax.f32 %v1128, %v1212
          %v1229 = vmax.f32 %v1129, %v1213
          %v1230 = vmax.f32 %v1130, %v1214
          %v1231 = vmax.f32 %v1131, %v1215
          %v1232 = vmax.f32 %v1132, %v1216
          %v1233 = vmax.f32 %v1133, %v1217
          %1234 = vset.pattern.permute.xlu0 7
          %1235 = vperm.xlu0 %1234, %v518
          %v1236 = vpop.permute.xlu0 %1235
          %1237 = vset.pattern.permute.xlu0 7
          %1238 = vperm.xlu0 %1237, %v519
          %v1239 = vpop.permute.xlu0 %1238
          %1240 = vset.pattern.permute.xlu0 7
          %1241 = vperm.xlu0 %1240, %v520
          %v1242 = vpop.permute.xlu0 %1241
          %1243 = vset.pattern.permute.xlu0 7
          %1244 = vperm.xlu0 %1243, %v521
          %v1245 = vpop.permute.xlu0 %1244
          %1246 = vset.pattern.permute.xlu0 7
          %1247 = vperm.xlu0 %1246, %v522
          %v1248 = vpop.permute.xlu0 %1247
          %1249 = vset.pattern.permute.xlu0 7
          %1250 = vperm.xlu0 %1249, %v523
          %v1251 = vpop.permute.xlu0 %1250
          %1252 = vset.pattern.permute.xlu0 7
          %1253 = vperm.xlu0 %1252, %v524
          %v1254 = vpop.permute.xlu0 %1253
          %1255 = vset.pattern.permute.xlu0 7
          %1256 = vperm.xlu0 %1255, %v525
          %v1257 = vpop.permute.xlu0 %1256
          %1258 = vset.pattern.permute.xlu0 7
          %1259 = vperm.xlu0 %1258, %v526
          %v1260 = vpop.permute.xlu0 %1259
          %1261 = vset.pattern.permute.xlu0 7
          %1262 = vperm.xlu0 %1261, %v527
          %v1263 = vpop.permute.xlu0 %1262
          %1264 = vset.pattern.permute.xlu0 7
          %1265 = vperm.xlu0 %1264, %v528
          %v1266 = vpop.permute.xlu0 %1265
          %1267 = vset.pattern.permute.xlu0 7
          %1268 = vperm.xlu0 %1267, %v529
          %v1269 = vpop.permute.xlu0 %1268
          %1270 = vset.pattern.permute.xlu0 7
          %1271 = vperm.xlu0 %1270, %v530
          %v1272 = vpop.permute.xlu0 %1271
          %1273 = vset.pattern.permute.xlu0 7
          %1274 = vperm.xlu0 %1273, %v531
          %v1275 = vpop.permute.xlu0 %1274
          %1276 = vset.pattern.permute.xlu0 7
          %1277 = vperm.xlu0 %1276, %v532
          %v1278 = vpop.permute.xlu0 %1277
          %1279 = vset.pattern.permute.xlu0 7
          %1280 = vperm.xlu0 %1279, %v533
          %v1281 = vpop.permute.xlu0 %1280
          %vm1282 = vcmp.eq.s32.totalorder %v1236, 1
          %vm1283 = vcmp.eq.s32.totalorder %v1239, 1
          %vm1284 = vcmp.eq.s32.totalorder %v1242, 1
          %vm1285 = vcmp.eq.s32.totalorder %v1245, 1
          %vm1286 = vcmp.eq.s32.totalorder %v1248, 1
          %vm1287 = vcmp.eq.s32.totalorder %v1251, 1
          %vm1288 = vcmp.eq.s32.totalorder %v1254, 1
          %vm1289 = vcmp.eq.s32.totalorder %v1257, 1
          %vm1290 = vcmp.eq.s32.totalorder %v1260, 1
          %vm1291 = vcmp.eq.s32.totalorder %v1263, 1
          %vm1292 = vcmp.eq.s32.totalorder %v1266, 1
          %vm1293 = vcmp.eq.s32.totalorder %v1269, 1
          %vm1294 = vcmp.eq.s32.totalorder %v1272, 1
          %vm1295 = vcmp.eq.s32.totalorder %v1275, 1
          %vm1296 = vcmp.eq.s32.totalorder %v1278, 1
          %vm1297 = vcmp.eq.s32.totalorder %v1281, 1
          %v1298 = vlaneseq
          %v1299 = vshrl.u32 %v1298, 7
          %v1300 = vsub.s32 7, %v1299
          %v1301 = vrot.slane %v501, %v1300
          %v1302 = vsel %vm1282, %v1301, -1e+30
          %v1303 = vsel %vm1283, %v1301, -1e+30
          %v1304 = vsel %vm1284, %v1301, -1e+30
          %v1305 = vsel %vm1285, %v1301, -1e+30
          %v1306 = vsel %vm1286, %v1301, -1e+30
          %v1307 = vsel %vm1287, %v1301, -1e+30
          %v1308 = vsel %vm1288, %v1301, -1e+30
          %v1309 = vsel %vm1289, %v1301, -1e+30
          %v1310 = vsel %vm1290, %v1301, -1e+30
          %v1311 = vsel %vm1291, %v1301, -1e+30
          %v1312 = vsel %vm1292, %v1301, -1e+30
          %v1313 = vsel %vm1293, %v1301, -1e+30
          %v1314 = vsel %vm1294, %v1301, -1e+30
          %v1315 = vsel %vm1295, %v1301, -1e+30
          %v1316 = vsel %vm1296, %v1301, -1e+30
          %v1317 = vsel %vm1297, %v1301, -1e+30
          %v1318 = vmax.f32 %v1218, %v1302
          %v1319 = vmax.f32 %v1219, %v1303
          %v1320 = vmax.f32 %v1220, %v1304
          %v1321 = vmax.f32 %v1221, %v1305
          %v1322 = vmax.f32 %v1222, %v1306
          %v1323 = vmax.f32 %v1223, %v1307
          %v1324 = vmax.f32 %v1224, %v1308
          %v1325 = vmax.f32 %v1225, %v1309
          %v1326 = vmax.f32 %v1226, %v1310
          %v1327 = vmax.f32 %v1227, %v1311
          %v1328 = vmax.f32 %v1228, %v1312
          %v1329 = vmax.f32 %v1229, %v1313
          %v1330 = vmax.f32 %v1230, %v1314
          %v1331 = vmax.f32 %v1231, %v1315
          %v1332 = vmax.f32 %v1232, %v1316
          %v1333 = vmax.f32 %v1233, %v1317
        $region65: #{tpu_custom_call.1} parent=39 // loop_footer
          %s448 = sadd.s32 1, %s444
        $region66: #{tpu_custom_call.1} parent=39 // loop_footer_branch
          %443 = sbr.rel target = $region62
        $region67: #{tpu_custom_call.1} parent=39 // loop_exit
          _
        %1334 = vst [vmem:[#allocation3] sm:$0xff] %v449
        %1335 = vst [vmem:[#allocation3 + $0x8] sm:$0xff] %v450
        %1336 = vst [vmem:[#allocation3 + $0x10] sm:$0xff] %v451
        %1337 = vst [vmem:[#allocation3 + $0x18] sm:$0xff] %v452
        %1338 = vst [vmem:[#allocation3 + $0x20] sm:$0xff] %v453
        %1339 = vst [vmem:[#allocation3 + $0x28] sm:$0xff] %v454
        %1340 = vst [vmem:[#allocation3 + $0x30] sm:$0xff] %v455
        %1341 = vst [vmem:[#allocation3 + $0x38] sm:$0xff] %v456
        %1342 = vst [vmem:[#allocation3 + $0x40] sm:$0xff] %v457
        %1343 = vst [vmem:[#allocation3 + $0x48] sm:$0xff] %v458
        %1344 = vst [vmem:[#allocation3 + $0x50] sm:$0xff] %v459
        %1345 = vst [vmem:[#allocation3 + $0x58] sm:$0xff] %v460
        %1346 = vst [vmem:[#allocation3 + $0x60] sm:$0xff] %v461
        %1347 = vst [vmem:[#allocation3 + $0x68] sm:$0xff] %v462
        %1348 = vst [vmem:[#allocation3 + $0x70] sm:$0xff] %v463
        %1349 = vst [vmem:[#allocation3 + $0x78] sm:$0xff] %v464
        %p1350 = scmp.eq.s32.totalorder %s31, 1
        // Predicated region
        $region68: #{tpu_custom_call.1} parent=39 // pred_check
          %p1351 = pneg %p1350
        $region69: #{tpu_custom_call.1} parent=39 // pred_check_branch
          %1353 = sbr.rel (%p1351) target = $region71
        $region70: #{tpu_custom_call.1} parent=39 // pred_region
          %v1354 = vld [vmem:[#allocation3] sm:$0xff]
          %v1355 = vld [vmem:[#allocation3 + $0x8] sm:$0xff]
          %v1356 = vld [vmem:[#allocation3 + $0x10] sm:$0xff]
          %v1357 = vld [vmem:[#allocation3 + $0x18] sm:$0xff]
          %v1358 = vld [vmem:[#allocation3 + $0x20] sm:$0xff]
          %v1359 = vld [vmem:[#allocation3 + $0x28] sm:$0xff]
          %v1360 = vld [vmem:[#allocation3 + $0x30] sm:$0xff]
          %v1361 = vld [vmem:[#allocation3 + $0x38] sm:$0xff]
          %v1362 = vld [vmem:[#allocation3 + $0x40] sm:$0xff]
          %v1363 = vld [vmem:[#allocation3 + $0x48] sm:$0xff]
          %v1364 = vld [vmem:[#allocation3 + $0x50] sm:$0xff]
          %v1365 = vld [vmem:[#allocation3 + $0x58] sm:$0xff]
          %v1366 = vld [vmem:[#allocation3 + $0x60] sm:$0xff]
          %v1367 = vld [vmem:[#allocation3 + $0x68] sm:$0xff]
          %v1368 = vld [vmem:[#allocation3 + $0x70] sm:$0xff]
          %v1369 = vld [vmem:[#allocation3 + $0x78] sm:$0xff]
          %vm1370 = vcmp.lt.f32.partialorder %v1354, -5e+29
          %vm1371 = vcmp.lt.f32.partialorder %v1355, -5e+29
          %vm1372 = vcmp.lt.f32.partialorder %v1356, -5e+29
          %vm1373 = vcmp.lt.f32.partialorder %v1357, -5e+29
          %vm1374 = vcmp.lt.f32.partialorder %v1358, -5e+29
          %vm1375 = vcmp.lt.f32.partialorder %v1359, -5e+29
          %vm1376 = vcmp.lt.f32.partialorder %v1360, -5e+29
          %vm1377 = vcmp.lt.f32.partialorder %v1361, -5e+29
          %vm1378 = vcmp.lt.f32.partialorder %v1362, -5e+29
          %vm1379 = vcmp.lt.f32.partialorder %v1363, -5e+29
          %vm1380 = vcmp.lt.f32.partialorder %v1364, -5e+29
          %vm1381 = vcmp.lt.f32.partialorder %v1365, -5e+29
          %vm1382 = vcmp.lt.f32.partialorder %v1366, -5e+29
          %vm1383 = vcmp.lt.f32.partialorder %v1367, -5e+29
          %vm1384 = vcmp.lt.f32.partialorder %v1368, -5e+29
          %vm1385 = vcmp.lt.f32.partialorder %v1369, -5e+29
          %v1386 = vsel %vm1370, 0.0, %v1354
          %v1387 = vsel %vm1371, 0.0, %v1355
          %v1388 = vsel %vm1372, 0.0, %v1356
          %v1389 = vsel %vm1373, 0.0, %v1357
          %v1390 = vsel %vm1374, 0.0, %v1358
          %v1391 = vsel %vm1375, 0.0, %v1359
          %v1392 = vsel %vm1376, 0.0, %v1360
          %v1393 = vsel %vm1377, 0.0, %v1361
          %v1394 = vsel %vm1378, 0.0, %v1362
          %v1395 = vsel %vm1379, 0.0, %v1363
          %v1396 = vsel %vm1380, 0.0, %v1364
          %v1397 = vsel %vm1381, 0.0, %v1365
          %v1398 = vsel %vm1382, 0.0, %v1366
          %v1399 = vsel %vm1383, 0.0, %v1367
          %v1400 = vsel %vm1384, 0.0, %v1368
          %v1401 = vsel %vm1385, 0.0, %v1369
          %v1402 = vld [vmem:[%s310] sm:$0xff]
          %v1403 = vld [vmem:[%s310 + $0x8] sm:$0xff]
          %v1404 = vld [vmem:[%s310 + $0x10] sm:$0xff]
          %v1405 = vld [vmem:[%s310 + $0x18] sm:$0xff]
          %v1406 = vld [vmem:[%s310 + $0x20] sm:$0xff]
          %v1407 = vld [vmem:[%s310 + $0x28] sm:$0xff]
          %v1408 = vld [vmem:[%s310 + $0x30] sm:$0xff]
          %v1409 = vld [vmem:[%s310 + $0x38] sm:$0xff]
          %v1410 = vld [vmem:[%s310 + $0x40] sm:$0xff]
          %v1411 = vld [vmem:[%s310 + $0x48] sm:$0xff]
          %v1412 = vld [vmem:[%s310 + $0x50] sm:$0xff]
          %v1413 = vld [vmem:[%s310 + $0x58] sm:$0xff]
          %v1414 = vld [vmem:[%s310 + $0x60] sm:$0xff]
          %v1415 = vld [vmem:[%s310 + $0x68] sm:$0xff]
          %v1416 = vld [vmem:[%s310 + $0x70] sm:$0xff]
          %v1417 = vld [vmem:[%s310 + $0x78] sm:$0xff]
          %v1418 = vld [vmem:[#allocation10] sm:$0xff]
          %v1419 = vld [vmem:[#allocation10 + $0x8] sm:$0xff]
          %v1420 = vld [vmem:[#allocation10 + $0x10] sm:$0xff]
          %v1421 = vld [vmem:[#allocation10 + $0x18] sm:$0xff]
          %v1422 = vld [vmem:[#allocation10 + $0x20] sm:$0xff]
          %v1423 = vld [vmem:[#allocation10 + $0x28] sm:$0xff]
          %v1424 = vld [vmem:[#allocation10 + $0x30] sm:$0xff]
          %v1425 = vld [vmem:[#allocation10 + $0x38] sm:$0xff]
          %v1426 = vld [vmem:[#allocation10 + $0x40] sm:$0xff]
          %v1427 = vld [vmem:[#allocation10 + $0x48] sm:$0xff]
          %v1428 = vld [vmem:[#allocation10 + $0x50] sm:$0xff]
          %v1429 = vld [vmem:[#allocation10 + $0x58] sm:$0xff]
          %v1430 = vld [vmem:[#allocation10 + $0x60] sm:$0xff]
          %v1431 = vld [vmem:[#allocation10 + $0x68] sm:$0xff]
          %v1432 = vld [vmem:[#allocation10 + $0x70] sm:$0xff]
          %v1433 = vld [vmem:[#allocation10 + $0x78] sm:$0xff]
          %v1434 = vld [vmem:[#allocation10 + $0x80] sm:$0xff]
          %v1435 = vld [vmem:[#allocation10 + $0x88] sm:$0xff]
          %v1436 = vld [vmem:[#allocation10 + $0x90] sm:$0xff]
          %v1437 = vld [vmem:[#allocation10 + $0x98] sm:$0xff]
          %v1438 = vld [vmem:[#allocation10 + $0xa0] sm:$0xff]
          %v1439 = vld [vmem:[#allocation10 + $0xa8] sm:$0xff]
          %v1440 = vld [vmem:[#allocation10 + $0xb0] sm:$0xff]
          %v1441 = vld [vmem:[#allocation10 + $0xb8] sm:$0xff]
          %v1442 = vld [vmem:[#allocation10 + $0xc0] sm:$0xff]
          %v1443 = vld [vmem:[#allocation10 + $0xc8] sm:$0xff]
          %v1444 = vld [vmem:[#allocation10 + $0xd0] sm:$0xff]
          %v1445 = vld [vmem:[#allocation10 + $0xd8] sm:$0xff]
          %v1446 = vld [vmem:[#allocation10 + $0xe0] sm:$0xff]
          %v1447 = vld [vmem:[#allocation10 + $0xe8] sm:$0xff]
          %v1448 = vld [vmem:[#allocation10 + $0xf0] sm:$0xff]
          %v1449 = vld [vmem:[#allocation10 + $0xf8] sm:$0xff]
          %v1450 = vld [vmem:[%s4] sm:$0x1]
          %v1452 = vlaneseq
          %v1453 = vshrl.u32 %v1452, 7
          %v1454 = vsub.s32 0, %v1453
          %v1455 = vrot.slane %v1450, %v1454
          %1457 = vmatprep.subr.mxu0 0.0
          %v1458 = vand.u32 %v1418, 4294901760
          %1459 = vmatpush1.msra.mxu0 %v1458
          %1460 = vmatprep.subr.mxu0 0.0
          %v1461 = vand.u32 %v1419, 4294901760
          %1462 = vmatpush1.msra.mxu0 %v1461
          %1463 = vmatprep.subr.mxu0 0.0
          %v1464 = vand.u32 %v1420, 4294901760
          %1465 = vmatpush1.msra.mxu0 %v1464
          %1466 = vmatprep.subr.mxu0 0.0
          %v1467 = vand.u32 %v1421, 4294901760
          %1468 = vmatpush1.msra.mxu0 %v1467
          %1469 = vmatprep.subr.mxu0 0.0
          %v1470 = vand.u32 %v1422, 4294901760
          %1471 = vmatpush1.msra.mxu0 %v1470
          %1472 = vmatprep.subr.mxu0 0.0
          %v1473 = vand.u32 %v1423, 4294901760
          %1474 = vmatpush1.msra.mxu0 %v1473
          %1475 = vmatprep.subr.mxu0 0.0
          %v1476 = vand.u32 %v1424, 4294901760
          %1477 = vmatpush1.msra.mxu0 %v1476
          %1478 = vmatprep.subr.mxu0 0.0
          %v1479 = vand.u32 %v1425, 4294901760
          %1480 = vmatpush1.msra.mxu0 %v1479
          %1481 = vmatprep.subr.mxu0 0.0
          %v1482 = vand.u32 %v1426, 4294901760
          %1483 = vmatpush1.msra.mxu0 %v1482
          %1484 = vmatprep.subr.mxu0 0.0
          %v1485 = vand.u32 %v1427, 4294901760
          %1486 = vmatpush1.msra.mxu0 %v1485
          %1487 = vmatprep.subr.mxu0 0.0
          %v1488 = vand.u32 %v1428, 4294901760
          %1489 = vmatpush1.msra.mxu0 %v1488
          %1490 = vmatprep.subr.mxu0 0.0
          %v1491 = vand.u32 %v1429, 4294901760
          %1492 = vmatpush1.msra.mxu0 %v1491
          %1493 = vmatprep.subr.mxu0 0.0
          %v1494 = vand.u32 %v1430, 4294901760
          %1495 = vmatpush1.msra.mxu0 %v1494
          %1496 = vmatprep.subr.mxu0 0.0
          %v1497 = vand.u32 %v1431, 4294901760
          %1498 = vmatpush1.msra.mxu0 %v1497
          %1499 = vmatprep.subr.mxu0 0.0
          %v1500 = vand.u32 %v1432, 4294901760
          %1501 = vmatpush1.msra.mxu0 %v1500
          %1502 = vmatprep.subr.mxu0 0.0
          %v1503 = vand.u32 %v1433, 4294901760
          %1504 = vmatpush1.msra.mxu0 %v1503
          %1505 = vmatprep.subr.mxu0 0.0
          %v1506 = vand.u32 %v1434, 4294901760
          %1507 = vmatpush1.msra.mxu0 %v1506
          %1508 = vmatprep.subr.mxu0 0.0
          %v1509 = vand.u32 %v1435, 4294901760
          %1510 = vmatpush1.msra.mxu0 %v1509
          %1511 = vmatprep.subr.mxu0 0.0
          %v1512 = vand.u32 %v1436, 4294901760
          %1513 = vmatpush1.msra.mxu0 %v1512
          %1514 = vmatprep.subr.mxu0 0.0
          %v1515 = vand.u32 %v1437, 4294901760
          %1516 = vmatpush1.msra.mxu0 %v1515
          %1517 = vmatprep.subr.mxu0 0.0
          %v1518 = vand.u32 %v1438, 4294901760
          %1519 = vmatpush1.msra.mxu0 %v1518
          %1520 = vmatprep.subr.mxu0 0.0
          %v1521 = vand.u32 %v1439, 4294901760
          %1522 = vmatpush1.msra.mxu0 %v1521
          %1523 = vmatprep.subr.mxu0 0.0
          %v1524 = vand.u32 %v1440, 4294901760
          %1525 = vmatpush1.msra.mxu0 %v1524
          %1526 = vmatprep.subr.mxu0 0.0
          %v1527 = vand.u32 %v1441, 4294901760
          %1528 = vmatpush1.msra.mxu0 %v1527
          %1529 = vmatprep.subr.mxu0 0.0
          %v1530 = vand.u32 %v1442, 4294901760
          %1531 = vmatpush1.msra.mxu0 %v1530
          %1532 = vmatprep.subr.mxu0 0.0
          %v1533 = vand.u32 %v1443, 4294901760
          %1534 = vmatpush1.msra.mxu0 %v1533
          %1535 = vmatprep.subr.mxu0 0.0
          %v1536 = vand.u32 %v1444, 4294901760
          %1537 = vmatpush1.msra.mxu0 %v1536
          %1538 = vmatprep.subr.mxu0 0.0
          %v1539 = vand.u32 %v1445, 4294901760
          %1540 = vmatpush1.msra.mxu0 %v1539
          %1541 = vmatprep.subr.mxu0 0.0
          %v1542 = vand.u32 %v1446, 4294901760
          %1543 = vmatpush1.msra.mxu0 %v1542
          %1544 = vmatprep.subr.mxu0 0.0
          %v1545 = vand.u32 %v1447, 4294901760
          %1546 = vmatpush1.msra.mxu0 %v1545
          %1547 = vmatprep.subr.mxu0 0.0
          %v1548 = vand.u32 %v1448, 4294901760
          %1549 = vmatpush1.msra.mxu0 %v1548
          %1550 = vmatprep.subr.mxu0 0.0
          %v1551 = vand.u32 %v1449, 4294901760
          %1552 = vmatpush1.msra.mxu0 %v1551
          %v1553 = vand.u32 %v1402, 4294901760
          %v1554 = vsub.f32 %v1402, %v1553
          %v1555 = vand.u32 %v1554, 4294901760
          %v1556 = vsub.f32 %v1554, %v1555
          %v1557 = vand.u32 %v1556, 4294901760
          %1558 = vmatprep.mubr.f32.mxu0 %v1557
          %v1559 = vand.u32 %v1386, 4294901760
          %v1560 = vsub.f32 %v1386, %v1559
          %v1561 = vand.u32 %v1560, 4294901760
          %v1562 = vsub.f32 %v1560, %v1561
          %v1563 = vand.u32 %v1562, 4294901760
          %1564 = vmatmul.mubr.f32.gmra.mrb[0].mxu0 %v1563
          %v1565 = vpop.f32.mrb[0].mxu0
          %v1566 = vadd.f32 %v1455, %v1565
          %v1567 = vpop.f32.mrb[0].mxu0
          %v1568 = vand.u32 %v1403, 4294901760
          %v1569 = vsub.f32 %v1403, %v1568
          %v1570 = vand.u32 %v1569, 4294901760
          %v1571 = vsub.f32 %v1569, %v1570
          %v1572 = vand.u32 %v1571, 4294901760
          %1573 = vmatprep.mubr.f32.mxu0 %v1572
          %v1574 = vand.u32 %v1387, 4294901760
          %v1575 = vsub.f32 %v1387, %v1574
          %v1576 = vand.u32 %v1575, 4294901760
          %v1577 = vsub.f32 %v1575, %v1576
          %v1578 = vand.u32 %v1577, 4294901760
          %1579 = vmatmul.mubr.f32.gmra.mrb[0].mxu0 %v1578
          %v1580 = vpop.f32.mrb[0].mxu0
          %v1581 = vadd.f32 %v1455, %v1580
          %v1582 = vpop.f32.mrb[0].mxu0
          %v1583 = vand.u32 %v1404, 4294901760
          %v1584 = vsub.f32 %v1404, %v1583
          %v1585 = vand.u32 %v1584, 4294901760
          %v1586 = vsub.f32 %v1584, %v1585
          %v1587 = vand.u32 %v1586, 4294901760
          %1588 = vmatprep.mubr.f32.mxu0 %v1587
          %v1589 = vand.u32 %v1388, 4294901760
          %v1590 = vsub.f32 %v1388, %v1589
          %v1591 = vand.u32 %v1590, 4294901760
          %v1592 = vsub.f32 %v1590, %v1591
          %v1593 = vand.u32 %v1592, 4294901760
          %1594 = vmatmul.mubr.f32.gmra.mrb[0].mxu0 %v1593
          %v1595 = vpop.f32.mrb[0].mxu0
          %v1596 = vadd.f32 %v1455, %v1595
          %v1597 = vpop.f32.mrb[0].mxu0
          %v1598 = vand.u32 %v1405, 4294901760
          %v1599 = vsub.f32 %v1405, %v1598
          %v1600 = vand.u32 %v1599, 4294901760
          %v1601 = vsub.f32 %v1599, %v1600
          %v1602 = vand.u32 %v1601, 4294901760
          %1603 = vmatprep.mubr.f32.mxu0 %v1602
          %v1604 = vand.u32 %v1389, 4294901760
          %v1605 = vsub.f32 %v1389, %v1604
          %v1606 = vand.u32 %v1605, 4294901760
          %v1607 = vsub.f32 %v1605, %v1606
          %v1608 = vand.u32 %v1607, 4294901760
          %1609 = vmatmul.mubr.f32.gmra.mrb[0].mxu0 %v1608
          %v1610 = vpop.f32.mrb[0].mxu0
          %v1611 = vadd.f32 %v1455, %v1610
          %v1612 = vpop.f32.mrb[0].mxu0
          %v1613 = vand.u32 %v1406, 4294901760
          %v1614 = vsub.f32 %v1406, %v1613
          %v1615 = vand.u32 %v1614, 4294901760
          %v1616 = vsub.f32 %v1614, %v1615
          %v1617 = vand.u32 %v1616, 4294901760
          %1618 = vmatprep.mubr.f32.mxu0 %v1617
          %v1619 = vand.u32 %v1390, 4294901760
          %v1620 = vsub.f32 %v1390, %v1619
          %v1621 = vand.u32 %v1620, 4294901760
          %v1622 = vsub.f32 %v1620, %v1621
          %v1623 = vand.u32 %v1622, 4294901760
          %1624 = vmatmul.mubr.f32.gmra.mrb[0].mxu0 %v1623
          %v1625 = vpop.f32.mrb[0].mxu0
          %v1626 = vadd.f32 %v1455, %v1625
          %v1627 = vpop.f32.mrb[0].mxu0
          %v1628 = vand.u32 %v1407, 4294901760
          %v1629 = vsub.f32 %v1407, %v1628
          %v1630 = vand.u32 %v1629, 4294901760
          %v1631 = vsub.f32 %v1629, %v1630
          %v1632 = vand.u32 %v1631, 4294901760
          %1633 = vmatprep.mubr.f32.mxu0 %v1632
          %v1634 = vand.u32 %v1391, 4294901760
          %v1635 = vsub.f32 %v1391, %v1634
          %v1636 = vand.u32 %v1635, 4294901760
          %v1637 = vsub.f32 %v1635, %v1636
          %v1638 = vand.u32 %v1637, 4294901760
          %1639 = vmatmul.mubr.f32.gmra.mrb[0].mxu0 %v1638
          %v1640 = vpop.f32.mrb[0].mxu0
          %v1641 = vadd.f32 %v1455, %v1640
          %v1642 = vpop.f32.mrb[0].mxu0
          %v1643 = vand.u32 %v1408, 4294901760
          %v1644 = vsub.f32 %v1408, %v1643
          %v1645 = vand.u32 %v1644, 4294901760
          %v1646 = vsub.f32 %v1644, %v1645
          %v1647 = vand.u32 %v1646, 4294901760
          %1648 = vmatprep.mubr.f32.mxu0 %v1647
          %v1649 = vand.u32 %v1392, 4294901760
          %v1650 = vsub.f32 %v1392, %v1649
          %v1651 = vand.u32 %v1650, 4294901760
          %v1652 = vsub.f32 %v1650, %v1651
          %v1653 = vand.u32 %v1652, 4294901760
          %1654 = vmatmul.mubr.f32.gmra.mrb[0].mxu0 %v1653
          %v1655 = vpop.f32.mrb[0].mxu0
          %v1656 = vadd.f32 %v1455, %v1655
          %v1657 = vpop.f32.mrb[0].mxu0
          %v1658 = vand.u32 %v1409, 4294901760
          %v1659 = vsub.f32 %v1409, %v1658
          %v1660 = vand.u32 %v1659, 4294901760
          %v1661 = vsub.f32 %v1659, %v1660
          %v1662 = vand.u32 %v1661, 4294901760
          %1663 = vmatprep.mubr.f32.mxu0 %v1662
          %v1664 = vand.u32 %v1393, 4294901760
          %v1665 = vsub.f32 %v1393, %v1664
          %v1666 = vand.u32 %v1665, 4294901760
          %v1667 = vsub.f32 %v1665, %v1666
          %v1668 = vand.u32 %v1667, 4294901760
          %1669 = vmatmul.mubr.f32.gmra.mrb[0].mxu0 %v1668
          %v1670 = vpop.f32.mrb[0].mxu0
          %v1671 = vadd.f32 %v1455, %v1670
          %v1672 = vpop.f32.mrb[0].mxu0
          %v1673 = vand.u32 %v1410, 4294901760
          %v1674 = vsub.f32 %v1410, %v1673
          %v1675 = vand.u32 %v1674, 4294901760
          %v1676 = vsub.f32 %v1674, %v1675
          %v1677 = vand.u32 %v1676, 4294901760
          %1678 = vmatprep.mubr.f32.mxu0 %v1677
          %v1679 = vand.u32 %v1394, 4294901760
          %v1680 = vsub.f32 %v1394, %v1679
          %v1681 = vand.u32 %v1680, 4294901760
          %v1682 = vsub.f32 %v1680, %v1681
          %v1683 = vand.u32 %v1682, 4294901760
          %1684 = vmatmul.mubr.f32.gmra.mrb[0].mxu0 %v1683
          %v1685 = vpop.f32.mrb[0].mxu0
          %v1686 = vadd.f32 %v1455, %v1685
          %v1687 = vpop.f32.mrb[0].mxu0
          %v1688 = vand.u32 %v1411, 4294901760
          %v1689 = vsub.f32 %v1411, %v1688
          %v1690 = vand.u32 %v1689, 4294901760
          %v1691 = vsub.f32 %v1689, %v1690
          %v1692 = vand.u32 %v1691, 4294901760
          %1693 = vmatprep.mubr.f32.mxu0 %v1692
          %v1694 = vand.u32 %v1395, 4294901760
          %v1695 = vsub.f32 %v1395, %v1694
          %v1696 = vand.u32 %v1695, 4294901760
          %v1697 = vsub.f32 %v1695, %v1696
          %v1698 = vand.u32 %v1697, 4294901760
          %1699 = vmatmul.mubr.f32.gmra.mrb[0].mxu0 %v1698
          %v1700 = vpop.f32.mrb[0].mxu0
          %v1701 = vadd.f32 %v1455, %v1700
          %v1702 = vpop.f32.mrb[0].mxu0
          %v1703 = vand.u32 %v1412, 4294901760
          %v1704 = vsub.f32 %v1412, %v1703
          %v1705 = vand.u32 %v1704, 4294901760
          %v1706 = vsub.f32 %v1704, %v1705
          %v1707 = vand.u32 %v1706, 4294901760
          %1708 = vmatprep.mubr.f32.mxu0 %v1707
          %v1709 = vand.u32 %v1396, 4294901760
          %v1710 = vsub.f32 %v1396, %v1709
          %v1711 = vand.u32 %v1710, 4294901760
          %v1712 = vsub.f32 %v1710, %v1711
          %v1713 = vand.u32 %v1712, 4294901760
          %1714 = vmatmul.mubr.f32.gmra.mrb[0].mxu0 %v1713
          %v1715 = vpop.f32.mrb[0].mxu0
          %v1716 = vadd.f32 %v1455, %v1715
          %v1717 = vpop.f32.mrb[0].mxu0
          %v1718 = vand.u32 %v1413, 4294901760
          %v1719 = vsub.f32 %v1413, %v1718
          %v1720 = vand.u32 %v1719, 4294901760
          %v1721 = vsub.f32 %v1719, %v1720
          %v1722 = vand.u32 %v1721, 4294901760
          %1723 = vmatprep.mubr.f32.mxu0 %v1722
          %v1724 = vand.u32 %v1397, 4294901760
          %v1725 = vsub.f32 %v1397, %v1724
          %v1726 = vand.u32 %v1725, 4294901760
          %v1727 = vsub.f32 %v1725, %v1726
          %v1728 = vand.u32 %v1727, 4294901760
          %1729 = vmatmul.mubr.f32.gmra.mrb[0].mxu0 %v1728
          %v1730 = vpop.f32.mrb[0].mxu0
          %v1731 = vadd.f32 %v1455, %v1730
          %v1732 = vpop.f32.mrb[0].mxu0
          %v1733 = vand.u32 %v1414, 4294901760
          %v1734 = vsub.f32 %v1414, %v1733
          %v1735 = vand.u32 %v1734, 4294901760
          %v1736 = vsub.f32 %v1734, %v1735
          %v1737 = vand.u32 %v1736, 4294901760
          %1738 = vmatprep.mubr.f32.mxu0 %v1737
          %v1739 = vand.u32 %v1398, 4294901760
          %v1740 = vsub.f32 %v1398, %v1739
          %v1741 = vand.u32 %v1740, 4294901760
          %v1742 = vsub.f32 %v1740, %v1741
          %v1743 = vand.u32 %v1742, 4294901760
          %1744 = vmatmul.mubr.f32.gmra.mrb[0].mxu0 %v1743
          %v1745 = vpop.f32.mrb[0].mxu0
          %v1746 = vadd.f32 %v1455, %v1745
          %v1747 = vpop.f32.mrb[0].mxu0
          %v1748 = vand.u32 %v1415, 4294901760
          %v1749 = vsub.f32 %v1415, %v1748
          %v1750 = vand.u32 %v1749, 4294901760
          %v1751 = vsub.f32 %v1749, %v1750
          %v1752 = vand.u32 %v1751, 4294901760
          %1753 = vmatprep.mubr.f32.mxu0 %v1752
          %v1754 = vand.u32 %v1399, 4294901760
          %v1755 = vsub.f32 %v1399, %v1754
          %v1756 = vand.u32 %v1755, 4294901760
          %v1757 = vsub.f32 %v1755, %v1756
          %v1758 = vand.u32 %v1757, 4294901760
          %1759 = vmatmul.mubr.f32.gmra.mrb[0].mxu0 %v1758
          %v1760 = vpop.f32.mrb[0].mxu0
          %v1761 = vadd.f32 %v1455, %v1760
          %v1762 = vpop.f32.mrb[0].mxu0
          %v1763 = vand.u32 %v1416, 4294901760
          %v1764 = vsub.f32 %v1416, %v1763
          %v1765 = vand.u32 %v1764, 4294901760
          %v1766 = vsub.f32 %v1764, %v1765
          %v1767 = vand.u32 %v1766, 4294901760
          %1768 = vmatprep.mubr.f32.mxu0 %v1767
          %v1769 = vand.u32 %v1400, 4294901760
          %v1770 = vsub.f32 %v1400, %v1769
          %v1771 = vand.u32 %v1770, 4294901760
          %v1772 = vsub.f32 %v1770, %v1771
          %v1773 = vand.u32 %v1772, 4294901760
          %1774 = vmatmul.mubr.f32.gmra.mrb[0].mxu0 %v1773
          %v1775 = vpop.f32.mrb[0].mxu0
          %v1776 = vadd.f32 %v1455, %v1775
          %v1777 = vpop.f32.mrb[0].mxu0
          %v1778 = vand.u32 %v1417, 4294901760
          %v1779 = vsub.f32 %v1417, %v1778
          %v1780 = vand.u32 %v1779, 4294901760
          %v1781 = vsub.f32 %v1779, %v1780
          %v1782 = vand.u32 %v1781, 4294901760
          %1783 = vmatprep.mubr.f32.mxu0 %v1782
          %v1784 = vand.u32 %v1401, 4294901760
          %v1785 = vsub.f32 %v1401, %v1784
          %v1786 = vand.u32 %v1785, 4294901760
          %v1787 = vsub.f32 %v1785, %v1786
          %v1788 = vand.u32 %v1787, 4294901760
          %1789 = vmatmul.mubr.f32.gmra.mrb[0].mxu0 %v1788
          %v1790 = vpop.f32.mrb[0].mxu0
          %v1791 = vadd.f32 %v1455, %v1790
          %v1792 = vpop.f32.mrb[0].mxu0
          %1793 = vdwg.mxu0
          %1794 = vmatprep.subr.mxu0 0.0
          %v1795 = vand.u32 %v1418, 4294901760
          %v1796 = vsub.f32 %v1418, %v1795
          %v1797 = vand.u32 %v1796, 4294901760
          %v1798 = vsub.f32 %v1796, %v1797
          %v1799 = vand.u32 %v1798, 4294901760
          %1800 = vmatpush1.msra.mxu0 %v1799
          %1801 = vmatprep.subr.mxu0 0.0
          %v1802 = vand.u32 %v1419, 4294901760
          %v1803 = vsub.f32 %v1419, %v1802
          %v1804 = vand.u32 %v1803, 4294901760
          %v1805 = vsub.f32 %v1803, %v1804
          %v1806 = vand.u32 %v1805, 4294901760
          %1807 = vmatpush1.msra.mxu0 %v1806
          %1808 = vmatprep.subr.mxu0 0.0
          %v1809 = vand.u32 %v1420, 4294901760
          %v1810 = vsub.f32 %v1420, %v1809
          %v1811 = vand.u32 %v1810, 4294901760
          %v1812 = vsub.f32 %v1810, %v1811
          %v1813 = vand.u32 %v1812, 4294901760
          %1814 = vmatpush1.msra.mxu0 %v1813
          %1815 = vmatprep.subr.mxu0 0.0
          %v1816 = vand.u32 %v1421, 4294901760
          %v1817 = vsub.f32 %v1421, %v1816
          %v1818 = vand.u32 %v1817, 4294901760
          %v1819 = vsub.f32 %v1817, %v1818
          %v1820 = vand.u32 %v1819, 4294901760
          %1821 = vmatpush1.msra.mxu0 %v1820
          %1822 = vmatprep.subr.mxu0 0.0
          %v1823 = vand.u32 %v1422, 4294901760
          %v1824 = vsub.f32 %v1422, %v1823
          %v1825 = vand.u32 %v1824, 4294901760
          %v1826 = vsub.f32 %v1824, %v1825
          %v1827 = vand.u32 %v1826, 4294901760
          %1828 = vmatpush1.msra.mxu0 %v1827
          %1829 = vmatprep.subr.mxu0 0.0
          %v1830 = vand.u32 %v1423, 4294901760
          %v1831 = vsub.f32 %v1423, %v1830
          %v1832 = vand.u32 %v1831, 4294901760
          %v1833 = vsub.f32 %v1831, %v1832
          %v1834 = vand.u32 %v1833, 4294901760
          %1835 = vmatpush1.msra.mxu0 %v1834
          %1836 = vmatprep.subr.mxu0 0.0
          %v1837 = vand.u32 %v1424, 4294901760
          %v1838 = vsub.f32 %v1424, %v1837
          %v1839 = vand.u32 %v1838, 4294901760
          %v1840 = vsub.f32 %v1838, %v1839
          %v1841 = vand.u32 %v1840, 4294901760
          %1842 = vmatpush1.msra.mxu0 %v1841
          %1843 = vmatprep.subr.mxu0 0.0
          %v1844 = vand.u32 %v1425, 4294901760
          %v1845 = vsub.f32 %v1425, %v1844
          %v1846 = vand.u32 %v1845, 4294901760
          %v1847 = vsub.f32 %v1845, %v1846
          %v1848 = vand.u32 %v1847, 4294901760
          %1849 = vmatpush1.msra.mxu0 %v1848
          %1850 = vmatprep.subr.mxu0 0.0
          %v1851 = vand.u32 %v1426, 4294901760
          %v1852 = vsub.f32 %v1426, %v1851
          %v1853 = vand.u32 %v1852, 4294901760
          %v1854 = vsub.f32 %v1852, %v1853
          %v1855 = vand.u32 %v1854, 4294901760
          %1856 = vmatpush1.msra.mxu0 %v1855
          %1857 = vmatprep.subr.mxu0 0.0
          %v1858 = vand.u32 %v1427, 4294901760
          %v1859 = vsub.f32 %v1427, %v1858
          %v1860 = vand.u32 %v1859, 4294901760
          %v1861 = vsub.f32 %v1859, %v1860
          %v1862 = vand.u32 %v1861, 4294901760
          %1863 = vmatpush1.msra.mxu0 %v1862
          %1864 = vmatprep.subr.mxu0 0.0
          %v1865 = vand.u32 %v1428, 4294901760
          %v1866 = vsub.f32 %v1428, %v1865
          %v1867 = vand.u32 %v1866, 4294901760
          %v1868 = vsub.f32 %v1866, %v1867
          %v1869 = vand.u32 %v1868, 4294901760
          %1870 = vmatpush1.msra.mxu0 %v1869
          %1871 = vmatprep.subr.mxu0 0.0
          %v1872 = vand.u32 %v1429, 4294901760
          %v1873 = vsub.f32 %v1429, %v1872
          %v1874 = vand.u32 %v1873, 4294901760
          %v1875 = vsub.f32 %v1873, %v1874
          %v1876 = vand.u32 %v1875, 4294901760
          %1877 = vmatpush1.msra.mxu0 %v1876
          %1878 = vmatprep.subr.mxu0 0.0
          %v1879 = vand.u32 %v1430, 4294901760
          %v1880 = vsub.f32 %v1430, %v1879
          %v1881 = vand.u32 %v1880, 4294901760
          %v1882 = vsub.f32 %v1880, %v1881
          %v1883 = vand.u32 %v1882, 4294901760
          %1884 = vmatpush1.msra.mxu0 %v1883
          %1885 = vmatprep.subr.mxu0 0.0
          %v1886 = vand.u32 %v1431, 4294901760
          %v1887 = vsub.f32 %v1431, %v1886
          %v1888 = vand.u32 %v1887, 4294901760
          %v1889 = vsub.f32 %v1887, %v1888
          %v1890 = vand.u32 %v1889, 4294901760
          %1891 = vmatpush1.msra.mxu0 %v1890
          %1892 = vmatprep.subr.mxu0 0.0
          %v1893 = vand.u32 %v1432, 4294901760
          %v1894 = vsub.f32 %v1432, %v1893
          %v1895 = vand.u32 %v1894, 4294901760
          %v1896 = vsub.f32 %v1894, %v1895
          %v1897 = vand.u32 %v1896, 4294901760
          %1898 = vmatpush1.msra.mxu0 %v1897
          %1899 = vmatprep.subr.mxu0 0.0
          %v1900 = vand.u32 %v1433, 4294901760
          %v1901 = vsub.f32 %v1433, %v1900
          %v1902 = vand.u32 %v1901, 4294901760
          %v1903 = vsub.f32 %v1901, %v1902
          %v1904 = vand.u32 %v1903, 4294901760
          %1905 = vmatpush1.msra.mxu0 %v1904
          %1906 = vmatprep.subr.mxu0 0.0
          %v1907 = vand.u32 %v1434, 4294901760
          %v1908 = vsub.f32 %v1434, %v1907
          %v1909 = vand.u32 %v1908, 4294901760
          %v1910 = vsub.f32 %v1908, %v1909
          %v1911 = vand.u32 %v1910, 4294901760
          %1912 = vmatpush1.msra.mxu0 %v1911
          %1913 = vmatprep.subr.mxu0 0.0
          %v1914 = vand.u32 %v1435, 4294901760
          %v1915 = vsub.f32 %v1435, %v1914
          %v1916 = vand.u32 %v1915, 4294901760
          %v1917 = vsub.f32 %v1915, %v1916
          %v1918 = vand.u32 %v1917, 4294901760
          %1919 = vmatpush1.msra.mxu0 %v1918
          %1920 = vmatprep.subr.mxu0 0.0
          %v1921 = vand.u32 %v1436, 4294901760
          %v1922 = vsub.f32 %v1436, %v1921
          %v1923 = vand.u32 %v1922, 4294901760
          %v1924 = vsub.f32 %v1922, %v1923
          %v1925 = vand.u32 %v1924, 4294901760
          %1926 = vmatpush1.msra.mxu0 %v1925
          %1927 = vmatprep.subr.mxu0 0.0
          %v1928 = vand.u32 %v1437, 4294901760
          %v1929 = vsub.f32 %v1437, %v1928
          %v1930 = vand.u32 %v1929, 4294901760
          %v1931 = vsub.f32 %v1929, %v1930
          %v1932 = vand.u32 %v1931, 4294901760
          %1933 = vmatpush1.msra.mxu0 %v1932
          %1934 = vmatprep.subr.mxu0 0.0
          %v1935 = vand.u32 %v1438, 4294901760
          %v1936 = vsub.f32 %v1438, %v1935
          %v1937 = vand.u32 %v1936, 4294901760
          %v1938 = vsub.f32 %v1936, %v1937
          %v1939 = vand.u32 %v1938, 4294901760
          %1940 = vmatpush1.msra.mxu0 %v1939
          %1941 = vmatprep.subr.mxu0 0.0
          %v1942 = vand.u32 %v1439, 4294901760
          %v1943 = vsub.f32 %v1439, %v1942
          %v1944 = vand.u32 %v1943, 4294901760
          %v1945 = vsub.f32 %v1943, %v1944
          %v1946 = vand.u32 %v1945, 4294901760
          %1947 = vmatpush1.msra.mxu0 %v1946
          %1948 = vmatprep.subr.mxu0 0.0
          %v1949 = vand.u32 %v1440, 4294901760
          %v1950 = vsub.f32 %v1440, %v1949
          %v1951 = vand.u32 %v1950, 4294901760
          %v1952 = vsub.f32 %v1950, %v1951
          %v1953 = vand.u32 %v1952, 4294901760
          %1954 = vmatpush1.msra.mxu0 %v1953
          %1955 = vmatprep.subr.mxu0 0.0
          %v1956 = vand.u32 %v1441, 4294901760
          %v1957 = vsub.f32 %v1441, %v1956
          %v1958 = vand.u32 %v1957, 4294901760
          %v1959 = vsub.f32 %v1957, %v1958
          %v1960 = vand.u32 %v1959, 4294901760
          %1961 = vmatpush1.msra.mxu0 %v1960
          %1962 = vmatprep.subr.mxu0 0.0
          %v1963 = vand.u32 %v1442, 4294901760
          %v1964 = vsub.f32 %v1442, %v1963
          %v1965 = vand.u32 %v1964, 4294901760
          %v1966 = vsub.f32 %v1964, %v1965
          %v1967 = vand.u32 %v1966, 4294901760
          %1968 = vmatpush1.msra.mxu0 %v1967
          %1969 = vmatprep.subr.mxu0 0.0
          %v1970 = vand.u32 %v1443, 4294901760
          %v1971 = vsub.f32 %v1443, %v1970
          %v1972 = vand.u32 %v1971, 4294901760
          %v1973 = vsub.f32 %v1971, %v1972
          %v1974 = vand.u32 %v1973, 4294901760
          %1975 = vmatpush1.msra.mxu0 %v1974
          %1976 = vmatprep.subr.mxu0 0.0
          %v1977 = vand.u32 %v1444, 4294901760
          %v1978 = vsub.f32 %v1444, %v1977
          %v1979 = vand.u32 %v1978, 4294901760
          %v1980 = vsub.f32 %v1978, %v1979
          %v1981 = vand.u32 %v1980, 4294901760
          %1982 = vmatpush1.msra.mxu0 %v1981
          %1983 = vmatprep.subr.mxu0 0.0
          %v1984 = vand.u32 %v1445, 4294901760
          %v1985 = vsub.f32 %v1445, %v1984
          %v1986 = vand.u32 %v1985, 4294901760
          %v1987 = vsub.f32 %v1985, %v1986
          %v1988 = vand.u32 %v1987, 4294901760
          %1989 = vmatpush1.msra.mxu0 %v1988
          %1990 = vmatprep.subr.mxu0 0.0
          %v1991 = vand.u32 %v1446, 4294901760
          %v1992 = vsub.f32 %v1446, %v1991
          %v1993 = vand.u32 %v1992, 4294901760
          %v1994 = vsub.f32 %v1992, %v1993
          %v1995 = vand.u32 %v1994, 4294901760
          %1996 = vmatpush1.msra.mxu0 %v1995
          %1997 = vmatprep.subr.mxu0 0.0
          %v1998 = vand.u32 %v1447, 4294901760
          %v1999 = vsub.f32 %v1447, %v1998
          %v2000 = vand.u32 %v1999, 4294901760
          %v2001 = vsub.f32 %v1999, %v2000
          %v2002 = vand.u32 %v2001, 4294901760
          %2003 = vmatpush1.msra.mxu0 %v2002
          %2004 = vmatprep.subr.mxu0 0.0
          %v2005 = vand.u32 %v1448, 4294901760
          %v2006 = vsub.f32 %v1448, %v2005
          %v2007 = vand.u32 %v2006, 4294901760
          %v2008 = vsub.f32 %v2006, %v2007
          %v2009 = vand.u32 %v2008, 4294901760
          %2010 = vmatpush1.msra.mxu0 %v2009
          %2011 = vmatprep.subr.mxu0 0.0
          %v2012 = vand.u32 %v1449, 4294901760
          %v2013 = vsub.f32 %v1449, %v2012
          %v2014 = vand.u32 %v2013, 4294901760
          %v2015 = vsub.f32 %v2013, %v2014
          %v2016 = vand.u32 %v2015, 4294901760
          %2017 = vmatpush1.msra.mxu0 %v2016
          %v2018 = vand.u32 %v1402, 4294901760
          %2019 = vmatprep.mubr.f32.mxu0 %v2018
          %v2020 = vand.u32 %v1386, 4294901760
          %2021 = vmatmul.mubr.f32.gmra.mrb[0].mxu0 %v2020
          %v2022 = vpop.f32.mrb[0].mxu0
          %v2023 = vadd.f32 %v1566, %v2022
          %v2024 = vpop.f32.mrb[0].mxu0
          %v2025 = vand.u32 %v1403, 4294901760
          %2026 = vmatprep.mubr.f32.mxu0 %v2025
          %v2027 = vand.u32 %v1387, 4294901760
          %2028 = vmatmul.mubr.f32.gmra.mrb[0].mxu0 %v2027
          %v2029 = vpop.f32.mrb[0].mxu0
          %v2030 = vadd.f32 %v1581, %v2029
          %v2031 = vpop.f32.mrb[0].mxu0
          %v2032 = vand.u32 %v1404, 4294901760
          %2033 = vmatprep.mubr.f32.mxu0 %v2032
          %v2034 = vand.u32 %v1388, 4294901760
          %2035 = vmatmul.mubr.f32.gmra.mrb[0].mxu0 %v2034
          %v2036 = vpop.f32.mrb[0].mxu0
          %v2037 = vadd.f32 %v1596, %v2036
          %v2038 = vpop.f32.mrb[0].mxu0
          %v2039 = vand.u32 %v1405, 4294901760
          %2040 = vmatprep.mubr.f32.mxu0 %v2039
          %v2041 = vand.u32 %v1389, 4294901760
          %2042 = vmatmul.mubr.f32.gmra.mrb[0].mxu0 %v2041
          %v2043 = vpop.f32.mrb[0].mxu0
          %v2044 = vadd.f32 %v1611, %v2043
          %v2045 = vpop.f32.mrb[0].mxu0
          %v2046 = vand.u32 %v1406, 4294901760
          %2047 = vmatprep.mubr.f32.mxu0 %v2046
          %v2048 = vand.u32 %v1390, 4294901760
          %2049 = vmatmul.mubr.f32.gmra.mrb[0].mxu0 %v2048
          %v2050 = vpop.f32.mrb[0].mxu0
          %v2051 = vadd.f32 %v1626, %v2050
          %v2052 = vpop.f32.mrb[0].mxu0
          %v2053 = vand.u32 %v1407, 4294901760
          %2054 = vmatprep.mubr.f32.mxu0 %v2053
          %v2055 = vand.u32 %v1391, 4294901760
          %2056 = vmatmul.mubr.f32.gmra.mrb[0].mxu0 %v2055
          %v2057 = vpop.f32.mrb[0].mxu0
          %v2058 = vadd.f32 %v1641, %v2057
          %v2059 = vpop.f32.mrb[0].mxu0
          %v2060 = vand.u32 %v1408, 4294901760
          %2061 = vmatprep.mubr.f32.mxu0 %v2060
          %v2062 = vand.u32 %v1392, 4294901760
          %2063 = vmatmul.mubr.f32.gmra.mrb[0].mxu0 %v2062
          %v2064 = vpop.f32.mrb[0].mxu0
          %v2065 = vadd.f32 %v1656, %v2064
          %v2066 = vpop.f32.mrb[0].mxu0
          %v2067 = vand.u32 %v1409, 4294901760
          %2068 = vmatprep.mubr.f32.mxu0 %v2067
          %v2069 = vand.u32 %v1393, 4294901760
          %2070 = vmatmul.mubr.f32.gmra.mrb[0].mxu0 %v2069
          %v2071 = vpop.f32.mrb[0].mxu0
          %v2072 = vadd.f32 %v1671, %v2071
          %v2073 = vpop.f32.mrb[0].mxu0
          %v2074 = vand.u32 %v1410, 4294901760
          %2075 = vmatprep.mubr.f32.mxu0 %v2074
          %v2076 = vand.u32 %v1394, 4294901760
          %2077 = vmatmul.mubr.f32.gmra.mrb[0].mxu0 %v2076
          %v2078 = vpop.f32.mrb[0].mxu0
          %v2079 = vadd.f32 %v1686, %v2078
          %v2080 = vpop.f32.mrb[0].mxu0
          %v2081 = vand.u32 %v1411, 4294901760
          %2082 = vmatprep.mubr.f32.mxu0 %v2081
          %v2083 = vand.u32 %v1395, 4294901760
          %2084 = vmatmul.mubr.f32.gmra.mrb[0].mxu0 %v2083
          %v2085 = vpop.f32.mrb[0].mxu0
          %v2086 = vadd.f32 %v1701, %v2085
          %v2087 = vpop.f32.mrb[0].mxu0
          %v2088 = vand.u32 %v1412, 4294901760
          %2089 = vmatprep.mubr.f32.mxu0 %v2088
          %v2090 = vand.u32 %v1396, 4294901760
          %2091 = vmatmul.mubr.f32.gmra.mrb[0].mxu0 %v2090
          %v2092 = vpop.f32.mrb[0].mxu0
          %v2093 = vadd.f32 %v1716, %v2092
          %v2094 = vpop.f32.mrb[0].mxu0
          %v2095 = vand.u32 %v1413, 4294901760
          %2096 = vmatprep.mubr.f32.mxu0 %v2095
          %v2097 = vand.u32 %v1397, 4294901760
          %2098 = vmatmul.mubr.f32.gmra.mrb[0].mxu0 %v2097
          %v2099 = vpop.f32.mrb[0].mxu0
          %v2100 = vadd.f32 %v1731, %v2099
          %v2101 = vpop.f32.mrb[0].mxu0
          %v2102 = vand.u32 %v1414, 4294901760
          %2103 = vmatprep.mubr.f32.mxu0 %v2102
          %v2104 = vand.u32 %v1398, 4294901760
          %2105 = vmatmul.mubr.f32.gmra.mrb[0].mxu0 %v2104
          %v2106 = vpop.f32.mrb[0].mxu0
          %v2107 = vadd.f32 %v1746, %v2106
          %v2108 = vpop.f32.mrb[0].mxu0
          %v2109 = vand.u32 %v1415, 4294901760
          %2110 = vmatprep.mubr.f32.mxu0 %v2109
          %v2111 = vand.u32 %v1399, 4294901760
          %2112 = vmatmul.mubr.f32.gmra.mrb[0].mxu0 %v2111
          %v2113 = vpop.f32.mrb[0].mxu0
          %v2114 = vadd.f32 %v1761, %v2113
          %v2115 = vpop.f32.mrb[0].mxu0
          %v2116 = vand.u32 %v1416, 4294901760
          %2117 = vmatprep.mubr.f32.mxu0 %v2116
          %v2118 = vand.u32 %v1400, 4294901760
          %2119 = vmatmul.mubr.f32.gmra.mrb[0].mxu0 %v2118
          %v2120 = vpop.f32.mrb[0].mxu0
          %v2121 = vadd.f32 %v1776, %v2120
          %v2122 = vpop.f32.mrb[0].mxu0
          %v2123 = vand.u32 %v1417, 4294901760
          %2124 = vmatprep.mubr.f32.mxu0 %v2123
          %v2125 = vand.u32 %v1401, 4294901760
          %2126 = vmatmul.mubr.f32.gmra.mrb[0].mxu0 %v2125
          %v2127 = vpop.f32.mrb[0].mxu0
          %v2128 = vadd.f32 %v1791, %v2127
          %v2129 = vpop.f32.mrb[0].mxu0
          %2130 = vdwg.mxu0
          %2131 = vmatprep.subr.mxu0 0.0
          %v2132 = vand.u32 %v1418, 4294901760
          %v2133 = vsub.f32 %v1418, %v2132
          %2134 = vmatpush1.msra.mxu0 %v2133
          %2135 = vmatprep.subr.mxu0 0.0
          %v2136 = vand.u32 %v1419, 4294901760
          %v2137 = vsub.f32 %v1419, %v2136
          %2138 = vmatpush1.msra.mxu0 %v2137
          %2139 = vmatprep.subr.mxu0 0.0
          %v2140 = vand.u32 %v1420, 4294901760
          %v2141 = vsub.f32 %v1420, %v2140
          %2142 = vmatpush1.msra.mxu0 %v2141
          %2143 = vmatprep.subr.mxu0 0.0
          %v2144 = vand.u32 %v1421, 4294901760
          %v2145 = vsub.f32 %v1421, %v2144
          %2146 = vmatpush1.msra.mxu0 %v2145
          %2147 = vmatprep.subr.mxu0 0.0
          %v2148 = vand.u32 %v1422, 4294901760
          %v2149 = vsub.f32 %v1422, %v2148
          %2150 = vmatpush1.msra.mxu0 %v2149
          %2151 = vmatprep.subr.mxu0 0.0
          %v2152 = vand.u32 %v1423, 4294901760
          %v2153 = vsub.f32 %v1423, %v2152
          %2154 = vmatpush1.msra.mxu0 %v2153
          %2155 = vmatprep.subr.mxu0 0.0
          %v2156 = vand.u32 %v1424, 4294901760
          %v2157 = vsub.f32 %v1424, %v2156
          %2158 = vmatpush1.msra.mxu0 %v2157
          %2159 = vmatprep.subr.mxu0 0.0
          %v2160 = vand.u32 %v1425, 4294901760
          %v2161 = vsub.f32 %v1425, %v2160
          %2162 = vmatpush1.msra.mxu0 %v2161
          %2163 = vmatprep.subr.mxu0 0.0
          %v2164 = vand.u32 %v1426, 4294901760
          %v2165 = vsub.f32 %v1426, %v2164
          %2166 = vmatpush1.msra.mxu0 %v2165
          %2167 = vmatprep.subr.mxu0 0.0
          %v2168 = vand.u32 %v1427, 4294901760
          %v2169 = vsub.f32 %v1427, %v2168
          %2170 = vmatpush1.msra.mxu0 %v2169
          %2171 = vmatprep.subr.mxu0 0.0
          %v2172 = vand.u32 %v1428, 4294901760
          %v2173 = vsub.f32 %v1428, %v2172
          %2174 = vmatpush1.msra.mxu0 %v2173
          %2175 = vmatprep.subr.mxu0 0.0
          %v2176 = vand.u32 %v1429, 4294901760
          %v2177 = vsub.f32 %v1429, %v2176
          %2178 = vmatpush1.msra.mxu0 %v2177
          %2179 = vmatprep.subr.mxu0 0.0
          %v2180 = vand.u32 %v1430, 4294901760
          %v2181 = vsub.f32 %v1430, %v2180
          %2182 = vmatpush1.msra.mxu0 %v2181
          %2183 = vmatprep.subr.mxu0 0.0
          %v2184 = vand.u32 %v1431, 4294901760
          %v2185 = vsub.f32 %v1431, %v2184
          %2186 = vmatpush1.msra.mxu0 %v2185
          %2187 = vmatprep.subr.mxu0 0.0
          %v2188 = vand.u32 %v1432, 4294901760
          %v2189 = vsub.f32 %v1432, %v2188
          %2190 = vmatpush1.msra.mxu0 %v2189
          %2191 = vmatprep.subr.mxu0 0.0
          %v2192 = vand.u32 %v1433, 4294901760
          %v2193 = vsub.f32 %v1433, %v2192
          %2194 = vmatpush1.msra.mxu0 %v2193
          %2195 = vmatprep.subr.mxu0 0.0
          %v2196 = vand.u32 %v1434, 4294901760
          %v2197 = vsub.f32 %v1434, %v2196
          %2198 = vmatpush1.msra.mxu0 %v2197
          %2199 = vmatprep.subr.mxu0 0.0
          %v2200 = vand.u32 %v1435, 4294901760
          %v2201 = vsub.f32 %v1435, %v2200
          %2202 = vmatpush1.msra.mxu0 %v2201
          %2203 = vmatprep.subr.mxu0 0.0
          %v2204 = vand.u32 %v1436, 4294901760
          %v2205 = vsub.f32 %v1436, %v2204
          %2206 = vmatpush1.msra.mxu0 %v2205
          %2207 = vmatprep.subr.mxu0 0.0
          %v2208 = vand.u32 %v1437, 4294901760
          %v2209 = vsub.f32 %v1437, %v2208
          %2210 = vmatpush1.msra.mxu0 %v2209
          %2211 = vmatprep.subr.mxu0 0.0
          %v2212 = vand.u32 %v1438, 4294901760
          %v2213 = vsub.f32 %v1438, %v2212
          %2214 = vmatpush1.msra.mxu0 %v2213
          %2215 = vmatprep.subr.mxu0 0.0
          %v2216 = vand.u32 %v1439, 4294901760
          %v2217 = vsub.f32 %v1439, %v2216
          %2218 = vmatpush1.msra.mxu0 %v2217
          %2219 = vmatprep.subr.mxu0 0.0
          %v2220 = vand.u32 %v1440, 4294901760
          %v2221 = vsub.f32 %v1440, %v2220
          %2222 = vmatpush1.msra.mxu0 %v2221
          %2223 = vmatprep.subr.mxu0 0.0
          %v2224 = vand.u32 %v1441, 4294901760
          %v2225 = vsub.f32 %v1441, %v2224
          %2226 = vmatpush1.msra.mxu0 %v2225
          %2227 = vmatprep.subr.mxu0 0.0
          %v2228 = vand.u32 %v1442, 4294901760
          %v2229 = vsub.f32 %v1442, %v2228
          %2230 = vmatpush1.msra.mxu0 %v2229
          %2231 = vmatprep.subr.mxu0 0.0
          %v2232 = vand.u32 %v1443, 4294901760
          %v2233 = vsub.f32 %v1443, %v2232
          %2234 = vmatpush1.msra.mxu0 %v2233
          %2235 = vmatprep.subr.mxu0 0.0
          %v2236 = vand.u32 %v1444, 4294901760
          %v2237 = vsub.f32 %v1444, %v2236
          %2238 = vmatpush1.msra.mxu0 %v2237
          %2239 = vmatprep.subr.mxu0 0.0
          %v2240 = vand.u32 %v1445, 4294901760
          %v2241 = vsub.f32 %v1445, %v2240
          %2242 = vmatpush1.msra.mxu0 %v2241
          %2243 = vmatprep.subr.mxu0 0.0
          %v2244 = vand.u32 %v1446, 4294901760
          %v2245 = vsub.f32 %v1446, %v2244
          %2246 = vmatpush1.msra.mxu0 %v2245
          %2247 = vmatprep.subr.mxu0 0.0
          %v2248 = vand.u32 %v1447, 4294901760
          %v2249 = vsub.f32 %v1447, %v2248
          %2250 = vmatpush1.msra.mxu0 %v2249
          %2251 = vmatprep.subr.mxu0 0.0
          %v2252 = vand.u32 %v1448, 4294901760
          %v2253 = vsub.f32 %v1448, %v2252
          %2254 = vmatpush1.msra.mxu0 %v2253
          %2255 = vmatprep.subr.mxu0 0.0
          %v2256 = vand.u32 %v1449, 4294901760
          %v2257 = vsub.f32 %v1449, %v2256
          %2258 = vmatpush1.msra.mxu0 %v2257
          %v2259 = vand.u32 %v1402, 4294901760
          %v2260 = vsub.f32 %v1402, %v2259
          %2261 = vmatprep.mubr.f32.mxu0 %v2260
          %v2262 = vand.u32 %v1386, 4294901760
          %v2263 = vsub.f32 %v1386, %v2262
          %2264 = vmatmul.mubr.f32.gmra.mrb[0].mxu0 %v2263
          %v2265 = vpop.f32.mrb[0].mxu0
          %v2266 = vadd.f32 %v2023, %v2265
          %v2267 = vpop.f32.mrb[0].mxu0
          %v2268 = vand.u32 %v1403, 4294901760
          %v2269 = vsub.f32 %v1403, %v2268
          %2270 = vmatprep.mubr.f32.mxu0 %v2269
          %v2271 = vand.u32 %v1387, 4294901760
          %v2272 = vsub.f32 %v1387, %v2271
          %2273 = vmatmul.mubr.f32.gmra.mrb[0].mxu0 %v2272
          %v2274 = vpop.f32.mrb[0].mxu0
          %v2275 = vadd.f32 %v2030, %v2274
          %v2276 = vpop.f32.mrb[0].mxu0
          %v2277 = vand.u32 %v1404, 4294901760
          %v2278 = vsub.f32 %v1404, %v2277
          %2279 = vmatprep.mubr.f32.mxu0 %v2278
          %v2280 = vand.u32 %v1388, 4294901760
          %v2281 = vsub.f32 %v1388, %v2280
          %2282 = vmatmul.mubr.f32.gmra.mrb[0].mxu0 %v2281
          %v2283 = vpop.f32.mrb[0].mxu0
          %v2284 = vadd.f32 %v2037, %v2283
          %v2285 = vpop.f32.mrb[0].mxu0
          %v2286 = vand.u32 %v1405, 4294901760
          %v2287 = vsub.f32 %v1405, %v2286
          %2288 = vmatprep.mubr.f32.mxu0 %v2287
          %v2289 = vand.u32 %v1389, 4294901760
          %v2290 = vsub.f32 %v1389, %v2289
          %2291 = vmatmul.mubr.f32.gmra.mrb[0].mxu0 %v2290
          %v2292 = vpop.f32.mrb[0].mxu0
          %v2293 = vadd.f32 %v2044, %v2292
          %v2294 = vpop.f32.mrb[0].mxu0
          %v2295 = vand.u32 %v1406, 4294901760
          %v2296 = vsub.f32 %v1406, %v2295
          %2297 = vmatprep.mubr.f32.mxu0 %v2296
          %v2298 = vand.u32 %v1390, 4294901760
          %v2299 = vsub.f32 %v1390, %v2298
          %2300 = vmatmul.mubr.f32.gmra.mrb[0].mxu0 %v2299
          %v2301 = vpop.f32.mrb[0].mxu0
          %v2302 = vadd.f32 %v2051, %v2301
          %v2303 = vpop.f32.mrb[0].mxu0
          %v2304 = vand.u32 %v1407, 4294901760
          %v2305 = vsub.f32 %v1407, %v2304
          %2306 = vmatprep.mubr.f32.mxu0 %v2305
          %v2307 = vand.u32 %v1391, 4294901760
          %v2308 = vsub.f32 %v1391, %v2307
          %2309 = vmatmul.mubr.f32.gmra.mrb[0].mxu0 %v2308
          %v2310 = vpop.f32.mrb[0].mxu0
          %v2311 = vadd.f32 %v2058, %v2310
          %v2312 = vpop.f32.mrb[0].mxu0
          %v2313 = vand.u32 %v1408, 4294901760
          %v2314 = vsub.f32 %v1408, %v2313
          %2315 = vmatprep.mubr.f32.mxu0 %v2314
          %v2316 = vand.u32 %v1392, 4294901760
          %v2317 = vsub.f32 %v1392, %v2316
          %2318 = vmatmul.mubr.f32.gmra.mrb[0].mxu0 %v2317
          %v2319 = vpop.f32.mrb[0].mxu0
          %v2320 = vadd.f32 %v2065, %v2319
          %v2321 = vpop.f32.mrb[0].mxu0
          %v2322 = vand.u32 %v1409, 4294901760
          %v2323 = vsub.f32 %v1409, %v2322
          %2324 = vmatprep.mubr.f32.mxu0 %v2323
          %v2325 = vand.u32 %v1393, 4294901760
          %v2326 = vsub.f32 %v1393, %v2325
          %2327 = vmatmul.mubr.f32.gmra.mrb[0].mxu0 %v2326
          %v2328 = vpop.f32.mrb[0].mxu0
          %v2329 = vadd.f32 %v2072, %v2328
          %v2330 = vpop.f32.mrb[0].mxu0
          %v2331 = vand.u32 %v1410, 4294901760
          %v2332 = vsub.f32 %v1410, %v2331
          %2333 = vmatprep.mubr.f32.mxu0 %v2332
          %v2334 = vand.u32 %v1394, 4294901760
          %v2335 = vsub.f32 %v1394, %v2334
          %2336 = vmatmul.mubr.f32.gmra.mrb[0].mxu0 %v2335
          %v2337 = vpop.f32.mrb[0].mxu0
          %v2338 = vadd.f32 %v2079, %v2337
          %v2339 = vpop.f32.mrb[0].mxu0
          %v2340 = vand.u32 %v1411, 4294901760
          %v2341 = vsub.f32 %v1411, %v2340
          %2342 = vmatprep.mubr.f32.mxu0 %v2341
          %v2343 = vand.u32 %v1395, 4294901760
          %v2344 = vsub.f32 %v1395, %v2343
          %2345 = vmatmul.mubr.f32.gmra.mrb[0].mxu0 %v2344
          %v2346 = vpop.f32.mrb[0].mxu0
          %v2347 = vadd.f32 %v2086, %v2346
          %v2348 = vpop.f32.mrb[0].mxu0
          %v2349 = vand.u32 %v1412, 4294901760
          %v2350 = vsub.f32 %v1412, %v2349
          %2351 = vmatprep.mubr.f32.mxu0 %v2350
          %v2352 = vand.u32 %v1396, 4294901760
          %v2353 = vsub.f32 %v1396, %v2352
          %2354 = vmatmul.mubr.f32.gmra.mrb[0].mxu0 %v2353
          %v2355 = vpop.f32.mrb[0].mxu0
          %v2356 = vadd.f32 %v2093, %v2355
          %v2357 = vpop.f32.mrb[0].mxu0
          %v2358 = vand.u32 %v1413, 4294901760
          %v2359 = vsub.f32 %v1413, %v2358
          %2360 = vmatprep.mubr.f32.mxu0 %v2359
          %v2361 = vand.u32 %v1397, 4294901760
          %v2362 = vsub.f32 %v1397, %v2361
          %2363 = vmatmul.mubr.f32.gmra.mrb[0].mxu0 %v2362
          %v2364 = vpop.f32.mrb[0].mxu0
          %v2365 = vadd.f32 %v2100, %v2364
          %v2366 = vpop.f32.mrb[0].mxu0
          %v2367 = vand.u32 %v1414, 4294901760
          %v2368 = vsub.f32 %v1414, %v2367
          %2369 = vmatprep.mubr.f32.mxu0 %v2368
          %v2370 = vand.u32 %v1398, 4294901760
          %v2371 = vsub.f32 %v1398, %v2370
          %2372 = vmatmul.mubr.f32.gmra.mrb[0].mxu0 %v2371
          %v2373 = vpop.f32.mrb[0].mxu0
          %v2374 = vadd.f32 %v2107, %v2373
          %v2375 = vpop.f32.mrb[0].mxu0
          %v2376 = vand.u32 %v1415, 4294901760
          %v2377 = vsub.f32 %v1415, %v2376
          %2378 = vmatprep.mubr.f32.mxu0 %v2377
          %v2379 = vand.u32 %v1399, 4294901760
          %v2380 = vsub.f32 %v1399, %v2379
          %2381 = vmatmul.mubr.f32.gmra.mrb[0].mxu0 %v2380
          %v2382 = vpop.f32.mrb[0].mxu0
          %v2383 = vadd.f32 %v2114, %v2382
          %v2384 = vpop.f32.mrb[0].mxu0
          %v2385 = vand.u32 %v1416, 4294901760
          %v2386 = vsub.f32 %v1416, %v2385
          %2387 = vmatprep.mubr.f32.mxu0 %v2386
          %v2388 = vand.u32 %v1400, 4294901760
          %v2389 = vsub.f32 %v1400, %v2388
          %2390 = vmatmul.mubr.f32.gmra.mrb[0].mxu0 %v2389
          %v2391 = vpop.f32.mrb[0].mxu0
          %v2392 = vadd.f32 %v2121, %v2391
          %v2393 = vpop.f32.mrb[0].mxu0
          %v2394 = vand.u32 %v1417, 4294901760
          %v2395 = vsub.f32 %v1417, %v2394
          %2396 = vmatprep.mubr.f32.mxu0 %v2395
          %v2397 = vand.u32 %v1401, 4294901760
          %v2398 = vsub.f32 %v1401, %v2397
          %2399 = vmatmul.mubr.f32.gmra.mrb[0].mxu0 %v2398
          %v2400 = vpop.f32.mrb[0].mxu0
          %v2401 = vadd.f32 %v2128, %v2400
          %v2402 = vpop.f32.mrb[0].mxu0
          %2403 = vdwg.mxu0
          %2404 = vmatprep.subr.mxu0 0.0
          %v2405 = vand.u32 %v1418, 4294901760
          %2406 = vmatpush1.msra.mxu0 %v2405
          %2407 = vmatprep.subr.mxu0 0.0
          %v2408 = vand.u32 %v1419, 4294901760
          %2409 = vmatpush1.msra.mxu0 %v2408
          %2410 = vmatprep.subr.mxu0 0.0
          %v2411 = vand.u32 %v1420, 4294901760
          %2412 = vmatpush1.msra.mxu0 %v2411
          %2413 = vmatprep.subr.mxu0 0.0
          %v2414 = vand.u32 %v1421, 4294901760
          %2415 = vmatpush1.msra.mxu0 %v2414
          %2416 = vmatprep.subr.mxu0 0.0
          %v2417 = vand.u32 %v1422, 4294901760
          %2418 = vmatpush1.msra.mxu0 %v2417
          %2419 = vmatprep.subr.mxu0 0.0
          %v2420 = vand.u32 %v1423, 4294901760
          %2421 = vmatpush1.msra.mxu0 %v2420
          %2422 = vmatprep.subr.mxu0 0.0
          %v2423 = vand.u32 %v1424, 4294901760
          %2424 = vmatpush1.msra.mxu0 %v2423
          %2425 = vmatprep.subr.mxu0 0.0
          %v2426 = vand.u32 %v1425, 4294901760
          %2427 = vmatpush1.msra.mxu0 %v2426
          %2428 = vmatprep.subr.mxu0 0.0
          %v2429 = vand.u32 %v1426, 4294901760
          %2430 = vmatpush1.msra.mxu0 %v2429
          %2431 = vmatprep.subr.mxu0 0.0
          %v2432 = vand.u32 %v1427, 4294901760
          %2433 = vmatpush1.msra.mxu0 %v2432
          %2434 = vmatprep.subr.mxu0 0.0
          %v2435 = vand.u32 %v1428, 4294901760
          %2436 = vmatpush1.msra.mxu0 %v2435
          %2437 = vmatprep.subr.mxu0 0.0
          %v2438 = vand.u32 %v1429, 4294901760
          %2439 = vmatpush1.msra.mxu0 %v2438
          %2440 = vmatprep.subr.mxu0 0.0
          %v2441 = vand.u32 %v1430, 4294901760
          %2442 = vmatpush1.msra.mxu0 %v2441
          %2443 = vmatprep.subr.mxu0 0.0
          %v2444 = vand.u32 %v1431, 4294901760
          %2445 = vmatpush1.msra.mxu0 %v2444
          %2446 = vmatprep.subr.mxu0 0.0
          %v2447 = vand.u32 %v1432, 4294901760
          %2448 = vmatpush1.msra.mxu0 %v2447
          %2449 = vmatprep.subr.mxu0 0.0
          %v2450 = vand.u32 %v1433, 4294901760
          %2451 = vmatpush1.msra.mxu0 %v2450
          %2452 = vmatprep.subr.mxu0 0.0
          %v2453 = vand.u32 %v1434, 4294901760
          %2454 = vmatpush1.msra.mxu0 %v2453
          %2455 = vmatprep.subr.mxu0 0.0
          %v2456 = vand.u32 %v1435, 4294901760
          %2457 = vmatpush1.msra.mxu0 %v2456
          %2458 = vmatprep.subr.mxu0 0.0
          %v2459 = vand.u32 %v1436, 4294901760
          %2460 = vmatpush1.msra.mxu0 %v2459
          %2461 = vmatprep.subr.mxu0 0.0
          %v2462 = vand.u32 %v1437, 4294901760
          %2463 = vmatpush1.msra.mxu0 %v2462
          %2464 = vmatprep.subr.mxu0 0.0
          %v2465 = vand.u32 %v1438, 4294901760
          %2466 = vmatpush1.msra.mxu0 %v2465
          %2467 = vmatprep.subr.mxu0 0.0
          %v2468 = vand.u32 %v1439, 4294901760
          %2469 = vmatpush1.msra.mxu0 %v2468
          %2470 = vmatprep.subr.mxu0 0.0
          %v2471 = vand.u32 %v1440, 4294901760
          %2472 = vmatpush1.msra.mxu0 %v2471
          %2473 = vmatprep.subr.mxu0 0.0
          %v2474 = vand.u32 %v1441, 4294901760
          %2475 = vmatpush1.msra.mxu0 %v2474
          %2476 = vmatprep.subr.mxu0 0.0
          %v2477 = vand.u32 %v1442, 4294901760
          %2478 = vmatpush1.msra.mxu0 %v2477
          %2479 = vmatprep.subr.mxu0 0.0
          %v2480 = vand.u32 %v1443, 4294901760
          %2481 = vmatpush1.msra.mxu0 %v2480
          %2482 = vmatprep.subr.mxu0 0.0
          %v2483 = vand.u32 %v1444, 4294901760
          %2484 = vmatpush1.msra.mxu0 %v2483
          %2485 = vmatprep.subr.mxu0 0.0
          %v2486 = vand.u32 %v1445, 4294901760
          %2487 = vmatpush1.msra.mxu0 %v2486
          %2488 = vmatprep.subr.mxu0 0.0
          %v2489 = vand.u32 %v1446, 4294901760
          %2490 = vmatpush1.msra.mxu0 %v2489
          %2491 = vmatprep.subr.mxu0 0.0
          %v2492 = vand.u32 %v1447, 4294901760
          %2493 = vmatpush1.msra.mxu0 %v2492
          %2494 = vmatprep.subr.mxu0 0.0
          %v2495 = vand.u32 %v1448, 4294901760
          %2496 = vmatpush1.msra.mxu0 %v2495
          %2497 = vmatprep.subr.mxu0 0.0
          %v2498 = vand.u32 %v1449, 4294901760
          %2499 = vmatpush1.msra.mxu0 %v2498
          %v2500 = vand.u32 %v1402, 4294901760
          %v2501 = vsub.f32 %v1402, %v2500
          %v2502 = vand.u32 %v2501, 4294901760
          %2503 = vmatprep.mubr.f32.mxu0 %v2502
          %v2504 = vand.u32 %v1386, 4294901760
          %v2505 = vsub.f32 %v1386, %v2504
          %v2506 = vand.u32 %v2505, 4294901760
          %2507 = vmatmul.mubr.f32.gmra.mrb[0].mxu0 %v2506
          %v2508 = vpop.f32.mrb[0].mxu0
          %v2509 = vadd.f32 %v2266, %v2508
          %v2510 = vpop.f32.mrb[0].mxu0
          %v2511 = vand.u32 %v1403, 4294901760
          %v2512 = vsub.f32 %v1403, %v2511
          %v2513 = vand.u32 %v2512, 4294901760
          %2514 = vmatprep.mubr.f32.mxu0 %v2513
          %v2515 = vand.u32 %v1387, 4294901760
          %v2516 = vsub.f32 %v1387, %v2515
          %v2517 = vand.u32 %v2516, 4294901760
          %2518 = vmatmul.mubr.f32.gmra.mrb[0].mxu0 %v2517
          %v2519 = vpop.f32.mrb[0].mxu0
          %v2520 = vadd.f32 %v2275, %v2519
          %v2521 = vpop.f32.mrb[0].mxu0
          %v2522 = vand.u32 %v1404, 4294901760
          %v2523 = vsub.f32 %v1404, %v2522
          %v2524 = vand.u32 %v2523, 4294901760
          %2525 = vmatprep.mubr.f32.mxu0 %v2524
          %v2526 = vand.u32 %v1388, 4294901760
          %v2527 = vsub.f32 %v1388, %v2526
          %v2528 = vand.u32 %v2527, 4294901760
          %2529 = vmatmul.mubr.f32.gmra.mrb[0].mxu0 %v2528
          %v2530 = vpop.f32.mrb[0].mxu0
          %v2531 = vadd.f32 %v2284, %v2530
          %v2532 = vpop.f32.mrb[0].mxu0
          %v2533 = vand.u32 %v1405, 4294901760
          %v2534 = vsub.f32 %v1405, %v2533
          %v2535 = vand.u32 %v2534, 4294901760
          %2536 = vmatprep.mubr.f32.mxu0 %v2535
          %v2537 = vand.u32 %v1389, 4294901760
          %v2538 = vsub.f32 %v1389, %v2537
          %v2539 = vand.u32 %v2538, 4294901760
          %2540 = vmatmul.mubr.f32.gmra.mrb[0].mxu0 %v2539
          %v2541 = vpop.f32.mrb[0].mxu0
          %v2542 = vadd.f32 %v2293, %v2541
          %v2543 = vpop.f32.mrb[0].mxu0
          %v2544 = vand.u32 %v1406, 4294901760
          %v2545 = vsub.f32 %v1406, %v2544
          %v2546 = vand.u32 %v2545, 4294901760
          %2547 = vmatprep.mubr.f32.mxu0 %v2546
          %v2548 = vand.u32 %v1390, 4294901760
          %v2549 = vsub.f32 %v1390, %v2548
          %v2550 = vand.u32 %v2549, 4294901760
          %2551 = vmatmul.mubr.f32.gmra.mrb[0].mxu0 %v2550
          %v2552 = vpop.f32.mrb[0].mxu0
          %v2553 = vadd.f32 %v2302, %v2552
          %v2554 = vpop.f32.mrb[0].mxu0
          %v2555 = vand.u32 %v1407, 4294901760
          %v2556 = vsub.f32 %v1407, %v2555
          %v2557 = vand.u32 %v2556, 4294901760
          %2558 = vmatprep.mubr.f32.mxu0 %v2557
          %v2559 = vand.u32 %v1391, 4294901760
          %v2560 = vsub.f32 %v1391, %v2559
          %v2561 = vand.u32 %v2560, 4294901760
          %2562 = vmatmul.mubr.f32.gmra.mrb[0].mxu0 %v2561
          %v2563 = vpop.f32.mrb[0].mxu0
          %v2564 = vadd.f32 %v2311, %v2563
          %v2565 = vpop.f32.mrb[0].mxu0
          %v2566 = vand.u32 %v1408, 4294901760
          %v2567 = vsub.f32 %v1408, %v2566
          %v2568 = vand.u32 %v2567, 4294901760
          %2569 = vmatprep.mubr.f32.mxu0 %v2568
          %v2570 = vand.u32 %v1392, 4294901760
          %v2571 = vsub.f32 %v1392, %v2570
          %v2572 = vand.u32 %v2571, 4294901760
          %2573 = vmatmul.mubr.f32.gmra.mrb[0].mxu0 %v2572
          %v2574 = vpop.f32.mrb[0].mxu0
          %v2575 = vadd.f32 %v2320, %v2574
          %v2576 = vpop.f32.mrb[0].mxu0
          %v2577 = vand.u32 %v1409, 4294901760
          %v2578 = vsub.f32 %v1409, %v2577
          %v2579 = vand.u32 %v2578, 4294901760
          %2580 = vmatprep.mubr.f32.mxu0 %v2579
          %v2581 = vand.u32 %v1393, 4294901760
          %v2582 = vsub.f32 %v1393, %v2581
          %v2583 = vand.u32 %v2582, 4294901760
          %2584 = vmatmul.mubr.f32.gmra.mrb[0].mxu0 %v2583
          %v2585 = vpop.f32.mrb[0].mxu0
          %v2586 = vadd.f32 %v2329, %v2585
          %v2587 = vpop.f32.mrb[0].mxu0
          %v2588 = vand.u32 %v1410, 4294901760
          %v2589 = vsub.f32 %v1410, %v2588
          %v2590 = vand.u32 %v2589, 4294901760
          %2591 = vmatprep.mubr.f32.mxu0 %v2590
          %v2592 = vand.u32 %v1394, 4294901760
          %v2593 = vsub.f32 %v1394, %v2592
          %v2594 = vand.u32 %v2593, 4294901760
          %2595 = vmatmul.mubr.f32.gmra.mrb[0].mxu0 %v2594
          %v2596 = vpop.f32.mrb[0].mxu0
          %v2597 = vadd.f32 %v2338, %v2596
          %v2598 = vpop.f32.mrb[0].mxu0
          %v2599 = vand.u32 %v1411, 4294901760
          %v2600 = vsub.f32 %v1411, %v2599
          %v2601 = vand.u32 %v2600, 4294901760
          %2602 = vmatprep.mubr.f32.mxu0 %v2601
          %v2603 = vand.u32 %v1395, 4294901760
          %v2604 = vsub.f32 %v1395, %v2603
          %v2605 = vand.u32 %v2604, 4294901760
          %2606 = vmatmul.mubr.f32.gmra.mrb[0].mxu0 %v2605
          %v2607 = vpop.f32.mrb[0].mxu0
          %v2608 = vadd.f32 %v2347, %v2607
          %v2609 = vpop.f32.mrb[0].mxu0
          %v2610 = vand.u32 %v1412, 4294901760
          %v2611 = vsub.f32 %v1412, %v2610
          %v2612 = vand.u32 %v2611, 4294901760
          %2613 = vmatprep.mubr.f32.mxu0 %v2612
          %v2614 = vand.u32 %v1396, 4294901760
          %v2615 = vsub.f32 %v1396, %v2614
          %v2616 = vand.u32 %v2615, 4294901760
          %2617 = vmatmul.mubr.f32.gmra.mrb[0].mxu0 %v2616
          %v2618 = vpop.f32.mrb[0].mxu0
          %v2619 = vadd.f32 %v2356, %v2618
          %v2620 = vpop.f32.mrb[0].mxu0
          %v2621 = vand.u32 %v1413, 4294901760
          %v2622 = vsub.f32 %v1413, %v2621
          %v2623 = vand.u32 %v2622, 4294901760
          %2624 = vmatprep.mubr.f32.mxu0 %v2623
          %v2625 = vand.u32 %v1397, 4294901760
          %v2626 = vsub.f32 %v1397, %v2625
          %v2627 = vand.u32 %v2626, 4294901760
          %2628 = vmatmul.mubr.f32.gmra.mrb[0].mxu0 %v2627
          %v2629 = vpop.f32.mrb[0].mxu0
          %v2630 = vadd.f32 %v2365, %v2629
          %v2631 = vpop.f32.mrb[0].mxu0
          %v2632 = vand.u32 %v1414, 4294901760
          %v2633 = vsub.f32 %v1414, %v2632
          %v2634 = vand.u32 %v2633, 4294901760
          %2635 = vmatprep.mubr.f32.mxu0 %v2634
          %v2636 = vand.u32 %v1398, 4294901760
          %v2637 = vsub.f32 %v1398, %v2636
          %v2638 = vand.u32 %v2637, 4294901760
          %2639 = vmatmul.mubr.f32.gmra.mrb[0].mxu0 %v2638
          %v2640 = vpop.f32.mrb[0].mxu0
          %v2641 = vadd.f32 %v2374, %v2640
          %v2642 = vpop.f32.mrb[0].mxu0
          %v2643 = vand.u32 %v1415, 4294901760
          %v2644 = vsub.f32 %v1415, %v2643
          %v2645 = vand.u32 %v2644, 4294901760
          %2646 = vmatprep.mubr.f32.mxu0 %v2645
          %v2647 = vand.u32 %v1399, 4294901760
          %v2648 = vsub.f32 %v1399, %v2647
          %v2649 = vand.u32 %v2648, 4294901760
          %2650 = vmatmul.mubr.f32.gmra.mrb[0].mxu0 %v2649
          %v2651 = vpop.f32.mrb[0].mxu0
          %v2652 = vadd.f32 %v2383, %v2651
          %v2653 = vpop.f32.mrb[0].mxu0
          %v2654 = vand.u32 %v1416, 4294901760
          %v2655 = vsub.f32 %v1416, %v2654
          %v2656 = vand.u32 %v2655, 4294901760
          %2657 = vmatprep.mubr.f32.mxu0 %v2656
          %v2658 = vand.u32 %v1400, 4294901760
          %v2659 = vsub.f32 %v1400, %v2658
          %v2660 = vand.u32 %v2659, 4294901760
          %2661 = vmatmul.mubr.f32.gmra.mrb[0].mxu0 %v2660
          %v2662 = vpop.f32.mrb[0].mxu0
          %v2663 = vadd.f32 %v2392, %v2662
          %v2664 = vpop.f32.mrb[0].mxu0
          %v2665 = vand.u32 %v1417, 4294901760
          %v2666 = vsub.f32 %v1417, %v2665
          %v2667 = vand.u32 %v2666, 4294901760
          %2668 = vmatprep.mubr.f32.mxu0 %v2667
          %v2669 = vand.u32 %v1401, 4294901760
          %v2670 = vsub.f32 %v1401, %v2669
          %v2671 = vand.u32 %v2670, 4294901760
          %2672 = vmatmul.mubr.f32.gmra.mrb[0].mxu0 %v2671
          %v2673 = vpop.f32.mrb[0].mxu0
          %v2674 = vadd.f32 %v2401, %v2673
          %v2675 = vpop.f32.mrb[0].mxu0
          %2676 = vdwg.mxu0
          %2677 = vmatprep.subr.mxu0 0.0
          %v2678 = vand.u32 %v1418, 4294901760
          %v2679 = vsub.f32 %v1418, %v2678
          %v2680 = vand.u32 %v2679, 4294901760
          %2681 = vmatpush1.msra.mxu0 %v2680
          %2682 = vmatprep.subr.mxu0 0.0
          %v2683 = vand.u32 %v1419, 4294901760
          %v2684 = vsub.f32 %v1419, %v2683
          %v2685 = vand.u32 %v2684, 4294901760
          %2686 = vmatpush1.msra.mxu0 %v2685
          %2687 = vmatprep.subr.mxu0 0.0
          %v2688 = vand.u32 %v1420, 4294901760
          %v2689 = vsub.f32 %v1420, %v2688
          %v2690 = vand.u32 %v2689, 4294901760
          %2691 = vmatpush1.msra.mxu0 %v2690
          %2692 = vmatprep.subr.mxu0 0.0
          %v2693 = vand.u32 %v1421, 4294901760
          %v2694 = vsub.f32 %v1421, %v2693
          %v2695 = vand.u32 %v2694, 4294901760
          %2696 = vmatpush1.msra.mxu0 %v2695
          %2697 = vmatprep.subr.mxu0 0.0
          %v2698 = vand.u32 %v1422, 4294901760
          %v2699 = vsub.f32 %v1422, %v2698
          %v2700 = vand.u32 %v2699, 4294901760
          %2701 = vmatpush1.msra.mxu0 %v2700
          %2702 = vmatprep.subr.mxu0 0.0
          %v2703 = vand.u32 %v1423, 4294901760
          %v2704 = vsub.f32 %v1423, %v2703
          %v2705 = vand.u32 %v2704, 4294901760
          %2706 = vmatpush1.msra.mxu0 %v2705
          %2707 = vmatprep.subr.mxu0 0.0
          %v2708 = vand.u32 %v1424, 4294901760
          %v2709 = vsub.f32 %v1424, %v2708
          %v2710 = vand.u32 %v2709, 4294901760
          %2711 = vmatpush1.msra.mxu0 %v2710
          %2712 = vmatprep.subr.mxu0 0.0
          %v2713 = vand.u32 %v1425, 4294901760
          %v2714 = vsub.f32 %v1425, %v2713
          %v2715 = vand.u32 %v2714, 4294901760
          %2716 = vmatpush1.msra.mxu0 %v2715
          %2717 = vmatprep.subr.mxu0 0.0
          %v2718 = vand.u32 %v1426, 4294901760
          %v2719 = vsub.f32 %v1426, %v2718
          %v2720 = vand.u32 %v2719, 4294901760
          %2721 = vmatpush1.msra.mxu0 %v2720
          %2722 = vmatprep.subr.mxu0 0.0
          %v2723 = vand.u32 %v1427, 4294901760
          %v2724 = vsub.f32 %v1427, %v2723
          %v2725 = vand.u32 %v2724, 4294901760
          %2726 = vmatpush1.msra.mxu0 %v2725
          %2727 = vmatprep.subr.mxu0 0.0
          %v2728 = vand.u32 %v1428, 4294901760
          %v2729 = vsub.f32 %v1428, %v2728
          %v2730 = vand.u32 %v2729, 4294901760
          %2731 = vmatpush1.msra.mxu0 %v2730
          %2732 = vmatprep.subr.mxu0 0.0
          %v2733 = vand.u32 %v1429, 4294901760
          %v2734 = vsub.f32 %v1429, %v2733
          %v2735 = vand.u32 %v2734, 4294901760
          %2736 = vmatpush1.msra.mxu0 %v2735
          %2737 = vmatprep.subr.mxu0 0.0
          %v2738 = vand.u32 %v1430, 4294901760
          %v2739 = vsub.f32 %v1430, %v2738
          %v2740 = vand.u32 %v2739, 4294901760
          %2741 = vmatpush1.msra.mxu0 %v2740
          %2742 = vmatprep.subr.mxu0 0.0
          %v2743 = vand.u32 %v1431, 4294901760
          %v2744 = vsub.f32 %v1431, %v2743
          %v2745 = vand.u32 %v2744, 4294901760
          %2746 = vmatpush1.msra.mxu0 %v2745
          %2747 = vmatprep.subr.mxu0 0.0
          %v2748 = vand.u32 %v1432, 4294901760
          %v2749 = vsub.f32 %v1432, %v2748
          %v2750 = vand.u32 %v2749, 4294901760
          %2751 = vmatpush1.msra.mxu0 %v2750
          %2752 = vmatprep.subr.mxu0 0.0
          %v2753 = vand.u32 %v1433, 4294901760
          %v2754 = vsub.f32 %v1433, %v2753
          %v2755 = vand.u32 %v2754, 4294901760
          %2756 = vmatpush1.msra.mxu0 %v2755
          %2757 = vmatprep.subr.mxu0 0.0
          %v2758 = vand.u32 %v1434, 4294901760
          %v2759 = vsub.f32 %v1434, %v2758
          %v2760 = vand.u32 %v2759, 4294901760
          %2761 = vmatpush1.msra.mxu0 %v2760
          %2762 = vmatprep.subr.mxu0 0.0
          %v2763 = vand.u32 %v1435, 4294901760
          %v2764 = vsub.f32 %v1435, %v2763
          %v2765 = vand.u32 %v2764, 4294901760
          %2766 = vmatpush1.msra.mxu0 %v2765
          %2767 = vmatprep.subr.mxu0 0.0
          %v2768 = vand.u32 %v1436, 4294901760
          %v2769 = vsub.f32 %v1436, %v2768
          %v2770 = vand.u32 %v2769, 4294901760
          %2771 = vmatpush1.msra.mxu0 %v2770
          %2772 = vmatprep.subr.mxu0 0.0
          %v2773 = vand.u32 %v1437, 4294901760
          %v2774 = vsub.f32 %v1437, %v2773
          %v2775 = vand.u32 %v2774, 4294901760
          %2776 = vmatpush1.msra.mxu0 %v2775
          %2777 = vmatprep.subr.mxu0 0.0
          %v2778 = vand.u32 %v1438, 4294901760
          %v2779 = vsub.f32 %v1438, %v2778
          %v2780 = vand.u32 %v2779, 4294901760
          %2781 = vmatpush1.msra.mxu0 %v2780
          %2782 = vmatprep.subr.mxu0 0.0
          %v2783 = vand.u32 %v1439, 4294901760
          %v2784 = vsub.f32 %v1439, %v2783
          %v2785 = vand.u32 %v2784, 4294901760
          %2786 = vmatpush1.msra.mxu0 %v2785
          %2787 = vmatprep.subr.mxu0 0.0
          %v2788 = vand.u32 %v1440, 4294901760
          %v2789 = vsub.f32 %v1440, %v2788
          %v2790 = vand.u32 %v2789, 4294901760
          %2791 = vmatpush1.msra.mxu0 %v2790
          %2792 = vmatprep.subr.mxu0 0.0
          %v2793 = vand.u32 %v1441, 4294901760
          %v2794 = vsub.f32 %v1441, %v2793
          %v2795 = vand.u32 %v2794, 4294901760
          %2796 = vmatpush1.msra.mxu0 %v2795
          %2797 = vmatprep.subr.mxu0 0.0
          %v2798 = vand.u32 %v1442, 4294901760
          %v2799 = vsub.f32 %v1442, %v2798
          %v2800 = vand.u32 %v2799, 4294901760
          %2801 = vmatpush1.msra.mxu0 %v2800
          %2802 = vmatprep.subr.mxu0 0.0
          %v2803 = vand.u32 %v1443, 4294901760
          %v2804 = vsub.f32 %v1443, %v2803
          %v2805 = vand.u32 %v2804, 4294901760
          %2806 = vmatpush1.msra.mxu0 %v2805
          %2807 = vmatprep.subr.mxu0 0.0
          %v2808 = vand.u32 %v1444, 4294901760
          %v2809 = vsub.f32 %v1444, %v2808
          %v2810 = vand.u32 %v2809, 4294901760
          %2811 = vmatpush1.msra.mxu0 %v2810
          %2812 = vmatprep.subr.mxu0 0.0
          %v2813 = vand.u32 %v1445, 4294901760
          %v2814 = vsub.f32 %v1445, %v2813
          %v2815 = vand.u32 %v2814, 4294901760
          %2816 = vmatpush1.msra.mxu0 %v2815
          %2817 = vmatprep.subr.mxu0 0.0
          %v2818 = vand.u32 %v1446, 4294901760
          %v2819 = vsub.f32 %v1446, %v2818
          %v2820 = vand.u32 %v2819, 4294901760
          %2821 = vmatpush1.msra.mxu0 %v2820
          %2822 = vmatprep.subr.mxu0 0.0
          %v2823 = vand.u32 %v1447, 4294901760
          %v2824 = vsub.f32 %v1447, %v2823
          %v2825 = vand.u32 %v2824, 4294901760
          %2826 = vmatpush1.msra.mxu0 %v2825
          %2827 = vmatprep.subr.mxu0 0.0
          %v2828 = vand.u32 %v1448, 4294901760
          %v2829 = vsub.f32 %v1448, %v2828
          %v2830 = vand.u32 %v2829, 4294901760
          %2831 = vmatpush1.msra.mxu0 %v2830
          %2832 = vmatprep.subr.mxu0 0.0
          %v2833 = vand.u32 %v1449, 4294901760
          %v2834 = vsub.f32 %v1449, %v2833
          %v2835 = vand.u32 %v2834, 4294901760
          %2836 = vmatpush1.msra.mxu0 %v2835
          %v2837 = vand.u32 %v1402, 4294901760
          %2838 = vmatprep.mubr.f32.mxu0 %v2837
          %v2839 = vand.u32 %v1386, 4294901760
          %2840 = vmatmul.mubr.f32.gmra.mrb[0].mxu0 %v2839
          %v2841 = vpop.f32.mrb[0].mxu0
          %v2842 = vadd.f32 %v2509, %v2841
          %v2843 = vpop.f32.mrb[0].mxu0
          %v2844 = vand.u32 %v1403, 4294901760
          %2845 = vmatprep.mubr.f32.mxu0 %v2844
          %v2846 = vand.u32 %v1387, 4294901760
          %2847 = vmatmul.mubr.f32.gmra.mrb[0].mxu0 %v2846
          %v2848 = vpop.f32.mrb[0].mxu0
          %v2849 = vadd.f32 %v2520, %v2848
          %v2850 = vpop.f32.mrb[0].mxu0
          %v2851 = vand.u32 %v1404, 4294901760
          %2852 = vmatprep.mubr.f32.mxu0 %v2851
          %v2853 = vand.u32 %v1388, 4294901760
          %2854 = vmatmul.mubr.f32.gmra.mrb[0].mxu0 %v2853
          %v2855 = vpop.f32.mrb[0].mxu0
          %v2856 = vadd.f32 %v2531, %v2855
          %v2857 = vpop.f32.mrb[0].mxu0
          %v2858 = vand.u32 %v1405, 4294901760
          %2859 = vmatprep.mubr.f32.mxu0 %v2858
          %v2860 = vand.u32 %v1389, 4294901760
          %2861 = vmatmul.mubr.f32.gmra.mrb[0].mxu0 %v2860
          %v2862 = vpop.f32.mrb[0].mxu0
          %v2863 = vadd.f32 %v2542, %v2862
          %v2864 = vpop.f32.mrb[0].mxu0
          %v2865 = vand.u32 %v1406, 4294901760
          %2866 = vmatprep.mubr.f32.mxu0 %v2865
          %v2867 = vand.u32 %v1390, 4294901760
          %2868 = vmatmul.mubr.f32.gmra.mrb[0].mxu0 %v2867
          %v2869 = vpop.f32.mrb[0].mxu0
          %v2870 = vadd.f32 %v2553, %v2869
          %v2871 = vpop.f32.mrb[0].mxu0
          %v2872 = vand.u32 %v1407, 4294901760
          %2873 = vmatprep.mubr.f32.mxu0 %v2872
          %v2874 = vand.u32 %v1391, 4294901760
          %2875 = vmatmul.mubr.f32.gmra.mrb[0].mxu0 %v2874
          %v2876 = vpop.f32.mrb[0].mxu0
          %v2877 = vadd.f32 %v2564, %v2876
          %v2878 = vpop.f32.mrb[0].mxu0
          %v2879 = vand.u32 %v1408, 4294901760
          %2880 = vmatprep.mubr.f32.mxu0 %v2879
          %v2881 = vand.u32 %v1392, 4294901760
          %2882 = vmatmul.mubr.f32.gmra.mrb[0].mxu0 %v2881
          %v2883 = vpop.f32.mrb[0].mxu0
          %v2884 = vadd.f32 %v2575, %v2883
          %v2885 = vpop.f32.mrb[0].mxu0
          %v2886 = vand.u32 %v1409, 4294901760
          %2887 = vmatprep.mubr.f32.mxu0 %v2886
          %v2888 = vand.u32 %v1393, 4294901760
          %2889 = vmatmul.mubr.f32.gmra.mrb[0].mxu0 %v2888
          %v2890 = vpop.f32.mrb[0].mxu0
          %v2891 = vadd.f32 %v2586, %v2890
          %v2892 = vpop.f32.mrb[0].mxu0
          %v2893 = vand.u32 %v1410, 4294901760
          %2894 = vmatprep.mubr.f32.mxu0 %v2893
          %v2895 = vand.u32 %v1394, 4294901760
          %2896 = vmatmul.mubr.f32.gmra.mrb[0].mxu0 %v2895
          %v2897 = vpop.f32.mrb[0].mxu0
          %v2898 = vadd.f32 %v2597, %v2897
          %v2899 = vpop.f32.mrb[0].mxu0
          %v2900 = vand.u32 %v1411, 4294901760
          %2901 = vmatprep.mubr.f32.mxu0 %v2900
          %v2902 = vand.u32 %v1395, 4294901760
          %2903 = vmatmul.mubr.f32.gmra.mrb[0].mxu0 %v2902
          %v2904 = vpop.f32.mrb[0].mxu0
          %v2905 = vadd.f32 %v2608, %v2904
          %v2906 = vpop.f32.mrb[0].mxu0
          %v2907 = vand.u32 %v1412, 4294901760
          %2908 = vmatprep.mubr.f32.mxu0 %v2907
          %v2909 = vand.u32 %v1396, 4294901760
          %2910 = vmatmul.mubr.f32.gmra.mrb[0].mxu0 %v2909
          %v2911 = vpop.f32.mrb[0].mxu0
          %v2912 = vadd.f32 %v2619, %v2911
          %v2913 = vpop.f32.mrb[0].mxu0
          %v2914 = vand.u32 %v1413, 4294901760
          %2915 = vmatprep.mubr.f32.mxu0 %v2914
          %v2916 = vand.u32 %v1397, 4294901760
          %2917 = vmatmul.mubr.f32.gmra.mrb[0].mxu0 %v2916
          %v2918 = vpop.f32.mrb[0].mxu0
          %v2919 = vadd.f32 %v2630, %v2918
          %v2920 = vpop.f32.mrb[0].mxu0
          %v2921 = vand.u32 %v1414, 4294901760
          %2922 = vmatprep.mubr.f32.mxu0 %v2921
          %v2923 = vand.u32 %v1398, 4294901760
          %2924 = vmatmul.mubr.f32.gmra.mrb[0].mxu0 %v2923
          %v2925 = vpop.f32.mrb[0].mxu0
          %v2926 = vadd.f32 %v2641, %v2925
          %v2927 = vpop.f32.mrb[0].mxu0
          %v2928 = vand.u32 %v1415, 4294901760
          %2929 = vmatprep.mubr.f32.mxu0 %v2928
          %v2930 = vand.u32 %v1399, 4294901760
          %2931 = vmatmul.mubr.f32.gmra.mrb[0].mxu0 %v2930
          %v2932 = vpop.f32.mrb[0].mxu0
          %v2933 = vadd.f32 %v2652, %v2932
          %v2934 = vpop.f32.mrb[0].mxu0
          %v2935 = vand.u32 %v1416, 4294901760
          %2936 = vmatprep.mubr.f32.mxu0 %v2935
          %v2937 = vand.u32 %v1400, 4294901760
          %2938 = vmatmul.mubr.f32.gmra.mrb[0].mxu0 %v2937
          %v2939 = vpop.f32.mrb[0].mxu0
          %v2940 = vadd.f32 %v2663, %v2939
          %v2941 = vpop.f32.mrb[0].mxu0
          %v2942 = vand.u32 %v1417, 4294901760
          %2943 = vmatprep.mubr.f32.mxu0 %v2942
          %v2944 = vand.u32 %v1401, 4294901760
          %2945 = vmatmul.mubr.f32.gmra.mrb[0].mxu0 %v2944
          %v2946 = vpop.f32.mrb[0].mxu0
          %v2947 = vadd.f32 %v2674, %v2946
          %v2948 = vpop.f32.mrb[0].mxu0
          %2949 = vdwg.mxu0
          %2950 = vmatprep.subr.mxu0 0.0
          %v2951 = vand.u32 %v1418, 4294901760
          %2952 = vmatpush1.msra.mxu0 %v2951
          %2953 = vmatprep.subr.mxu0 0.0
          %v2954 = vand.u32 %v1419, 4294901760
          %2955 = vmatpush1.msra.mxu0 %v2954
          %2956 = vmatprep.subr.mxu0 0.0
          %v2957 = vand.u32 %v1420, 4294901760
          %2958 = vmatpush1.msra.mxu0 %v2957
          %2959 = vmatprep.subr.mxu0 0.0
          %v2960 = vand.u32 %v1421, 4294901760
          %2961 = vmatpush1.msra.mxu0 %v2960
          %2962 = vmatprep.subr.mxu0 0.0
          %v2963 = vand.u32 %v1422, 4294901760
          %2964 = vmatpush1.msra.mxu0 %v2963
          %2965 = vmatprep.subr.mxu0 0.0
          %v2966 = vand.u32 %v1423, 4294901760
          %2967 = vmatpush1.msra.mxu0 %v2966
          %2968 = vmatprep.subr.mxu0 0.0
          %v2969 = vand.u32 %v1424, 4294901760
          %2970 = vmatpush1.msra.mxu0 %v2969
          %2971 = vmatprep.subr.mxu0 0.0
          %v2972 = vand.u32 %v1425, 4294901760
          %2973 = vmatpush1.msra.mxu0 %v2972
          %2974 = vmatprep.subr.mxu0 0.0
          %v2975 = vand.u32 %v1426, 4294901760
          %2976 = vmatpush1.msra.mxu0 %v2975
          %2977 = vmatprep.subr.mxu0 0.0
          %v2978 = vand.u32 %v1427, 4294901760
          %2979 = vmatpush1.msra.mxu0 %v2978
          %2980 = vmatprep.subr.mxu0 0.0
          %v2981 = vand.u32 %v1428, 4294901760
          %2982 = vmatpush1.msra.mxu0 %v2981
          %2983 = vmatprep.subr.mxu0 0.0
          %v2984 = vand.u32 %v1429, 4294901760
          %2985 = vmatpush1.msra.mxu0 %v2984
          %2986 = vmatprep.subr.mxu0 0.0
          %v2987 = vand.u32 %v1430, 4294901760
          %2988 = vmatpush1.msra.mxu0 %v2987
          %2989 = vmatprep.subr.mxu0 0.0
          %v2990 = vand.u32 %v1431, 4294901760
          %2991 = vmatpush1.msra.mxu0 %v2990
          %2992 = vmatprep.subr.mxu0 0.0
          %v2993 = vand.u32 %v1432, 4294901760
          %2994 = vmatpush1.msra.mxu0 %v2993
          %2995 = vmatprep.subr.mxu0 0.0
          %v2996 = vand.u32 %v1433, 4294901760
          %2997 = vmatpush1.msra.mxu0 %v2996
          %2998 = vmatprep.subr.mxu0 0.0
          %v2999 = vand.u32 %v1434, 4294901760
          %3000 = vmatpush1.msra.mxu0 %v2999
          %3001 = vmatprep.subr.mxu0 0.0
          %v3002 = vand.u32 %v1435, 4294901760
          %3003 = vmatpush1.msra.mxu0 %v3002
          %3004 = vmatprep.subr.mxu0 0.0
          %v3005 = vand.u32 %v1436, 4294901760
          %3006 = vmatpush1.msra.mxu0 %v3005
          %3007 = vmatprep.subr.mxu0 0.0
          %v3008 = vand.u32 %v1437, 4294901760
          %3009 = vmatpush1.msra.mxu0 %v3008
          %3010 = vmatprep.subr.mxu0 0.0
          %v3011 = vand.u32 %v1438, 4294901760
          %3012 = vmatpush1.msra.mxu0 %v3011
          %3013 = vmatprep.subr.mxu0 0.0
          %v3014 = vand.u32 %v1439, 4294901760
          %3015 = vmatpush1.msra.mxu0 %v3014
          %3016 = vmatprep.subr.mxu0 0.0
          %v3017 = vand.u32 %v1440, 4294901760
          %3018 = vmatpush1.msra.mxu0 %v3017
          %3019 = vmatprep.subr.mxu0 0.0
          %v3020 = vand.u32 %v1441, 4294901760
          %3021 = vmatpush1.msra.mxu0 %v3020
          %3022 = vmatprep.subr.mxu0 0.0
          %v3023 = vand.u32 %v1442, 4294901760
          %3024 = vmatpush1.msra.mxu0 %v3023
          %3025 = vmatprep.subr.mxu0 0.0
          %v3026 = vand.u32 %v1443, 4294901760
          %3027 = vmatpush1.msra.mxu0 %v3026
          %3028 = vmatprep.subr.mxu0 0.0
          %v3029 = vand.u32 %v1444, 4294901760
          %3030 = vmatpush1.msra.mxu0 %v3029
          %3031 = vmatprep.subr.mxu0 0.0
          %v3032 = vand.u32 %v1445, 4294901760
          %3033 = vmatpush1.msra.mxu0 %v3032
          %3034 = vmatprep.subr.mxu0 0.0
          %v3035 = vand.u32 %v1446, 4294901760
          %3036 = vmatpush1.msra.mxu0 %v3035
          %3037 = vmatprep.subr.mxu0 0.0
          %v3038 = vand.u32 %v1447, 4294901760
          %3039 = vmatpush1.msra.mxu0 %v3038
          %3040 = vmatprep.subr.mxu0 0.0
          %v3041 = vand.u32 %v1448, 4294901760
          %3042 = vmatpush1.msra.mxu0 %v3041
          %3043 = vmatprep.subr.mxu0 0.0
          %v3044 = vand.u32 %v1449, 4294901760
          %3045 = vmatpush1.msra.mxu0 %v3044
          %v3046 = vand.u32 %v1402, 4294901760
          %3047 = vmatprep.mubr.f32.mxu0 %v3046
          %v3048 = vand.u32 %v1386, 4294901760
          %3049 = vmatmul.mubr.f32.gmra.mrb[0].mxu0 %v3048
          %v3050 = vpop.f32.mrb[0].mxu0
          %v3051 = vadd.f32 %v2842, %v3050
          %v3052 = vpop.f32.mrb[0].mxu0
          %v3053 = vand.u32 %v1403, 4294901760
          %3054 = vmatprep.mubr.f32.mxu0 %v3053
          %v3055 = vand.u32 %v1387, 4294901760
          %3056 = vmatmul.mubr.f32.gmra.mrb[0].mxu0 %v3055
          %v3057 = vpop.f32.mrb[0].mxu0
          %v3058 = vadd.f32 %v2849, %v3057
          %v3059 = vpop.f32.mrb[0].mxu0
          %v3060 = vand.u32 %v1404, 4294901760
          %3061 = vmatprep.mubr.f32.mxu0 %v3060
          %v3062 = vand.u32 %v1388, 4294901760
          %3063 = vmatmul.mubr.f32.gmra.mrb[0].mxu0 %v3062
          %v3064 = vpop.f32.mrb[0].mxu0
          %v3065 = vadd.f32 %v2856, %v3064
          %v3066 = vpop.f32.mrb[0].mxu0
          %v3067 = vand.u32 %v1405, 4294901760
          %3068 = vmatprep.mubr.f32.mxu0 %v3067
          %v3069 = vand.u32 %v1389, 4294901760
          %3070 = vmatmul.mubr.f32.gmra.mrb[0].mxu0 %v3069
          %v3071 = vpop.f32.mrb[0].mxu0
          %v3072 = vadd.f32 %v2863, %v3071
          %v3073 = vpop.f32.mrb[0].mxu0
          %v3074 = vand.u32 %v1406, 4294901760
          %3075 = vmatprep.mubr.f32.mxu0 %v3074
          %v3076 = vand.u32 %v1390, 4294901760
          %3077 = vmatmul.mubr.f32.gmra.mrb[0].mxu0 %v3076
          %v3078 = vpop.f32.mrb[0].mxu0
          %v3079 = vadd.f32 %v2870, %v3078
          %v3080 = vpop.f32.mrb[0].mxu0
          %v3081 = vand.u32 %v1407, 4294901760
          %3082 = vmatprep.mubr.f32.mxu0 %v3081
          %v3083 = vand.u32 %v1391, 4294901760
          %3084 = vmatmul.mubr.f32.gmra.mrb[0].mxu0 %v3083
          %v3085 = vpop.f32.mrb[0].mxu0
          %v3086 = vadd.f32 %v2877, %v3085
          %v3087 = vpop.f32.mrb[0].mxu0
          %v3088 = vand.u32 %v1408, 4294901760
          %3089 = vmatprep.mubr.f32.mxu0 %v3088
          %v3090 = vand.u32 %v1392, 4294901760
          %3091 = vmatmul.mubr.f32.gmra.mrb[0].mxu0 %v3090
          %v3092 = vpop.f32.mrb[0].mxu0
          %v3093 = vadd.f32 %v2884, %v3092
          %v3094 = vpop.f32.mrb[0].mxu0
          %v3095 = vand.u32 %v1409, 4294901760
          %3096 = vmatprep.mubr.f32.mxu0 %v3095
          %v3097 = vand.u32 %v1393, 4294901760
          %3098 = vmatmul.mubr.f32.gmra.mrb[0].mxu0 %v3097
          %v3099 = vpop.f32.mrb[0].mxu0
          %v3100 = vadd.f32 %v2891, %v3099
          %v3101 = vpop.f32.mrb[0].mxu0
          %v3102 = vand.u32 %v1410, 4294901760
          %3103 = vmatprep.mubr.f32.mxu0 %v3102
          %v3104 = vand.u32 %v1394, 4294901760
          %3105 = vmatmul.mubr.f32.gmra.mrb[0].mxu0 %v3104
          %v3106 = vpop.f32.mrb[0].mxu0
          %v3107 = vadd.f32 %v2898, %v3106
          %v3108 = vpop.f32.mrb[0].mxu0
          %v3109 = vand.u32 %v1411, 4294901760
          %3110 = vmatprep.mubr.f32.mxu0 %v3109
          %v3111 = vand.u32 %v1395, 4294901760
          %3112 = vmatmul.mubr.f32.gmra.mrb[0].mxu0 %v3111
          %v3113 = vpop.f32.mrb[0].mxu0
          %v3114 = vadd.f32 %v2905, %v3113
          %v3115 = vpop.f32.mrb[0].mxu0
          %v3116 = vand.u32 %v1412, 4294901760
          %3117 = vmatprep.mubr.f32.mxu0 %v3116
          %v3118 = vand.u32 %v1396, 4294901760
          %3119 = vmatmul.mubr.f32.gmra.mrb[0].mxu0 %v3118
          %v3120 = vpop.f32.mrb[0].mxu0
          %v3121 = vadd.f32 %v2912, %v3120
          %v3122 = vpop.f32.mrb[0].mxu0
          %v3123 = vand.u32 %v1413, 4294901760
          %3124 = vmatprep.mubr.f32.mxu0 %v3123
          %v3125 = vand.u32 %v1397, 4294901760
          %3126 = vmatmul.mubr.f32.gmra.mrb[0].mxu0 %v3125
          %v3127 = vpop.f32.mrb[0].mxu0
          %v3128 = vadd.f32 %v2919, %v3127
          %v3129 = vpop.f32.mrb[0].mxu0
          %v3130 = vand.u32 %v1414, 4294901760
          %3131 = vmatprep.mubr.f32.mxu0 %v3130
          %v3132 = vand.u32 %v1398, 4294901760
          %3133 = vmatmul.mubr.f32.gmra.mrb[0].mxu0 %v3132
          %v3134 = vpop.f32.mrb[0].mxu0
          %v3135 = vadd.f32 %v2926, %v3134
          %v3136 = vpop.f32.mrb[0].mxu0
          %v3137 = vand.u32 %v1415, 4294901760
          %3138 = vmatprep.mubr.f32.mxu0 %v3137
          %v3139 = vand.u32 %v1399, 4294901760
          %3140 = vmatmul.mubr.f32.gmra.mrb[0].mxu0 %v3139
          %v3141 = vpop.f32.mrb[0].mxu0
          %v3142 = vadd.f32 %v2933, %v3141
          %v3143 = vpop.f32.mrb[0].mxu0
          %v3144 = vand.u32 %v1416, 4294901760
          %3145 = vmatprep.mubr.f32.mxu0 %v3144
          %v3146 = vand.u32 %v1400, 4294901760
          %3147 = vmatmul.mubr.f32.gmra.mrb[0].mxu0 %v3146
          %v3148 = vpop.f32.mrb[0].mxu0
          %v3149 = vadd.f32 %v2940, %v3148
          %v3150 = vpop.f32.mrb[0].mxu0
          %v3151 = vand.u32 %v1417, 4294901760
          %3152 = vmatprep.mubr.f32.mxu0 %v3151
          %v3153 = vand.u32 %v1401, 4294901760
          %3154 = vmatmul.mubr.f32.gmra.mrb[0].mxu0 %v3153
          %v3155 = vpop.f32.mrb[0].mxu0
          %v3156 = vadd.f32 %v2947, %v3155
          %v3157 = vpop.f32.mrb[0].mxu0
          %3158 = vdwg.mxu0
          %v3159 = vmax.f32 %v3051, 0.0
          %v3160 = vmax.f32 %v3058, 0.0
          %v3161 = vmax.f32 %v3065, 0.0
          %v3162 = vmax.f32 %v3072, 0.0
          %v3163 = vmax.f32 %v3079, 0.0
          %v3164 = vmax.f32 %v3086, 0.0
          %v3165 = vmax.f32 %v3093, 0.0
          %v3166 = vmax.f32 %v3100, 0.0
          %v3167 = vmax.f32 %v3107, 0.0
          %v3168 = vmax.f32 %v3114, 0.0
          %v3169 = vmax.f32 %v3121, 0.0
          %v3170 = vmax.f32 %v3128, 0.0
          %v3171 = vmax.f32 %v3135, 0.0
          %v3172 = vmax.f32 %v3142, 0.0
          %v3173 = vmax.f32 %v3149, 0.0
          %v3174 = vmax.f32 %v3156, 0.0
          %3175 = vst [vmem:[%s350] sm:$0xff] %v3159
          %3176 = vst [vmem:[%s350 + $0x8] sm:$0xff] %v3160
          %3177 = vst [vmem:[%s350 + $0x10] sm:$0xff] %v3161
          %3178 = vst [vmem:[%s350 + $0x18] sm:$0xff] %v3162
          %3179 = vst [vmem:[%s350 + $0x20] sm:$0xff] %v3163
          %3180 = vst [vmem:[%s350 + $0x28] sm:$0xff] %v3164
          %3181 = vst [vmem:[%s350 + $0x30] sm:$0xff] %v3165
          %3182 = vst [vmem:[%s350 + $0x38] sm:$0xff] %v3166
          %3183 = vst [vmem:[%s350 + $0x40] sm:$0xff] %v3167
          %3184 = vst [vmem:[%s350 + $0x48] sm:$0xff] %v3168
          %3185 = vst [vmem:[%s350 + $0x50] sm:$0xff] %v3169
          %3186 = vst [vmem:[%s350 + $0x58] sm:$0xff] %v3170
          %3187 = vst [vmem:[%s350 + $0x60] sm:$0xff] %v3171
          %3188 = vst [vmem:[%s350 + $0x68] sm:$0xff] %v3172
          %3189 = vst [vmem:[%s350 + $0x70] sm:$0xff] %v3173
          %3190 = vst [vmem:[%s350 + $0x78] sm:$0xff] %v3174
        $region71: #{tpu_custom_call.1} parent=39 // pred_fallthru
          _
        %s3191 = sand.u32 %s168, 1
        %s3192 = scalar_lea.sflag [#allocation6], %s3191
        %s3193 = sand.u32 %s168, 1
        %s3194 = smul.addr %s3193, 128
        %s3195 = scalar_lea.vmem [#allocation12], %s3194
        // Predicated region
        $region72: #{tpu_custom_call.1} parent=39 // pred_check
          %p3196 = pneg %p178
        $region73: #{tpu_custom_call.1} parent=39 // pred_check_branch
          %3198 = sbr.rel (%p3196) target = $region75
        $region74: #{tpu_custom_call.1} parent=39 // pred_region
          %s3199 = smul.u32 16, %s30
          %s3201 = ssub.s32 2048, 2048
          %3202 = vsyncadd %s3192, %s3201
          %s3203 = smul.addr %s3199, 128
          %s3204 = scalar_lea.hbm %s5, %s3203
          %s3205 = sshll.u32 %s3195, 4
          %s3206 = int_to_ptr.vmem [resolvable:$true] %s3205
          %3211 = dma.vmem_to_hbm [thread:$0]  %s3206, 2048, %s3204, %s3192, 128, 128, 8
        $region75: #{tpu_custom_call.1} parent=39 // pred_fallthru
          _
      $region40: #{tpu_custom_call.1} parent=5 // pred_fallthru
        _
      %p3212 = scmp.le.s32.totalorder 2, %s21
      // Predicated region
      $region76: #{tpu_custom_call.1} parent=5 // pred_check
        %p3213 = pneg %p3212
      $region77: #{tpu_custom_call.1} parent=5 // pred_check_branch
        %3215 = sbr.rel (%p3213) target = $region79
      $region78: #{tpu_custom_call.1} parent=5 // pred_region
        %s3216 = ssub.s32 %s21, 2
        // Predicated region
        $region80: #{tpu_custom_call.1} parent=78 // pred_check
          %p3217 = pneg %p184
        $region81: #{tpu_custom_call.1} parent=78 // pred_check_branch
          %3219 = sbr.rel (%p3217) target = $region83
        $region82: #{tpu_custom_call.1} parent=78 // pred_region
          %s3220 = sand.u32 %s169, 1
          %s3221 = scalar_lea.sflag [#allocation6], %s3220
          %s3222 = sand.u32 %s169, 1
          %s3223 = smul.addr %s3222, 128
          %s3224 = scalar_lea.vmem [#allocation12], %s3223
          %3225 = dma.done %s3221, 2048
        $region83: #{tpu_custom_call.1} parent=78 // pred_fallthru
          _
      $region79: #{tpu_custom_call.1} parent=5 // pred_fallthru
        _
    $region6: #{tpu_custom_call.1} parent=1 // loop_footer
      %s25 = sadd.s32 1, %s21
    $region7: #{tpu_custom_call.1} parent=1 // loop_footer_branch
      %20 = sbr.rel target = $region3
    $region8: #{tpu_custom_call.1} parent=1 // loop_exit
      _
    %3226 = vsyncpa [#allocation5], 1
    %s3227 = scalar_lea.sflag [#allocation5], 1
    %3228 = vsyncpa %s3227, 1
    %3229 = vsyncpa [#allocation8], 1
    %s3230 = scalar_lea.sflag [#allocation8], 1
    %3231 = vsyncpa %s3230, 1
    %3232 = vsyncpa [#allocation11], 1
    %3233 = vsyncpa [#allocation6], 1
    %s3234 = scalar_lea.sflag [#allocation6], 1
    %3235 = vsyncpa %s3234, 1

</llo_original>
